<compile_context>
chip_gen: v7x
topology: tpu7x:2x2x1
jax: 0.10.0
libtpu: 0.0.40
codegen_flags: <defaults>
</compile_context>

<pallas_src>
import functools

import jax
import jax.numpy as jnp
from jax.experimental import pallas as pl
from jax.experimental.pallas import tpu as pltpu


def _pick_tile_h(num_rows, row_len, max_tile_elems):
    """Largest divisor of num_rows whose tile has <= max_tile_elems GEMM rows."""
    best = 1
    for t in range(1, num_rows + 1):
        if num_rows % t == 0 and t * row_len <= max_tile_elems:
            best = t
    return best


# ------------------------------ Pallas kernels -------------------------------
def _tile_gemm(x_ref, w_ref, *, taps, tile_h, w_out, cin, cols):
    """GEMM for one row-tile of one image (built from shifted halo views).

    x_ref : (1, Hp, Wp, Cin) bf16   halo-padded NHWC image (VMEM resident)
    w_ref : (taps*taps, Cin, cols) bf16  per-tap packed weight matrices
    Returns (tile_h * w_out, cols) f32 pre-BN activations for this tile.
    """
    halo = taps - 1
    r0 = pl.program_id(1) * tile_h
    if tile_h % 8 == 0:
        r0 = pl.multiple_of(r0, tile_h)
    win = x_ref[0, pl.ds(r0, tile_h + halo), :, :]      # (tile_h+halo, Wp, Cin)
    acc = jnp.zeros((tile_h * w_out, cols), jnp.float32)
    for a in range(taps):                               # unrolled: taps^2 taps
        for b in range(taps):
            xs = win[a:a + tile_h, b:b + w_out, :].reshape(tile_h * w_out, cin)
            acc = acc + jnp.dot(xs, w_ref[a * taps + b],
                                preferred_element_type=jnp.float32)
    return acc


def _stats_kernel(x_ref, w_ref, sum_ref, sq_ref, *,
                  taps, tile_h, w_out, cin, cols):
    """Pass 1: per-tile partial per-column sum / sum-of-squares (no y writeback)."""
    y = _tile_gemm(x_ref, w_ref, taps=taps, tile_h=tile_h, w_out=w_out,
                   cin=cin, cols=cols)
    sum_ref[...] = jnp.sum(y, axis=0, keepdims=True).reshape(sum_ref.shape)
    sq_ref[...] = jnp.sum(y * y, axis=0, keepdims=True).reshape(sq_ref.shape)


def _apply_kernel(x_ref, w_ref, scale_ref, shift_ref, o_ref, *,
                  taps, tile_h, w_out, cin, cols):
    """Pass 2: recompute the GEMM tile, fused folded-BN FMA + ReLU, write output."""
    y = _tile_gemm(x_ref, w_ref, taps=taps, tile_h=tile_h, w_out=w_out,
                   cin=cin, cols=cols)
    y = jnp.maximum(y * scale_ref[...] + shift_ref[...], 0.0)
    o_ref[...] = y.reshape(o_ref.shape)


# ------------------------------- JAX wrapper ----------------------------------
def deconv2d_forward(x_nchw, weight, gamma, beta, *, stride, eps=1e-5,
                     max_tile_rows=2048):
    """Forward pass of Deconv2d (ConvTranspose2d -> crop -> BN(train) -> ReLU).

    x_nchw : (N, Cin, H, W) f32
    weight : (Cin, Cout, K, K)  -- PyTorch ConvTranspose2d (IOHW) layout
    gamma, beta : (Cout,)       -- BatchNorm affine parameters
    """
    assert stride in (1, 2)
    N, Cin, H, W = x_nchw.shape
    assert weight.shape[0] == Cin and weight.shape[2] == weight.shape[3]
    Cout, K = weight.shape[1], weight.shape[2]

    x = jnp.transpose(x_nchw, (0, 2, 3, 1)).astype(jnp.float32)       # NHWC

    if stride == 1:
        # Full correlation with the flipped kernel.  Tap (a, b) of output pixel
        # (oy, ox) reads xp[oy + a, ox + b]; its weight is W[:, :, K-1-a, K-1-b].
        taps = K
        Ho, Wo = H + K - 1, W + K - 1
        rows_h, w_out, n_phase = Ho, Wo, 1
        xp = jnp.pad(x, ((0, 0), (K - 1, K - 1), (K - 1, K - 1), (0, 0)))
        w_pack = jnp.transpose(jnp.flip(weight, (2, 3)), (2, 3, 0, 1))  # (a,b,ci,co)
        w_pack = w_pack.reshape(taps * taps, Cin, Cout)
    else:
        # Sub-pixel (phase) decomposition of the stride-2 transposed conv:
        #   y[n, 2qy+py, 2qx+px, co] = sum_{a,b,ci} xp[n, qy+a, qx+b, ci]
        #                                * W[ci, co, 2*(T-1-a)+py, 2*(T-1-b)+px]
        # -> one un-dilated GEMM per tile with 4*Cout packed phase columns.
        T = (K + 1) // 2
        taps = T
        Ho, Wo = 2 * H, 2 * W
        rows_h, w_out, n_phase = H, W, 4
        xp = jnp.pad(x, ((0, 0), (T - 1, 0), (T - 1, 0), (0, 0)))
        wp = jnp.zeros((T, T, Cin, 2, 2, Cout), jnp.float32)
        for a in range(T):
            for b in range(T):
                for py in range(2):
                    for px in range(2):
                        kh, kw = 2 * (T - 1 - a) + py, 2 * (T - 1 - b) + px
                        if kh < K and kw < K:
                            wp = wp.at[a, b, :, py, px, :].set(weight[:, :, kh, kw])
        w_pack = wp.reshape(taps * taps, Cin, 4 * Cout)

    cols = n_phase * Cout
    Hp, Wp = xp.shape[1], xp.shape[2]
    tile_h = _pick_tile_h(rows_h, w_out, max_tile_rows)
    R = rows_h // tile_h

    xp = xp.astype(jnp.bfloat16)               # bf16 MXU operands, f32 accumulate
    w_pack = w_pack.astype(jnp.bfloat16)

    # VMEM budget guard (v7x: 64 MiB physical / 32 MiB scoped).  The halo-padded
    # image block is kept resident per batch element at these sizes.
    # TODO(synk): for large H*W also tile W (2-D halo blocks) instead of keeping
    # the whole padded image resident in VMEM.
    vmem_need = (2 * Hp * Wp * Cin * 2 + 2 * w_pack.size * 2
                 + 2 * tile_h * w_out * cols * 4 + 8 * cols * 4)
    assert vmem_need < 32 * 1024 * 1024, f"tile too large for VMEM: {vmem_need}"

    x_spec = pl.BlockSpec((1, Hp, Wp, Cin), lambda n, r: (n, 0, 0, 0))
    w_spec = pl.BlockSpec((taps * taps, Cin, cols), lambda n, r: (0, 0, 0))
    stat_spec = pl.BlockSpec((1, 1, 1, cols), lambda n, r: (n, r, 0, 0))
    cparams = pltpu.CompilerParams(
        dimension_semantics=("parallel", "parallel"))   # no revisited outputs

    kwargs = dict(taps=taps, tile_h=tile_h, w_out=w_out, cin=Cin, cols=cols)

    # ---- Pass 1: GEMM -> per-tile partial per-column sum / sum-of-squares ----
    tsum, tsq = pl.pallas_call(
        functools.partial(_stats_kernel, **kwargs),
        out_shape=(jax.ShapeDtypeStruct((N, R, 1, cols), jnp.float32),
                   jax.ShapeDtypeStruct((N, R, 1, cols), jnp.float32)),
        grid_spec=pltpu.PrefetchScalarGridSpec(
            num_scalar_prefetch=0, grid=(N, R),
            in_specs=[x_spec, w_spec],
            out_specs=[stat_spec, stat_spec]),
        compiler_params=cparams,
    )(xp, w_pack)

    # BN stats glue (tiny): reduce the tile partials, fold the phase columns of
    # each channel, then fold gamma*rsqrt(var+eps) and beta-mean*scale into one
    # scale & shift per packed column.
    count = N * Ho * Wo
    s = tsum.reshape(-1, n_phase, Cout).sum(axis=(0, 1))
    sq = tsq.reshape(-1, n_phase, Cout).sum(axis=(0, 1))
    mean = s / count
    # TODO(synk): E[y^2]-mean^2 can cancel for very large N*H*W; switch to a
    # shifted / Welford merge of the per-tile partials if that regime matters.
    var = jnp.maximum(sq / count - mean * mean, 0.0)
    scale_c = gamma.astype(jnp.float32) * jax.lax.rsqrt(var + eps)
    shift_c = beta.astype(jnp.float32) - mean * scale_c
    scale_cols = jnp.tile(scale_c, n_phase).reshape(1, cols)
    shift_cols = jnp.tile(shift_c, n_phase).reshape(1, cols)

    # ---- Pass 2: recompute GEMM, fused folded-BN FMA + ReLU, final output ----
    out = pl.pallas_call(
        functools.partial(_apply_kernel, **kwargs),
        out_shape=jax.ShapeDtypeStruct((N, rows_h, w_out, cols), jnp.float32),
        grid_spec=pltpu.PrefetchScalarGridSpec(
            num_scalar_prefetch=0, grid=(N, R),
            in_specs=[x_spec, w_spec,
                      pl.BlockSpec((1, cols), lambda n, r: (0, 0)),
                      pl.BlockSpec((1, cols), lambda n, r: (0, 0))],
            out_specs=pl.BlockSpec((1, tile_h, w_out, cols),
                                   lambda n, r: (n, r, 0, 0))),
        compiler_params=cparams,
    )(xp, w_pack, scale_cols, shift_cols)

    # Epilogue (one XLA copy of the small output): pixel-shuffle the packed
    # phase columns (stride 2) and go back to NCHW.  No padding to slice away.
    if stride == 1:
        return jnp.transpose(out, (0, 3, 1, 2))                     # NCHW
    out = out.reshape(N, H, W, 2, 2, Cout)                          # (n,qy,qx,py,px,co)
    out = jnp.transpose(out, (0, 5, 1, 3, 2, 4))                    # (n,co,qy,py,qx,px)
    return out.reshape(N, Cout, Ho, Wo)


# ------------------------ pure-JAX reference (check) --------------------------
def reference_forward(x, weight, gamma, beta, *, stride, eps=1e-5):
    N, Cin, H, W = x.shape
    Cout, K = weight.shape[1], weight.shape[2]
    rhs = jnp.transpose(jnp.flip(weight, axis=(2, 3)), (1, 0, 2, 3))  # (Cout,Cin,K,K)
    y = jax.lax.conv_general_dilated(
        x, rhs, window_strides=(1, 1),
        padding=[(K - 1, K - 1), (K - 1, K - 1)],
        lhs_dilation=(stride, stride),
        dimension_numbers=("NCHW", "OIHW", "NCHW"))
    if stride == 2:
        y = y[:, :, :2 * H, :2 * W]
    mean = jnp.mean(y, axis=(0, 2, 3), keepdims=True)
    var = jnp.mean((y - mean) ** 2, axis=(0, 2, 3), keepdims=True)
    y = (y - mean) / jnp.sqrt(var + eps)
    y = y * gamma.reshape(1, -1, 1, 1) + beta.reshape(1, -1, 1, 1)
    return jnp.maximum(y, 0.0)


# ---------------------------------- main --------------------------------------
if __name__ == "__main__":
    key = jax.random.PRNGKey(0)
    k_w, k_x = jax.random.split(key)

    # Deconv2d(in_channels=4, out_channels=8, kernel_size=3, stride, bn, relu)
    N, Cin, H, W = 2, 4, 16, 16
    Cout, K = 8, 3

    # xavier_uniform init of the ConvTranspose2d weight (IOHW layout).
    bound = (6.0 / ((Cin + Cout) * K * K)) ** 0.5
    weight = jax.random.uniform(k_w, (Cin, Cout, K, K), jnp.float32, -bound, bound)
    gamma = jnp.ones((Cout,), jnp.float32)     # init_bn -> ones
    beta = jnp.zeros((Cout,), jnp.float32)     # init_bn -> zeros
    x = jax.random.normal(k_x, (N, Cin, H, W), jnp.float32)

    # TODO(synk): the BatchNorm running-statistics (momentum=0.1) update is a
    # stateful training-side buffer; it does not affect this forward output.

    for stride in (2, 1):
        fwd = jax.jit(functools.partial(deconv2d_forward, stride=stride))
        out = jax.block_until_ready(fwd(x, weight, gamma, beta))
        ref = reference_forward(x, weight, gamma, beta, stride=stride)
        exp = (N, Cout, 2 * H, 2 * W) if stride == 2 else (N, Cout, H + K - 1, W + K - 1)
        assert out.shape == exp, (out.shape, exp)
        # bf16 MXU operands -> loosened tolerance vs the f32 reference.
        assert jnp.allclose(out, ref, atol=3e-2, rtol=3e-2), \
            float(jnp.max(jnp.abs(out - ref)))

    print("KERNEL_OK")
</pallas_src>

<mosaic_0001>
module attributes {stable_mosaic.version = 11 : i64} {
  func.func @_stats_kernel(%arg0: i32, %arg1: i32, %arg2: memref<1x17x17x4xbf16, #tpu.memory_space<vmem>>, %arg3: memref<4x4x32xbf16, #tpu.memory_space<vmem>>, %arg4: memref<1x1x1x32xf32, #tpu.memory_space<vmem>>, %arg5: memref<1x1x1x32xf32, #tpu.memory_space<vmem>>) attributes {dimension_semantics = [#tpu.dimension_semantics<parallel>, #tpu.dimension_semantics<parallel>], iteration_bounds = array<i64: 2, 1>, scalar_prefetch = 0 : i64, scratch_operands = 0 : i64, tpu.core_type = #tpu.core_type<tc>, window_params = [{transform_indices = @transform_0, window_bounds = array<i64: 1, 17, 17, 4>}, {pipeline_mode = #tpu.pipeline_mode<synchronous>, transform_indices = @transform_1, window_bounds = array<i64: 4, 4, 32>}, {transform_indices = @transform_2, window_bounds = array<i64: 1, 1, 1, 32>}, {transform_indices = @transform_3, window_bounds = array<i64: 1, 1, 1, 32>}]} {
    %c16_i32 = arith.constant 16 : i32
    %0 = arith.muli %arg1, %c16_i32 : i32
    %1 = tpu.assume_multiple %0, 16 : i32
    %c0 = arith.constant 0 : index
    %2 = arith.index_cast %1 : i32 to index
    %c0_0 = arith.constant 0 : index
    %c0_1 = arith.constant 0 : index
    %3 = vector.load %arg2[%c0, %2, %c0_0, %c0_1] : memref<1x17x17x4xbf16, #tpu.memory_space<vmem>>, vector<1x17x17x4xbf16>
    %4 = vector.shape_cast %3 : vector<1x17x17x4xbf16> to vector<17x17x4xbf16>
    %cst = arith.constant 0.000000e+00 : f32
    %5 = vector.broadcast %cst : f32 to vector<256x32xf32>
    %6 = vector.extract_strided_slice %4 {offsets = [0, 0, 0], sizes = [16, 16, 4], strides = [1, 1, 1]} : vector<17x17x4xbf16> to vector<16x16x4xbf16>
    %7 = vector.shape_cast %6 : vector<16x16x4xbf16> to vector<256x4xbf16>
    %c0_2 = arith.constant 0 : index
    %c0_3 = arith.constant 0 : index
    %c0_4 = arith.constant 0 : index
    %8 = vector.load %arg3[%c0_2, %c0_3, %c0_4] : memref<4x4x32xbf16, #tpu.memory_space<vmem>>, vector<1x4x32xbf16>
    %9 = vector.shape_cast %8 : vector<1x4x32xbf16> to vector<4x32xbf16>
    %cst_5 = arith.constant dense<0.000000e+00> : vector<256x32xf32>
    %10 = tpu.matmul %7, %9, %cst_5 {dimension_numbers = #tpu.dot_dimension_numbers<[1], [0], [0], [1], [0, 0, 1, 1], [], []>} : vector<256x4xbf16>, vector<4x32xbf16>, vector<256x32xf32> -> vector<256x32xf32>
    %11 = arith.addf %5, %10 : vector<256x32xf32>
    %12 = vector.extract_strided_slice %4 {offsets = [0, 1, 0], sizes = [16, 16, 4], strides = [1, 1, 1]} : vector<17x17x4xbf16> to vector<16x16x4xbf16>
    %13 = vector.shape_cast %12 : vector<16x16x4xbf16> to vector<256x4xbf16>
    %c1 = arith.constant 1 : index
    %c0_6 = arith.constant 0 : index
    %c0_7 = arith.constant 0 : index
    %14 = vector.load %arg3[%c1, %c0_6, %c0_7] : memref<4x4x32xbf16, #tpu.memory_space<vmem>>, vector<1x4x32xbf16>
    %15 = vector.shape_cast %14 : vector<1x4x32xbf16> to vector<4x32xbf16>
    %cst_8 = arith.constant dense<0.000000e+00> : vector<256x32xf32>
    %16 = tpu.matmul %13, %15, %cst_8 {dimension_numbers = #tpu.dot_dimension_numbers<[1], [0], [0], [1], [0, 0, 1, 1], [], []>} : vector<256x4xbf16>, vector<4x32xbf16>, vector<256x32xf32> -> vector<256x32xf32>
    %17 = arith.addf %11, %16 : vector<256x32xf32>
    %18 = vector.extract_strided_slice %4 {offsets = [1, 0, 0], sizes = [16, 16, 4], strides = [1, 1, 1]} : vector<17x17x4xbf16> to vector<16x16x4xbf16>
    %19 = vector.shape_cast %18 : vector<16x16x4xbf16> to vector<256x4xbf16>
    %c2 = arith.constant 2 : index
    %c0_9 = arith.constant 0 : index
    %c0_10 = arith.constant 0 : index
    %20 = vector.load %arg3[%c2, %c0_9, %c0_10] : memref<4x4x32xbf16, #tpu.memory_space<vmem>>, vector<1x4x32xbf16>
    %21 = vector.shape_cast %20 : vector<1x4x32xbf16> to vector<4x32xbf16>
    %cst_11 = arith.constant dense<0.000000e+00> : vector<256x32xf32>
    %22 = tpu.matmul %19, %21, %cst_11 {dimension_numbers = #tpu.dot_dimension_numbers<[1], [0], [0], [1], [0, 0, 1, 1], [], []>} : vector<256x4xbf16>, vector<4x32xbf16>, vector<256x32xf32> -> vector<256x32xf32>
    %23 = arith.addf %17, %22 : vector<256x32xf32>
    %24 = vector.extract_strided_slice %4 {offsets = [1, 1, 0], sizes = [16, 16, 4], strides = [1, 1, 1]} : vector<17x17x4xbf16> to vector<16x16x4xbf16>
    %25 = vector.shape_cast %24 : vector<16x16x4xbf16> to vector<256x4xbf16>
    %c3 = arith.constant 3 : index
    %c0_12 = arith.constant 0 : index
    %c0_13 = arith.constant 0 : index
    %26 = vector.load %arg3[%c3, %c0_12, %c0_13] : memref<4x4x32xbf16, #tpu.memory_space<vmem>>, vector<1x4x32xbf16>
    %27 = vector.shape_cast %26 : vector<1x4x32xbf16> to vector<4x32xbf16>
    %cst_14 = arith.constant dense<0.000000e+00> : vector<256x32xf32>
    %28 = tpu.matmul %25, %27, %cst_14 {dimension_numbers = #tpu.dot_dimension_numbers<[1], [0], [0], [1], [0, 0, 1, 1], [], []>} : vector<256x4xbf16>, vector<4x32xbf16>, vector<256x32xf32> -> vector<256x32xf32>
    %29 = arith.addf %23, %28 : vector<256x32xf32>
    %cst_15 = arith.constant dense<0.000000e+00> : vector<32xf32>
    %30 = vector.multi_reduction <add>, %29, %cst_15 [0] : vector<256x32xf32> to vector<32xf32>
    %31 = vector.shape_cast %30 : vector<32xf32> to vector<1x32xf32>
    %32 = vector.shape_cast %31 : vector<1x32xf32> to vector<1x1x1x32xf32>
    %c0_16 = arith.constant 0 : index
    %c0_17 = arith.constant 0 : index
    %c0_18 = arith.constant 0 : index
    %c0_19 = arith.constant 0 : index
    %33 = vector.load %arg4[%c0_16, %c0_17, %c0_18, %c0_19] : memref<1x1x1x32xf32, #tpu.memory_space<vmem>>, vector<1x1x1x32xf32>
    tpu.vector_store %arg4[%c0_16, %c0_17, %c0_18, %c0_19], %32 {strides = array<i32>} : memref<1x1x1x32xf32, #tpu.memory_space<vmem>>, vector<1x1x1x32xf32>,
    %34 = arith.mulf %29, %29 : vector<256x32xf32>
    %cst_20 = arith.constant dense<0.000000e+00> : vector<32xf32>
    %35 = vector.multi_reduction <add>, %34, %cst_20 [0] : vector<256x32xf32> to vector<32xf32>
    %36 = vector.shape_cast %35 : vector<32xf32> to vector<1x32xf32>
    %37 = vector.shape_cast %36 : vector<1x32xf32> to vector<1x1x1x32xf32>
    %c0_21 = arith.constant 0 : index
    %c0_22 = arith.constant 0 : index
    %c0_23 = arith.constant 0 : index
    %c0_24 = arith.constant 0 : index
    %38 = vector.load %arg5[%c0_21, %c0_22, %c0_23, %c0_24] : memref<1x1x1x32xf32, #tpu.memory_space<vmem>>, vector<1x1x1x32xf32>
    tpu.vector_store %arg5[%c0_21, %c0_22, %c0_23, %c0_24], %37 {strides = array<i32>} : memref<1x1x1x32xf32, #tpu.memory_space<vmem>>, vector<1x1x1x32xf32>,
    return
  }
  func.func @transform_0(%arg0: i32, %arg1: i32) -> (i32, i32, i32, i32) {
    %c0_i32 = arith.constant 0 : i32
    %c0_i32_0 = arith.constant 0 : i32
    %c0_i32_1 = arith.constant 0 : i32
    %c0_i32_2 = arith.constant 0 : i32
    return %arg0, %c0_i32, %c0_i32_0, %c0_i32_1 : i32, i32, i32, i32
  }
  func.func @transform_1(%arg0: i32, %arg1: i32) -> (i32, i32, i32) {
    %c0_i32 = arith.constant 0 : i32
    %c0_i32_0 = arith.constant 0 : i32
    %c0_i32_1 = arith.constant 0 : i32
    %c0_i32_2 = arith.constant 0 : i32
    return %c0_i32, %c0_i32_0, %c0_i32_1 : i32, i32, i32
  }
  func.func @transform_2(%arg0: i32, %arg1: i32) -> (i32, i32, i32, i32) {
    %c0_i32 = arith.constant 0 : i32
    %c0_i32_0 = arith.constant 0 : i32
    %c0_i32_1 = arith.constant 0 : i32
    return %arg0, %arg1, %c0_i32, %c0_i32_0 : i32, i32, i32, i32
  }
  func.func @transform_3(%arg0: i32, %arg1: i32) -> (i32, i32, i32, i32) {
    %c0_i32 = arith.constant 0 : i32
    %c0_i32_0 = arith.constant 0 : i32
    %c0_i32_1 = arith.constant 0 : i32
    return %arg0, %arg1, %c0_i32, %c0_i32_0 : i32, i32, i32, i32
  }
}

module attributes {stable_mosaic.version = 11 : i64} {
  func.func @_apply_kernel(%arg0: i32, %arg1: i32, %arg2: memref<1x17x17x4xbf16, #tpu.memory_space<vmem>>, %arg3: memref<4x4x32xbf16, #tpu.memory_space<vmem>>, %arg4: memref<1x32xf32, #tpu.memory_space<vmem>>, %arg5: memref<1x32xf32, #tpu.memory_space<vmem>>, %arg6: memref<1x16x16x32xf32, #tpu.memory_space<vmem>>) attributes {dimension_semantics = [#tpu.dimension_semantics<parallel>, #tpu.dimension_semantics<parallel>], iteration_bounds = array<i64: 2, 1>, scalar_prefetch = 0 : i64, scratch_operands = 0 : i64, tpu.core_type = #tpu.core_type<tc>, window_params = [{transform_indices = @transform_0, window_bounds = array<i64: 1, 17, 17, 4>}, {pipeline_mode = #tpu.pipeline_mode<synchronous>, transform_indices = @transform_1, window_bounds = array<i64: 4, 4, 32>}, {pipeline_mode = #tpu.pipeline_mode<synchronous>, transform_indices = @transform_2, window_bounds = array<i64: 1, 32>}, {pipeline_mode = #tpu.pipeline_mode<synchronous>, transform_indices = @transform_3, window_bounds = array<i64: 1, 32>}, {transform_indices = @transform_4, window_bounds = array<i64: 1, 16, 16, 32>}]} {
    %c16_i32 = arith.constant 16 : i32
    %0 = arith.muli %arg1, %c16_i32 : i32
    %1 = tpu.assume_multiple %0, 16 : i32
    %c0 = arith.constant 0 : index
    %2 = arith.index_cast %1 : i32 to index
    %c0_0 = arith.constant 0 : index
    %c0_1 = arith.constant 0 : index
    %3 = vector.load %arg2[%c0, %2, %c0_0, %c0_1] : memref<1x17x17x4xbf16, #tpu.memory_space<vmem>>, vector<1x17x17x4xbf16>
    %4 = vector.shape_cast %3 : vector<1x17x17x4xbf16> to vector<17x17x4xbf16>
    %cst = arith.constant 0.000000e+00 : f32
    %5 = vector.broadcast %cst : f32 to vector<256x32xf32>
    %6 = vector.extract_strided_slice %4 {offsets = [0, 0, 0], sizes = [16, 16, 4], strides = [1, 1, 1]} : vector<17x17x4xbf16> to vector<16x16x4xbf16>
    %7 = vector.shape_cast %6 : vector<16x16x4xbf16> to vector<256x4xbf16>
    %c0_2 = arith.constant 0 : index
    %c0_3 = arith.constant 0 : index
    %c0_4 = arith.constant 0 : index
    %8 = vector.load %arg3[%c0_2, %c0_3, %c0_4] : memref<4x4x32xbf16, #tpu.memory_space<vmem>>, vector<1x4x32xbf16>
    %9 = vector.shape_cast %8 : vector<1x4x32xbf16> to vector<4x32xbf16>
    %cst_5 = arith.constant dense<0.000000e+00> : vector<256x32xf32>
    %10 = tpu.matmul %7, %9, %cst_5 {dimension_numbers = #tpu.dot_dimension_numbers<[1], [0], [0], [1], [0, 0, 1, 1], [], []>} : vector<256x4xbf16>, vector<4x32xbf16>, vector<256x32xf32> -> vector<256x32xf32>
    %11 = arith.addf %5, %10 : vector<256x32xf32>
    %12 = vector.extract_strided_slice %4 {offsets = [0, 1, 0], sizes = [16, 16, 4], strides = [1, 1, 1]} : vector<17x17x4xbf16> to vector<16x16x4xbf16>
    %13 = vector.shape_cast %12 : vector<16x16x4xbf16> to vector<256x4xbf16>
    %c1 = arith.constant 1 : index
    %c0_6 = arith.constant 0 : index
    %c0_7 = arith.constant 0 : index
    %14 = vector.load %arg3[%c1, %c0_6, %c0_7] : memref<4x4x32xbf16, #tpu.memory_space<vmem>>, vector<1x4x32xbf16>
    %15 = vector.shape_cast %14 : vector<1x4x32xbf16> to vector<4x32xbf16>
    %cst_8 = arith.constant dense<0.000000e+00> : vector<256x32xf32>
    %16 = tpu.matmul %13, %15, %cst_8 {dimension_numbers = #tpu.dot_dimension_numbers<[1], [0], [0], [1], [0, 0, 1, 1], [], []>} : vector<256x4xbf16>, vector<4x32xbf16>, vector<256x32xf32> -> vector<256x32xf32>
    %17 = arith.addf %11, %16 : vector<256x32xf32>
    %18 = vector.extract_strided_slice %4 {offsets = [1, 0, 0], sizes = [16, 16, 4], strides = [1, 1, 1]} : vector<17x17x4xbf16> to vector<16x16x4xbf16>
    %19 = vector.shape_cast %18 : vector<16x16x4xbf16> to vector<256x4xbf16>
    %c2 = arith.constant 2 : index
    %c0_9 = arith.constant 0 : index
    %c0_10 = arith.constant 0 : index
    %20 = vector.load %arg3[%c2, %c0_9, %c0_10] : memref<4x4x32xbf16, #tpu.memory_space<vmem>>, vector<1x4x32xbf16>
    %21 = vector.shape_cast %20 : vector<1x4x32xbf16> to vector<4x32xbf16>
    %cst_11 = arith.constant dense<0.000000e+00> : vector<256x32xf32>
    %22 = tpu.matmul %19, %21, %cst_11 {dimension_numbers = #tpu.dot_dimension_numbers<[1], [0], [0], [1], [0, 0, 1, 1], [], []>} : vector<256x4xbf16>, vector<4x32xbf16>, vector<256x32xf32> -> vector<256x32xf32>
    %23 = arith.addf %17, %22 : vector<256x32xf32>
    %24 = vector.extract_strided_slice %4 {offsets = [1, 1, 0], sizes = [16, 16, 4], strides = [1, 1, 1]} : vector<17x17x4xbf16> to vector<16x16x4xbf16>
    %25 = vector.shape_cast %24 : vector<16x16x4xbf16> to vector<256x4xbf16>
    %c3 = arith.constant 3 : index
    %c0_12 = arith.constant 0 : index
    %c0_13 = arith.constant 0 : index
    %26 = vector.load %arg3[%c3, %c0_12, %c0_13] : memref<4x4x32xbf16, #tpu.memory_space<vmem>>, vector<1x4x32xbf16>
    %27 = vector.shape_cast %26 : vector<1x4x32xbf16> to vector<4x32xbf16>
    %cst_14 = arith.constant dense<0.000000e+00> : vector<256x32xf32>
    %28 = tpu.matmul %25, %27, %cst_14 {dimension_numbers = #tpu.dot_dimension_numbers<[1], [0], [0], [1], [0, 0, 1, 1], [], []>} : vector<256x4xbf16>, vector<4x32xbf16>, vector<256x32xf32> -> vector<256x32xf32>
    %29 = arith.addf %23, %28 : vector<256x32xf32>
    %c0_15 = arith.constant 0 : index
    %c0_16 = arith.constant 0 : index
    %30 = vector.load %arg4[%c0_15, %c0_16] : memref<1x32xf32, #tpu.memory_space<vmem>>, vector<1x32xf32>
    %31 = vector.broadcast %30 : vector<1x32xf32> to vector<256x32xf32>
    %32 = arith.mulf %29, %31 : vector<256x32xf32>
    %c0_17 = arith.constant 0 : index
    %c0_18 = arith.constant 0 : index
    %33 = vector.load %arg5[%c0_17, %c0_18] : memref<1x32xf32, #tpu.memory_space<vmem>>, vector<1x32xf32>
    %34 = vector.broadcast %33 : vector<1x32xf32> to vector<256x32xf32>
    %35 = arith.addf %32, %34 : vector<256x32xf32>
    %cst_19 = arith.constant 0.000000e+00 : f32
    %36 = vector.broadcast %cst_19 : f32 to vector<256x32xf32>
    %37 = arith.maximumf %35, %36 : vector<256x32xf32>
    %38 = vector.shape_cast %37 : vector<256x32xf32> to vector<1x16x16x32xf32>
    %c0_20 = arith.constant 0 : index
    %c0_21 = arith.constant 0 : index
    %c0_22 = arith.constant 0 : index
    %c0_23 = arith.constant 0 : index
    %39 = vector.load %arg6[%c0_20, %c0_21, %c0_22, %c0_23] : memref<1x16x16x32xf32, #tpu.memory_space<vmem>>, vector<1x16x16x32xf32>
    tpu.vector_store %arg6[%c0_20, %c0_21, %c0_22, %c0_23], %38 {strides = array<i32>} : memref<1x16x16x32xf32, #tpu.memory_space<vmem>>, vector<1x16x16x32xf32>,
    return
  }
  func.func @transform_0(%arg0: i32, %arg1: i32) -> (i32, i32, i32, i32) {
    %c0_i32 = arith.constant 0 : i32
    %c0_i32_0 = arith.constant 0 : i32
    %c0_i32_1 = arith.constant 0 : i32
    %c0_i32_2 = arith.constant 0 : i32
    return %arg0, %c0_i32, %c0_i32_0, %c0_i32_1 : i32, i32, i32, i32
  }
  func.func @transform_1(%arg0: i32, %arg1: i32) -> (i32, i32, i32) {
    %c0_i32 = arith.constant 0 : i32
    %c0_i32_0 = arith.constant 0 : i32
    %c0_i32_1 = arith.constant 0 : i32
    %c0_i32_2 = arith.constant 0 : i32
    return %c0_i32, %c0_i32_0, %c0_i32_1 : i32, i32, i32
  }
  func.func @transform_2(%arg0: i32, %arg1: i32) -> (i32, i32) {
    %c0_i32 = arith.constant 0 : i32
    %c0_i32_0 = arith.constant 0 : i32
    %c0_i32_1 = arith.constant 0 : i32
    return %c0_i32, %c0_i32_0 : i32, i32
  }
  func.func @transform_3(%arg0: i32, %arg1: i32) -> (i32, i32) {
    %c0_i32 = arith.constant 0 : i32
    %c0_i32_0 = arith.constant 0 : i32
    %c0_i32_1 = arith.constant 0 : i32
    return %c0_i32, %c0_i32_0 : i32, i32
  }
  func.func @transform_4(%arg0: i32, %arg1: i32) -> (i32, i32, i32, i32) {
    %c0_i32 = arith.constant 0 : i32
    %c0_i32_0 = arith.constant 0 : i32
    %c0_i32_1 = arith.constant 0 : i32
    return %arg0, %arg1, %c0_i32, %c0_i32_0 : i32, i32, i32, i32
  }
}

</mosaic_0001>

<llo_original>
// kernel: tile.18
$region0: #{tile.18}
  #allocation0 [shape = 's32[1]{0}', space=sflag, size = 0x4, scoped, tag = 'scoped memory for tile.18']
  %s0 = inlined_call_operand.vmem [shape: f32[8], index: 0, kind: input, shape index: {}]
  %s1 = inlined_call_operand.vmem [shape: f32[4,8], index: 1, kind: output, shape index: {}]
  // Predicated region
  $region2: #{tile.18} parent=0 // pred_check
    _
  $region3: #{tile.18} parent=0 // pred_check_branch
    %3 = sbr.rel (0) target = $region5
  $region4: #{tile.18} parent=0 // pred_region
    _
  $region5: #{tile.18} parent=0 // pred_fallthru
    _
  %v4 = vld [vmem:[%s0] ss:$0 sm:$0xff]
  %5 = vst [vmem:[%s1] sm:$0xf] %v4

// kernel: tile.19
$region0: #{tile.19}
  %s0 = inlined_call_operand.vmem [shape: f32[4,8], index: 0, kind: input, shape index: {}]
  %s1 = inlined_call_operand.vmem [shape: f32[1,32], index: 1, kind: output, shape index: {}]
  $region1: #{tile.19} parent=0
    #allocation0 [shape = 'u8[4096]{0}', space=vmem, size = 0x1000, scoped, tag = 'scoped mem for output reshape']
    #allocation1 [shape = 'u8[4096]{0}', space=vmem, size = 0x1000, scoped, tag = 'scoped mem for input reshape']
    %s3 = sshllo.u32 0, 4
    %v4 = vld [vmem:[%s0] sm:%s3]
    %5 = vst [vmem:[#allocation1] sm:%s3] %v4
    %v6 = vld [vmem:[#allocation1] sm:$0x1]
    %vm7 = vcmask 64512
    %8 = vst.msk [vmem:[#allocation0] sm:$0x1] %vm7, %v6
    %s9 = scalar_lea.vmem [#allocation1], 3
    %v10 = vld [vmem:[%s9] sm:$0x1]
    %11 = vrot.lane.b32.xlu0 %v10, 24
    %v12 = vpop.permute.xlu0 %11
    %vm13 = vcmask 261312
    %14 = vst.msk [vmem:[#allocation0] sm:$0x1] %vm13, %v12
    %s15 = scalar_lea.vmem [#allocation1], 2
    %v16 = vld [vmem:[%s15] sm:$0x1]
    %17 = vrot.lane.b32.xlu0 %v16, 16
    %v18 = vpop.permute.xlu0 %17
    %vm19 = vcmask 195712
    %20 = vst.msk [vmem:[#allocation0] sm:$0x1] %vm19, %v18
    %s21 = scalar_lea.vmem [#allocation1], 1
    %v22 = vld [vmem:[%s21] sm:$0x1]
    %23 = vrot.lane.b32.xlu0 %v22, 8
    %v24 = vpop.permute.xlu0 %23
    %vm25 = vcmask 130112
    %26 = vst.msk [vmem:[#allocation0] sm:$0x1] %vm25, %v24
    %s28 = sshllo.u32 0, 1
    %v30 = vld [vmem:[#allocation0] sm:%s28]
    %s31 = sshllo.u32 0, 1
    %32 = vst [vmem:[%s1] sm:%s31] %v30

// kernel: deconv2d_forward.2
$region0: #{deconv2d_forward.2}
  #allocation0 [shape = 'u32[]', space=smem, size = 0x4, offset = 0x4, fixed_abs, tag = 'smem constant byte address 0x4 - core index']
  #allocation1 [shape = 'u32[144,128]{1,0:T(1,128)}', space=vmem, size = 0x12000, scoped, tag = 'internal scratch']
  %s0 = inlined_call_operand.vmem [shape: bf16[2,17,17,4], index: 0, kind: input, shape index: {}]
  %s1 = inlined_call_operand.vmem [shape: bf16[4,4,32], index: 1, kind: input, shape index: {}]
  %s2 = inlined_call_operand.vmem [shape: f32[2,1,1,32], index: 2, kind: output, shape index: {0}]
  %s3 = inlined_call_operand.vmem [shape: f32[2,1,1,32], index: 3, kind: output, shape index: {1}]
  %4 = xla_tuple %s2, %s3
  %s5 = sld [smem:[#allocation0]]
  $region49: #{deconv2d_forward.2} parent=0
    _
  %s7 = ssub.s32 1, %s5
  %s8 = scalar_select 0, %s7, %s5
  loop: start=0, step=1, limit=4
  $region2: #{deconv2d_forward.2} parent=0 // loop_pre_header
    _
  $region3: #{deconv2d_forward.2} parent=0 // loop_header
    %s10 = sphi 0, %s14
    %p11 = scmp.ge.s32.totalorder %s10, 4
    %s17 = sphi 0, %s29
    %s18 = sphi 0, %s25
    %s19 = sphi 0, %s17
    %s20 = sphi 0, %s18
    %s21 = sphi 0, %s19
    %s22 = sphi 0, %s20
    %s32 = sphi 0, %s34
    %s35 = sphi 0, %s32
    %s36 = sphi 0, %s35
    %s52 = sphi 0, %s36
    %s56 = sphi 0, %s56
    %s58 = sphi 0, %s56
    %s59 = sphi 0, %s58
    %s73 = sphi 0, %s59
    %s81 = sphi 0, %s83
    %s84 = sphi 0, %s81
    %s85 = sphi 0, %s84
    %s101 = sphi 0, %s85
    %s109 = sphi 0, %s111
    %s112 = sphi 0, %s109
    %s113 = sphi 0, %s112
    %s129 = sphi 0, %s113
  $region4: #{deconv2d_forward.2} parent=0 // loop_header_branch
    %13 = sbr.rel (%p11) target = $region8
  $region5: #{deconv2d_forward.2} parent=0 // loop_body
    %s15 = ssub.s32 %s10, 1
    %s16 = ssub.s32 %s10, 2
    %s23 = sadd.s32 1, %s18
    %p24 = scmp.ge.s32.totalorder %s23, 1
    %s25 = scalar_select %p24, 0, %s23
    %s26 = sadd.s32 1, %s17
    %s27 = scalar_select %p24, %s26, %s17
    %p28 = scmp.ge.s32.totalorder %s27, 2
    %s29 = scalar_select %p28, 0, %s27
    %s30 = ssub.s32 %s17, %s29
    %p31 = scmp.eq.s32.totalorder %s30, 0
    %s33 = sadd.s32 %s32, 1
    %s34 = scalar_select %p31, %s32, %s33
    %p37 = pneg %p31
    %p38 = scmp.eq.s32.totalorder %s10, 1
    %p39 = por %p37, %p38
    %p40 = scmp.ne.s32.totalorder %s32, %s35
    %p41 = scmp.eq.s32.totalorder %s10, 0
    %p42 = por %p40, %p41
    %p43 = scmp.ne.s32.totalorder %s32, %s35
    %p44 = scmp.eq.s32.totalorder %s15, 1
    %p45 = por %p43, %p44
    %p46 = scmp.ne.s32.totalorder %s35, %s36
    %p47 = scmp.eq.s32.totalorder %s15, 0
    %p48 = por %p46, %p47
    %p49 = scmp.ne.s32.totalorder %s35, %s36
    %p50 = scmp.eq.s32.totalorder %s16, 1
    %p51 = por %p49, %p50
    %p53 = scmp.ne.s32.totalorder %s36, %s52
    %p54 = scmp.eq.s32.totalorder %s16, 0
    %p55 = por %p53, %p54
    %s57 = sadd.s32 %s56, 1
    %p60 = scmp.eq.s32.totalorder %s10, 1
    %p61 = scmp.ne.s32.totalorder %s56, %s58
    %p62 = scmp.eq.s32.totalorder %s10, 0
    %p63 = por %p61, %p62
    %p64 = scmp.ne.s32.totalorder %s56, %s58
    %p65 = scmp.eq.s32.totalorder %s15, 1
    %p66 = por %p64, %p65
    %p67 = scmp.ne.s32.totalorder %s58, %s59
    %p68 = scmp.eq.s32.totalorder %s15, 0
    %p69 = por %p67, %p68
    %p70 = scmp.ne.s32.totalorder %s58, %s59
    %p71 = scmp.eq.s32.totalorder %s16, 1
    %p72 = por %p70, %p71
    %p74 = scmp.ne.s32.totalorder %s59, %s73
    %p75 = scmp.eq.s32.totalorder %s16, 0
    %p76 = por %p74, %p75
    %s77 = ssub.s32 %s17, %s29
    %s78 = ssub.s32 %s18, %s25
    %s79 = sor.u32 %s77, %s78
    %p80 = scmp.eq.s32.totalorder %s79, 0
    %s82 = sadd.s32 %s81, 1
    %s83 = scalar_select %p80, %s81, %s82
    %p86 = pneg %p80
    %p87 = scmp.eq.s32.totalorder %s10, 1
    %p88 = por %p86, %p87
    %p89 = scmp.ne.s32.totalorder %s81, %s84
    %p90 = scmp.eq.s32.totalorder %s10, 0
    %p91 = por %p89, %p90
    %p92 = scmp.ne.s32.totalorder %s81, %s84
    %p93 = scmp.eq.s32.totalorder %s15, 1
    %p94 = por %p92, %p93
    %p95 = scmp.ne.s32.totalorder %s84, %s85
    %p96 = scmp.eq.s32.totalorder %s15, 0
    %p97 = por %p95, %p96
    %p98 = scmp.ne.s32.totalorder %s84, %s85
    %p99 = scmp.eq.s32.totalorder %s16, 1
    %p100 = por %p98, %p99
    %p102 = scmp.ne.s32.totalorder %s85, %s101
    %p103 = scmp.eq.s32.totalorder %s16, 0
    %p104 = por %p102, %p103
    %s105 = ssub.s32 %s17, %s29
    %s106 = ssub.s32 %s18, %s25
    %s107 = sor.u32 %s105, %s106
    %p108 = scmp.eq.s32.totalorder %s107, 0
    %s110 = sadd.s32 %s109, 1
    %s111 = scalar_select %p108, %s109, %s110
    %p114 = pneg %p108
    %p115 = scmp.eq.s32.totalorder %s10, 1
    %p116 = por %p114, %p115
    %p117 = scmp.ne.s32.totalorder %s109, %s112
    %p118 = scmp.eq.s32.totalorder %s10, 0
    %p119 = por %p117, %p118
    %p120 = scmp.ne.s32.totalorder %s109, %s112
    %p121 = scmp.eq.s32.totalorder %s15, 1
    %p122 = por %p120, %p121
    %p123 = scmp.ne.s32.totalorder %s112, %s113
    %p124 = scmp.eq.s32.totalorder %s15, 0
    %p125 = por %p123, %p124
    %p126 = scmp.ne.s32.totalorder %s112, %s113
    %p127 = scmp.eq.s32.totalorder %s16, 1
    %p128 = por %p126, %p127
    %p130 = scmp.ne.s32.totalorder %s113, %s129
    %p131 = scmp.eq.s32.totalorder %s16, 0
    %p132 = por %p130, %p131
    %p133 = scmp.le.s32.totalorder 1, %s10
    %p134 = scmp.lt.s32.totalorder %s10, 3
    %p135 = pnand %p133, %p134
    %p136 = pneg %p135
    // Predicated region
    $region9: #{deconv2d_forward.2} parent=5 // pred_check
      _
    $region10: #{deconv2d_forward.2} parent=5 // pred_check_branch
      %138 = sbr.rel (%p135) target = $region12
    $region11: #{deconv2d_forward.2} parent=5 // pred_region
      %s139 = ssub.s32 %s10, 1
      // Predicated region
      $region13: #{deconv2d_forward.2} parent=11 // pred_check
        %p140 = pneg %p69
      $region14: #{deconv2d_forward.2} parent=11 // pred_check_branch
        %142 = sbr.rel (%p140) target = $region16
      $region15: #{deconv2d_forward.2} parent=11 // pred_region
        _
      $region16: #{deconv2d_forward.2} parent=11 // pred_fallthru
        _
    $region12: #{deconv2d_forward.2} parent=5 // pred_fallthru
      _
    %p143 = scmp.lt.s32.totalorder %s10, 2
    // Predicated region
    $region17: #{deconv2d_forward.2} parent=5 // pred_check
      %p144 = pneg %p143
    $region18: #{deconv2d_forward.2} parent=5 // pred_check_branch
      %146 = sbr.rel (%p144) target = $region20
    $region19: #{deconv2d_forward.2} parent=5 // pred_region
      // Predicated region
      $region21: #{deconv2d_forward.2} parent=19 // pred_check
        %p147 = pneg %p42
      $region22: #{deconv2d_forward.2} parent=19 // pred_check_branch
        %149 = sbr.rel (%p147) target = $region24
      $region23: #{deconv2d_forward.2} parent=19 // pred_region
        %p150 = scmp.lt.s32.totalorder %s17, 1
        %s151 = scalar_select %p150, %s17, 1
        %s152 = smul.addr %s151, 51
        %s153 = smul.addr %s152, 4
        %s154 = scalar_lea.vmem %s0, %s153
      $region24: #{deconv2d_forward.2} parent=19 // pred_fallthru
        _
    $region20: #{deconv2d_forward.2} parent=5 // pred_fallthru
      _
    %p155 = scmp.le.s32.totalorder 1, %s10
    %p156 = scmp.lt.s32.totalorder %s10, 3
    %p157 = pnand %p155, %p156
    %p158 = pneg %p157
    // Predicated region
    $region25: #{deconv2d_forward.2} parent=5 // pred_check
      _
    $region26: #{deconv2d_forward.2} parent=5 // pred_check_branch
      %160 = sbr.rel (%p157) target = $region28
    $region27: #{deconv2d_forward.2} parent=5 // pred_region
      %s161 = ssub.s32 %s10, 1
      %p162 = scmp.lt.s32.totalorder %s19, 1
      %s163 = scalar_select %p162, %s19, 1
      %s164 = smul.addr %s163, 51
      %s165 = smul.addr %s164, 4
      %s166 = scalar_lea.vmem %s0, %s165
      %p167 = pneg %p48
      %p168 = pneg %p45
      %p169 = pneg %p69
      %p170 = pneg %p66
      %p171 = pneg %p97
      %p172 = pneg %p94
      %p173 = scmp.lt.s32.totalorder %s19, 1
      %s174 = scalar_select %p173, %s19, 1
      %p175 = scmp.lt.s32.totalorder %s20, 0
      %s176 = scalar_select %p175, %s20, 0
      %s177 = sadd.s32 %s176, %s174
      %s178 = scalar_lea.vmem %s2, %s177
      %p179 = pneg %p125
      %p180 = pneg %p122
      %p181 = scmp.lt.s32.totalorder %s19, 1
      %s182 = scalar_select %p181, %s19, 1
      %p183 = scmp.lt.s32.totalorder %s20, 0
      %s184 = scalar_select %p183, %s20, 0
      %s185 = sadd.s32 %s184, %s182
      %s186 = scalar_lea.vmem %s3, %s185
      %p187 = scmp.lt.s32.totalorder %s19, 1
      %s188 = scalar_select %p187, %s19, 1
      %s189 = smul.addr %s188, 51
      %s190 = smul.addr %s189, 4
      %s191 = scalar_lea.vmem %s0, %s190
      %p192 = scmp.lt.s32.totalorder %s19, 1
      %s193 = scalar_select %p192, %s19, 1
      %p194 = scmp.lt.s32.totalorder %s20, 0
      %s195 = scalar_select %p194, %s20, 0
      %s196 = sadd.s32 %s195, %s193
      %s197 = scalar_lea.vmem %s2, %s196
      %p198 = scmp.lt.s32.totalorder %s19, 1
      %s199 = scalar_select %p198, %s19, 1
      %p200 = scmp.lt.s32.totalorder %s20, 0
      %s201 = scalar_select %p200, %s20, 0
      %s202 = sadd.s32 %s201, %s199
      %s203 = scalar_lea.vmem %s3, %s202
      %s205 = smul.u32 %s20, 16
      %s206 = smul.u32 %s205, 3
      %s207 = smul.addr %s206, 4
      %s208 = scalar_lea.vmem %s191, %s207
      %v209 = vld [vmem:[%s208] sm:$0xf]
      %v210 = vld [vmem:[%s208 + $0x4] sm:$0xf]
      %v211 = vld [vmem:[%s208 + $0x8] sm:$0x1]
      %v212 = vld [vmem:[%s208 + $0xc] sm:$0xf]
      %v213 = vld [vmem:[%s208 + $0x10] sm:$0xf]
      %v214 = vld [vmem:[%s208 + $0x14] sm:$0x1]
      %v215 = vld [vmem:[%s208 + $0x18] sm:$0xf]
      %v216 = vld [vmem:[%s208 + $0x1c] sm:$0xf]
      %v217 = vld [vmem:[%s208 + $0x20] sm:$0x1]
      %v218 = vld [vmem:[%s208 + $0x24] sm:$0xf]
      %v219 = vld [vmem:[%s208 + $0x28] sm:$0xf]
      %v220 = vld [vmem:[%s208 + $0x2c] sm:$0x1]
      %v221 = vld [vmem:[%s208 + $0x30] sm:$0xf]
      %v222 = vld [vmem:[%s208 + $0x34] sm:$0xf]
      %v223 = vld [vmem:[%s208 + $0x38] sm:$0x1]
      %v224 = vld [vmem:[%s208 + $0x3c] sm:$0xf]
      %v225 = vld [vmem:[%s208 + $0x40] sm:$0xf]
      %v226 = vld [vmem:[%s208 + $0x44] sm:$0x1]
      %v227 = vld [vmem:[%s208 + $0x48] sm:$0xf]
      %v228 = vld [vmem:[%s208 + $0x4c] sm:$0xf]
      %v229 = vld [vmem:[%s208 + $0x50] sm:$0x1]
      %v230 = vld [vmem:[%s208 + $0x54] sm:$0xf]
      %v231 = vld [vmem:[%s208 + $0x58] sm:$0xf]
      %v232 = vld [vmem:[%s208 + $0x5c] sm:$0x1]
      %v233 = vld [vmem:[%s208 + $0x60] sm:$0xf]
      %v234 = vld [vmem:[%s208 + $0x64] sm:$0xf]
      %v235 = vld [vmem:[%s208 + $0x68] sm:$0x1]
      %v236 = vld [vmem:[%s208 + $0x6c] sm:$0xf]
      %v237 = vld [vmem:[%s208 + $0x70] sm:$0xf]
      %v238 = vld [vmem:[%s208 + $0x74] sm:$0x1]
      %v239 = vld [vmem:[%s208 + $0x78] sm:$0xf]
      %v240 = vld [vmem:[%s208 + $0x7c] sm:$0xf]
      %v241 = vld [vmem:[%s208 + $0x80] sm:$0x1]
      %v242 = vld [vmem:[%s208 + $0x84] sm:$0xf]
      %v243 = vld [vmem:[%s208 + $0x88] sm:$0xf]
      %v244 = vld [vmem:[%s208 + $0x8c] sm:$0x1]
      %v245 = vld [vmem:[%s208 + $0x90] sm:$0xf]
      %v246 = vld [vmem:[%s208 + $0x94] sm:$0xf]
      %v247 = vld [vmem:[%s208 + $0x98] sm:$0x1]
      %v248 = vld [vmem:[%s208 + $0x9c] sm:$0xf]
      %v249 = vld [vmem:[%s208 + $0xa0] sm:$0xf]
      %v250 = vld [vmem:[%s208 + $0xa4] sm:$0x1]
      %v251 = vld [vmem:[%s208 + $0xa8] sm:$0xf]
      %v252 = vld [vmem:[%s208 + $0xac] sm:$0xf]
      %v253 = vld [vmem:[%s208 + $0xb0] sm:$0x1]
      %v254 = vld [vmem:[%s208 + $0xb4] sm:$0xf]
      %v255 = vld [vmem:[%s208 + $0xb8] sm:$0xf]
      %v256 = vld [vmem:[%s208 + $0xbc] sm:$0x1]
      %v257 = vld [vmem:[%s208 + $0xc0] sm:$0xf]
      %v258 = vld [vmem:[%s208 + $0xc4] sm:$0xf]
      %v259 = vld [vmem:[%s208 + $0xc8] sm:$0x1]
      %v260 = vld [vmem:[%s1] sm:$0x3]
      %vm261 = vsmask.f32 3328
      %vm262 = vsmask.f32 7440
      %vm263 = vmor %vm261, %vm262
      %v265 = vshrl.u32 %v209, 16
      %v267 = vrot.slane %v265, 4
      %v268 = vshll.u32 %v209, 16
      %v270 = vrot.slane %v268, 5
      %v271 = vor.u32 %v267, %v270
      %v272 = vrot.slane %v271, 4
      %v274 = vshll.u32 %v210, 16
      %v276 = vrot.slane %v274, 5
      %v277 = vsel %vm263, %v272, %v276
      %v278 = vshrl.u32 %v210, 16
      %v280 = vrot.slane %v278, 4
      %v281 = vor.u32 %v280, %v276
      %v282 = vrot.slane %v281, 4
      %v284 = vshll.u32 %v211, 16
      %v286 = vrot.slane %v284, 5
      %v287 = vsel %vm263, %v282, %v286
      %v289 = vshrl.u32 %v212, 16
      %v291 = vrot.slane %v289, 4
      %v292 = vshll.u32 %v212, 16
      %v294 = vrot.slane %v292, 5
      %v295 = vor.u32 %v291, %v294
      %v296 = vrot.slane %v295, 4
      %v298 = vshll.u32 %v213, 16
      %v300 = vrot.slane %v298, 5
      %v301 = vsel %vm263, %v296, %v300
      %v302 = vshrl.u32 %v213, 16
      %v304 = vrot.slane %v302, 4
      %v305 = vor.u32 %v304, %v300
      %v306 = vrot.slane %v305, 4
      %v308 = vshll.u32 %v214, 16
      %v310 = vrot.slane %v308, 5
      %v311 = vsel %vm263, %v306, %v310
      %v313 = vshrl.u32 %v215, 16
      %v315 = vrot.slane %v313, 4
      %v316 = vshll.u32 %v215, 16
      %v318 = vrot.slane %v316, 5
      %v319 = vor.u32 %v315, %v318
      %v320 = vrot.slane %v319, 4
      %v322 = vshll.u32 %v216, 16
      %v324 = vrot.slane %v322, 5
      %v325 = vsel %vm263, %v320, %v324
      %v326 = vshrl.u32 %v216, 16
      %v328 = vrot.slane %v326, 4
      %v329 = vor.u32 %v328, %v324
      %v330 = vrot.slane %v329, 4
      %v332 = vshll.u32 %v217, 16
      %v334 = vrot.slane %v332, 5
      %v335 = vsel %vm263, %v330, %v334
      %v337 = vshrl.u32 %v218, 16
      %v339 = vrot.slane %v337, 4
      %v340 = vshll.u32 %v218, 16
      %v342 = vrot.slane %v340, 5
      %v343 = vor.u32 %v339, %v342
      %v344 = vrot.slane %v343, 4
      %v346 = vshll.u32 %v219, 16
      %v348 = vrot.slane %v346, 5
      %v349 = vsel %vm263, %v344, %v348
      %v350 = vshrl.u32 %v219, 16
      %v352 = vrot.slane %v350, 4
      %v353 = vor.u32 %v352, %v348
      %v354 = vrot.slane %v353, 4
      %v356 = vshll.u32 %v220, 16
      %v358 = vrot.slane %v356, 5
      %v359 = vsel %vm263, %v354, %v358
      %v361 = vshrl.u32 %v221, 16
      %v363 = vrot.slane %v361, 4
      %v364 = vshll.u32 %v221, 16
      %v366 = vrot.slane %v364, 5
      %v367 = vor.u32 %v363, %v366
      %v368 = vrot.slane %v367, 4
      %v370 = vshll.u32 %v222, 16
      %v372 = vrot.slane %v370, 5
      %v373 = vsel %vm263, %v368, %v372
      %v374 = vshrl.u32 %v222, 16
      %v376 = vrot.slane %v374, 4
      %v377 = vor.u32 %v376, %v372
      %v378 = vrot.slane %v377, 4
      %v380 = vshll.u32 %v223, 16
      %v382 = vrot.slane %v380, 5
      %v383 = vsel %vm263, %v378, %v382
      %v385 = vshrl.u32 %v224, 16
      %v387 = vrot.slane %v385, 4
      %v388 = vshll.u32 %v224, 16
      %v390 = vrot.slane %v388, 5
      %v391 = vor.u32 %v387, %v390
      %v392 = vrot.slane %v391, 4
      %v394 = vshll.u32 %v225, 16
      %v396 = vrot.slane %v394, 5
      %v397 = vsel %vm263, %v392, %v396
      %v398 = vshrl.u32 %v225, 16
      %v400 = vrot.slane %v398, 4
      %v401 = vor.u32 %v400, %v396
      %v402 = vrot.slane %v401, 4
      %v404 = vshll.u32 %v226, 16
      %v406 = vrot.slane %v404, 5
      %v407 = vsel %vm263, %v402, %v406
      %v409 = vshrl.u32 %v227, 16
      %v411 = vrot.slane %v409, 4
      %v412 = vshll.u32 %v227, 16
      %v414 = vrot.slane %v412, 5
      %v415 = vor.u32 %v411, %v414
      %v416 = vrot.slane %v415, 4
      %v418 = vshll.u32 %v228, 16
      %v420 = vrot.slane %v418, 5
      %v421 = vsel %vm263, %v416, %v420
      %v422 = vshrl.u32 %v228, 16
      %v424 = vrot.slane %v422, 4
      %v425 = vor.u32 %v424, %v420
      %v426 = vrot.slane %v425, 4
      %v428 = vshll.u32 %v229, 16
      %v430 = vrot.slane %v428, 5
      %v431 = vsel %vm263, %v426, %v430
      %v433 = vshrl.u32 %v230, 16
      %v435 = vrot.slane %v433, 4
      %v436 = vshll.u32 %v230, 16
      %v438 = vrot.slane %v436, 5
      %v439 = vor.u32 %v435, %v438
      %v440 = vrot.slane %v439, 4
      %v442 = vshll.u32 %v231, 16
      %v444 = vrot.slane %v442, 5
      %v445 = vsel %vm263, %v440, %v444
      %v446 = vshrl.u32 %v231, 16
      %v448 = vrot.slane %v446, 4
      %v449 = vor.u32 %v448, %v444
      %v450 = vrot.slane %v449, 4
      %v452 = vshll.u32 %v232, 16
      %v454 = vrot.slane %v452, 5
      %v455 = vsel %vm263, %v450, %v454
      %v457 = vshrl.u32 %v233, 16
      %v459 = vrot.slane %v457, 4
      %v460 = vshll.u32 %v233, 16
      %v462 = vrot.slane %v460, 5
      %v463 = vor.u32 %v459, %v462
      %v464 = vrot.slane %v463, 4
      %v466 = vshll.u32 %v234, 16
      %v468 = vrot.slane %v466, 5
      %v469 = vsel %vm263, %v464, %v468
      %v470 = vshrl.u32 %v234, 16
      %v472 = vrot.slane %v470, 4
      %v473 = vor.u32 %v472, %v468
      %v474 = vrot.slane %v473, 4
      %v476 = vshll.u32 %v235, 16
      %v478 = vrot.slane %v476, 5
      %v479 = vsel %vm263, %v474, %v478
      %v481 = vshrl.u32 %v236, 16
      %v483 = vrot.slane %v481, 4
      %v484 = vshll.u32 %v236, 16
      %v486 = vrot.slane %v484, 5
      %v487 = vor.u32 %v483, %v486
      %v488 = vrot.slane %v487, 4
      %v490 = vshll.u32 %v237, 16
      %v492 = vrot.slane %v490, 5
      %v493 = vsel %vm263, %v488, %v492
      %v494 = vshrl.u32 %v237, 16
      %v496 = vrot.slane %v494, 4
      %v497 = vor.u32 %v496, %v492
      %v498 = vrot.slane %v497, 4
      %v500 = vshll.u32 %v238, 16
      %v502 = vrot.slane %v500, 5
      %v503 = vsel %vm263, %v498, %v502
      %v505 = vshrl.u32 %v239, 16
      %v507 = vrot.slane %v505, 4
      %v508 = vshll.u32 %v239, 16
      %v510 = vrot.slane %v508, 5
      %v511 = vor.u32 %v507, %v510
      %v512 = vrot.slane %v511, 4
      %v514 = vshll.u32 %v240, 16
      %v516 = vrot.slane %v514, 5
      %v517 = vsel %vm263, %v512, %v516
      %v518 = vshrl.u32 %v240, 16
      %v520 = vrot.slane %v518, 4
      %v521 = vor.u32 %v520, %v516
      %v522 = vrot.slane %v521, 4
      %v524 = vshll.u32 %v241, 16
      %v526 = vrot.slane %v524, 5
      %v527 = vsel %vm263, %v522, %v526
      %v529 = vshrl.u32 %v242, 16
      %v531 = vrot.slane %v529, 4
      %v532 = vshll.u32 %v242, 16
      %v534 = vrot.slane %v532, 5
      %v535 = vor.u32 %v531, %v534
      %v536 = vrot.slane %v535, 4
      %v538 = vshll.u32 %v243, 16
      %v540 = vrot.slane %v538, 5
      %v541 = vsel %vm263, %v536, %v540
      %v542 = vshrl.u32 %v243, 16
      %v544 = vrot.slane %v542, 4
      %v545 = vor.u32 %v544, %v540
      %v546 = vrot.slane %v545, 4
      %v548 = vshll.u32 %v244, 16
      %v550 = vrot.slane %v548, 5
      %v551 = vsel %vm263, %v546, %v550
      %v553 = vshrl.u32 %v245, 16
      %v555 = vrot.slane %v553, 4
      %v556 = vshll.u32 %v245, 16
      %v558 = vrot.slane %v556, 5
      %v559 = vor.u32 %v555, %v558
      %v560 = vrot.slane %v559, 4
      %v562 = vshll.u32 %v246, 16
      %v564 = vrot.slane %v562, 5
      %v565 = vsel %vm263, %v560, %v564
      %v566 = vshrl.u32 %v246, 16
      %v568 = vrot.slane %v566, 4
      %v569 = vor.u32 %v568, %v564
      %v570 = vrot.slane %v569, 4
      %v572 = vshll.u32 %v247, 16
      %v574 = vrot.slane %v572, 5
      %v575 = vsel %vm263, %v570, %v574
      %v577 = vshrl.u32 %v248, 16
      %v579 = vrot.slane %v577, 4
      %v580 = vshll.u32 %v248, 16
      %v582 = vrot.slane %v580, 5
      %v583 = vor.u32 %v579, %v582
      %v584 = vrot.slane %v583, 4
      %v586 = vshll.u32 %v249, 16
      %v588 = vrot.slane %v586, 5
      %v589 = vsel %vm263, %v584, %v588
      %v590 = vshrl.u32 %v249, 16
      %v592 = vrot.slane %v590, 4
      %v593 = vor.u32 %v592, %v588
      %v594 = vrot.slane %v593, 4
      %v596 = vshll.u32 %v250, 16
      %v598 = vrot.slane %v596, 5
      %v599 = vsel %vm263, %v594, %v598
      %v601 = vshrl.u32 %v251, 16
      %v603 = vrot.slane %v601, 4
      %v604 = vshll.u32 %v251, 16
      %v606 = vrot.slane %v604, 5
      %v607 = vor.u32 %v603, %v606
      %v608 = vrot.slane %v607, 4
      %v610 = vshll.u32 %v252, 16
      %v612 = vrot.slane %v610, 5
      %v613 = vsel %vm263, %v608, %v612
      %v614 = vshrl.u32 %v252, 16
      %v616 = vrot.slane %v614, 4
      %v617 = vor.u32 %v616, %v612
      %v618 = vrot.slane %v617, 4
      %v620 = vshll.u32 %v253, 16
      %v622 = vrot.slane %v620, 5
      %v623 = vsel %vm263, %v618, %v622
      %v625 = vshrl.u32 %v254, 16
      %v627 = vrot.slane %v625, 4
      %v628 = vshll.u32 %v254, 16
      %v630 = vrot.slane %v628, 5
      %v631 = vor.u32 %v627, %v630
      %v632 = vrot.slane %v631, 4
      %v634 = vshll.u32 %v255, 16
      %v636 = vrot.slane %v634, 5
      %v637 = vsel %vm263, %v632, %v636
      %v638 = vshrl.u32 %v255, 16
      %v640 = vrot.slane %v638, 4
      %v641 = vor.u32 %v640, %v636
      %v642 = vrot.slane %v641, 4
      %v644 = vshll.u32 %v256, 16
      %v646 = vrot.slane %v644, 5
      %v647 = vsel %vm263, %v642, %v646
      %s648 = scalar_lea.vmem %s1, 2
      %v649 = vld [vmem:[%s648] sm:$0x3]
      %v650 = vunpack.c.l.b16 %v277
      %v651 = vunpack.c.l.b16 %v287
      %v652 = vunpack.c.l.b16 %v301
      %v653 = vunpack.c.l.b16 %v311
      %v654 = vunpack.c.l.b16 %v325
      %v655 = vunpack.c.l.b16 %v335
      %v656 = vunpack.c.l.b16 %v349
      %v657 = vunpack.c.l.b16 %v359
      %v658 = vunpack.c.l.b16 %v373
      %v659 = vunpack.c.l.b16 %v383
      %v660 = vunpack.c.l.b16 %v397
      %v661 = vunpack.c.l.b16 %v407
      %v662 = vunpack.c.l.b16 %v421
      %v663 = vunpack.c.l.b16 %v431
      %v664 = vunpack.c.l.b16 %v445
      %v665 = vunpack.c.l.b16 %v455
      %v666 = vunpack.c.l.b16 %v469
      %v667 = vunpack.c.l.b16 %v479
      %v668 = vunpack.c.l.b16 %v493
      %v669 = vunpack.c.l.b16 %v503
      %v670 = vunpack.c.l.b16 %v517
      %v671 = vunpack.c.l.b16 %v527
      %v672 = vunpack.c.l.b16 %v541
      %v673 = vunpack.c.l.b16 %v551
      %v674 = vunpack.c.l.b16 %v565
      %v675 = vunpack.c.l.b16 %v575
      %v676 = vunpack.c.l.b16 %v589
      %v677 = vunpack.c.l.b16 %v599
      %v678 = vunpack.c.l.b16 %v613
      %v679 = vunpack.c.l.b16 %v623
      %v680 = vunpack.c.l.b16 %v637
      %v681 = vunpack.c.l.b16 %v647
      %v682 = vpack.c.b16 %v651, %v650
      %v683 = vpack.c.b16 %v653, %v652
      %v684 = vpack.c.b16 %v655, %v654
      %v685 = vpack.c.b16 %v657, %v656
      %v686 = vpack.c.b16 %v659, %v658
      %v687 = vpack.c.b16 %v661, %v660
      %v688 = vpack.c.b16 %v663, %v662
      %v689 = vpack.c.b16 %v665, %v664
      %v690 = vpack.c.b16 %v667, %v666
      %v691 = vpack.c.b16 %v669, %v668
      %v692 = vpack.c.b16 %v671, %v670
      %v693 = vpack.c.b16 %v673, %v672
      %v694 = vpack.c.b16 %v675, %v674
      %v695 = vpack.c.b16 %v677, %v676
      %v696 = vpack.c.b16 %v679, %v678
      %v697 = vpack.c.b16 %v681, %v680
      %vm698 = vcmask 31744
      %v700 = vsel %vm698, %v682, 0
      %v703 = vsel %vm698, %v683, 0
      %v706 = vsel %vm698, %v684, 0
      %v709 = vsel %vm698, %v685, 0
      %v712 = vsel %vm698, %v686, 0
      %v715 = vsel %vm698, %v687, 0
      %v718 = vsel %vm698, %v688, 0
      %v721 = vsel %vm698, %v689, 0
      %v724 = vsel %vm698, %v690, 0
      %v727 = vsel %vm698, %v691, 0
      %v730 = vsel %vm698, %v692, 0
      %v733 = vsel %vm698, %v693, 0
      %v736 = vsel %vm698, %v694, 0
      %v739 = vsel %vm698, %v695, 0
      %v742 = vsel %vm698, %v696, 0
      %v745 = vsel %vm698, %v697, 0
      %vm747 = vcmask 1041408
      %v749 = vsel %vm747, %v649, 0
      %751 = vmatprep.subr.bf16.mxu0 0
      %752 = vmatpush1.bf16.msra.mxu0 %v749
      %753 = vmatprep.subr.bf16.mxu0 0
      %754 = vmatpush1.bf16.msra.mxu0 0
      %755 = vmatprep.subr.bf16.mxu0 0
      %756 = vmatpush1.bf16.msra.mxu0 0
      %757 = vmatprep.subr.bf16.mxu0 0
      %758 = vmatpush1.bf16.msra.mxu0 0
      %759 = vmatprep.subr.bf16.mxu0 0
      %760 = vmatpush1.bf16.msra.mxu0 0
      %761 = vmatprep.subr.bf16.mxu0 0
      %762 = vmatpush1.bf16.msra.mxu0 0
      %763 = vmatprep.subr.bf16.mxu0 0
      %764 = vmatpush1.bf16.msra.mxu0 0
      %765 = vmatprep.subr.bf16.mxu0 0
      %766 = vmatpush1.bf16.msra.mxu0 0
      %767 = vmatprep.subr.bf16.mxu0 0
      %768 = vmatpush1.bf16.msra.mxu0 0
      %769 = vmatprep.subr.bf16.mxu0 0
      %770 = vmatpush1.bf16.msra.mxu0 0
      %771 = vmatprep.subr.bf16.mxu0 0
      %772 = vmatpush1.bf16.msra.mxu0 0
      %773 = vmatprep.subr.bf16.mxu0 0
      %774 = vmatpush1.bf16.msra.mxu0 0
      %775 = vmatprep.subr.bf16.mxu0 0
      %776 = vmatpush1.bf16.msra.mxu0 0
      %777 = vmatprep.subr.bf16.mxu0 0
      %778 = vmatpush1.bf16.msra.mxu0 0
      %779 = vmatprep.subr.bf16.mxu0 0
      %780 = vmatpush1.bf16.msra.mxu0 0
      %781 = vmatprep.subr.bf16.mxu0 0
      %782 = vmatpush1.bf16.msra.mxu0 0
      %783 = vmatprep.mubr.bf16.mxu0 0
      %784 = vmatmul.mubr.bf16.gmra.mrb[0].mxu0 %v700
      %v785 = vpop.f32.mrb[0].mxu0
      %v786 = vadd.f32 0.0, %v785
      %v787 = vpop.f32.mrb[0].mxu0
      %v788 = vpop.f32.mrb[0].mxu0
      %v789 = vadd.f32 0.0, %v788
      %v790 = vpop.f32.mrb[0].mxu0
      %791 = vmatprep.mubr.bf16.mxu0 0
      %792 = vmatmul.mubr.bf16.gmra.mrb[0].mxu0 %v703
      %v793 = vpop.f32.mrb[0].mxu0
      %v794 = vadd.f32 0.0, %v793
      %v795 = vpop.f32.mrb[0].mxu0
      %v796 = vpop.f32.mrb[0].mxu0
      %v797 = vadd.f32 0.0, %v796
      %v798 = vpop.f32.mrb[0].mxu0
      %799 = vmatprep.mubr.bf16.mxu0 0
      %800 = vmatmul.mubr.bf16.gmra.mrb[0].mxu0 %v706
      %v801 = vpop.f32.mrb[0].mxu0
      %v802 = vadd.f32 0.0, %v801
      %v803 = vpop.f32.mrb[0].mxu0
      %v804 = vpop.f32.mrb[0].mxu0
      %v805 = vadd.f32 0.0, %v804
      %v806 = vpop.f32.mrb[0].mxu0
      %807 = vmatprep.mubr.bf16.mxu0 0
      %808 = vmatmul.mubr.bf16.gmra.mrb[0].mxu0 %v709
      %v809 = vpop.f32.mrb[0].mxu0
      %v810 = vadd.f32 0.0, %v809
      %v811 = vpop.f32.mrb[0].mxu0
      %v812 = vpop.f32.mrb[0].mxu0
      %v813 = vadd.f32 0.0, %v812
      %v814 = vpop.f32.mrb[0].mxu0
      %815 = vmatprep.mubr.bf16.mxu0 0
      %816 = vmatmul.mubr.bf16.gmra.mrb[0].mxu0 %v712
      %v817 = vpop.f32.mrb[0].mxu0
      %v818 = vadd.f32 0.0, %v817
      %v819 = vpop.f32.mrb[0].mxu0
      %v820 = vpop.f32.mrb[0].mxu0
      %v821 = vadd.f32 0.0, %v820
      %v822 = vpop.f32.mrb[0].mxu0
      %823 = vmatprep.mubr.bf16.mxu0 0
      %824 = vmatmul.mubr.bf16.gmra.mrb[0].mxu0 %v715
      %v825 = vpop.f32.mrb[0].mxu0
      %v826 = vadd.f32 0.0, %v825
      %v827 = vpop.f32.mrb[0].mxu0
      %v828 = vpop.f32.mrb[0].mxu0
      %v829 = vadd.f32 0.0, %v828
      %v830 = vpop.f32.mrb[0].mxu0
      %831 = vmatprep.mubr.bf16.mxu0 0
      %832 = vmatmul.mubr.bf16.gmra.mrb[0].mxu0 %v718
      %v833 = vpop.f32.mrb[0].mxu0
      %v834 = vadd.f32 0.0, %v833
      %v835 = vpop.f32.mrb[0].mxu0
      %v836 = vpop.f32.mrb[0].mxu0
      %v837 = vadd.f32 0.0, %v836
      %v838 = vpop.f32.mrb[0].mxu0
      %839 = vmatprep.mubr.bf16.mxu0 0
      %840 = vmatmul.mubr.bf16.gmra.mrb[0].mxu0 %v721
      %v841 = vpop.f32.mrb[0].mxu0
      %v842 = vadd.f32 0.0, %v841
      %v843 = vpop.f32.mrb[0].mxu0
      %v844 = vpop.f32.mrb[0].mxu0
      %v845 = vadd.f32 0.0, %v844
      %v846 = vpop.f32.mrb[0].mxu0
      %847 = vmatprep.mubr.bf16.mxu0 0
      %848 = vmatmul.mubr.bf16.gmra.mrb[0].mxu0 %v724
      %v849 = vpop.f32.mrb[0].mxu0
      %v850 = vadd.f32 0.0, %v849
      %v851 = vpop.f32.mrb[0].mxu0
      %v852 = vpop.f32.mrb[0].mxu0
      %v853 = vadd.f32 0.0, %v852
      %v854 = vpop.f32.mrb[0].mxu0
      %855 = vmatprep.mubr.bf16.mxu0 0
      %856 = vmatmul.mubr.bf16.gmra.mrb[0].mxu0 %v727
      %v857 = vpop.f32.mrb[0].mxu0
      %v858 = vadd.f32 0.0, %v857
      %v859 = vpop.f32.mrb[0].mxu0
      %v860 = vpop.f32.mrb[0].mxu0
      %v861 = vadd.f32 0.0, %v860
      %v862 = vpop.f32.mrb[0].mxu0
      %863 = vmatprep.mubr.bf16.mxu0 0
      %864 = vmatmul.mubr.bf16.gmra.mrb[0].mxu0 %v730
      %v865 = vpop.f32.mrb[0].mxu0
      %v866 = vadd.f32 0.0, %v865
      %v867 = vpop.f32.mrb[0].mxu0
      %v868 = vpop.f32.mrb[0].mxu0
      %v869 = vadd.f32 0.0, %v868
      %v870 = vpop.f32.mrb[0].mxu0
      %871 = vmatprep.mubr.bf16.mxu0 0
      %872 = vmatmul.mubr.bf16.gmra.mrb[0].mxu0 %v733
      %v873 = vpop.f32.mrb[0].mxu0
      %v874 = vadd.f32 0.0, %v873
      %v875 = vpop.f32.mrb[0].mxu0
      %v876 = vpop.f32.mrb[0].mxu0
      %v877 = vadd.f32 0.0, %v876
      %v878 = vpop.f32.mrb[0].mxu0
      %879 = vmatprep.mubr.bf16.mxu0 0
      %880 = vmatmul.mubr.bf16.gmra.mrb[0].mxu0 %v736
      %v881 = vpop.f32.mrb[0].mxu0
      %v882 = vadd.f32 0.0, %v881
      %v883 = vpop.f32.mrb[0].mxu0
      %v884 = vpop.f32.mrb[0].mxu0
      %v885 = vadd.f32 0.0, %v884
      %v886 = vpop.f32.mrb[0].mxu0
      %887 = vmatprep.mubr.bf16.mxu0 0
      %888 = vmatmul.mubr.bf16.gmra.mrb[0].mxu0 %v739
      %v889 = vpop.f32.mrb[0].mxu0
      %v890 = vadd.f32 0.0, %v889
      %v891 = vpop.f32.mrb[0].mxu0
      %v892 = vpop.f32.mrb[0].mxu0
      %v893 = vadd.f32 0.0, %v892
      %v894 = vpop.f32.mrb[0].mxu0
      %895 = vmatprep.mubr.bf16.mxu0 0
      %896 = vmatmul.mubr.bf16.gmra.mrb[0].mxu0 %v742
      %v897 = vpop.f32.mrb[0].mxu0
      %v898 = vadd.f32 0.0, %v897
      %v899 = vpop.f32.mrb[0].mxu0
      %v900 = vpop.f32.mrb[0].mxu0
      %v901 = vadd.f32 0.0, %v900
      %v902 = vpop.f32.mrb[0].mxu0
      %903 = vmatprep.mubr.bf16.mxu0 0
      %904 = vmatmul.mubr.bf16.gmra.mrb[0].mxu0 %v745
      %v905 = vpop.f32.mrb[0].mxu0
      %v906 = vadd.f32 0.0, %v905
      %v907 = vpop.f32.mrb[0].mxu0
      %v908 = vpop.f32.mrb[0].mxu0
      %v909 = vadd.f32 0.0, %v908
      %v910 = vpop.f32.mrb[0].mxu0
      %911 = vdwg.mxu0
      %v944 = vunpack.c.l.b16 %v209
      %v945 = vunpack.c.l.b16 %v210
      %v946 = vunpack.c.l.b16 %v212
      %v947 = vunpack.c.l.b16 %v213
      %v948 = vunpack.c.l.b16 %v215
      %v949 = vunpack.c.l.b16 %v216
      %v950 = vunpack.c.l.b16 %v218
      %v951 = vunpack.c.l.b16 %v219
      %v952 = vunpack.c.l.b16 %v221
      %v953 = vunpack.c.l.b16 %v222
      %v954 = vunpack.c.l.b16 %v224
      %v955 = vunpack.c.l.b16 %v225
      %v956 = vunpack.c.l.b16 %v227
      %v957 = vunpack.c.l.b16 %v228
      %v958 = vunpack.c.l.b16 %v230
      %v959 = vunpack.c.l.b16 %v231
      %v960 = vunpack.c.l.b16 %v233
      %v961 = vunpack.c.l.b16 %v234
      %v962 = vunpack.c.l.b16 %v236
      %v963 = vunpack.c.l.b16 %v237
      %v964 = vunpack.c.l.b16 %v239
      %v965 = vunpack.c.l.b16 %v240
      %v966 = vunpack.c.l.b16 %v242
      %v967 = vunpack.c.l.b16 %v243
      %v968 = vunpack.c.l.b16 %v245
      %v969 = vunpack.c.l.b16 %v246
      %v970 = vunpack.c.l.b16 %v248
      %v971 = vunpack.c.l.b16 %v249
      %v972 = vunpack.c.l.b16 %v251
      %v973 = vunpack.c.l.b16 %v252
      %v974 = vunpack.c.l.b16 %v254
      %v975 = vunpack.c.l.b16 %v255
      %v976 = vpack.c.b16 %v945, %v944
      %v977 = vpack.c.b16 %v947, %v946
      %v978 = vpack.c.b16 %v949, %v948
      %v979 = vpack.c.b16 %v951, %v950
      %v980 = vpack.c.b16 %v953, %v952
      %v981 = vpack.c.b16 %v955, %v954
      %v982 = vpack.c.b16 %v957, %v956
      %v983 = vpack.c.b16 %v959, %v958
      %v984 = vpack.c.b16 %v961, %v960
      %v985 = vpack.c.b16 %v963, %v962
      %v986 = vpack.c.b16 %v965, %v964
      %v987 = vpack.c.b16 %v967, %v966
      %v988 = vpack.c.b16 %v969, %v968
      %v989 = vpack.c.b16 %v971, %v970
      %v990 = vpack.c.b16 %v973, %v972
      %v991 = vpack.c.b16 %v975, %v974
      %v993 = vsel %vm698, %v976, 0
      %v996 = vsel %vm698, %v977, 0
      %v999 = vsel %vm698, %v978, 0
      %v1002 = vsel %vm698, %v979, 0
      %v1005 = vsel %vm698, %v980, 0
      %v1008 = vsel %vm698, %v981, 0
      %v1011 = vsel %vm698, %v982, 0
      %v1014 = vsel %vm698, %v983, 0
      %v1017 = vsel %vm698, %v984, 0
      %v1020 = vsel %vm698, %v985, 0
      %v1023 = vsel %vm698, %v986, 0
      %v1026 = vsel %vm698, %v987, 0
      %v1029 = vsel %vm698, %v988, 0
      %v1032 = vsel %vm698, %v989, 0
      %v1035 = vsel %vm698, %v990, 0
      %v1038 = vsel %vm698, %v991, 0
      %v1041 = vsel %vm747, %v260, 0
      %1043 = vmatprep.subr.bf16.mxu0 0
      %1044 = vmatpush1.bf16.msra.mxu0 %v1041
      %1045 = vmatprep.subr.bf16.mxu0 0
      %1046 = vmatpush1.bf16.msra.mxu0 0
      %1047 = vmatprep.subr.bf16.mxu0 0
      %1048 = vmatpush1.bf16.msra.mxu0 0
      %1049 = vmatprep.subr.bf16.mxu0 0
      %1050 = vmatpush1.bf16.msra.mxu0 0
      %1051 = vmatprep.subr.bf16.mxu0 0
      %1052 = vmatpush1.bf16.msra.mxu0 0
      %1053 = vmatprep.subr.bf16.mxu0 0
      %1054 = vmatpush1.bf16.msra.mxu0 0
      %1055 = vmatprep.subr.bf16.mxu0 0
      %1056 = vmatpush1.bf16.msra.mxu0 0
      %1057 = vmatprep.subr.bf16.mxu0 0
      %1058 = vmatpush1.bf16.msra.mxu0 0
      %1059 = vmatprep.subr.bf16.mxu0 0
      %1060 = vmatpush1.bf16.msra.mxu0 0
      %1061 = vmatprep.subr.bf16.mxu0 0
      %1062 = vmatpush1.bf16.msra.mxu0 0
      %1063 = vmatprep.subr.bf16.mxu0 0
      %1064 = vmatpush1.bf16.msra.mxu0 0
      %1065 = vmatprep.subr.bf16.mxu0 0
      %1066 = vmatpush1.bf16.msra.mxu0 0
      %1067 = vmatprep.subr.bf16.mxu0 0
      %1068 = vmatpush1.bf16.msra.mxu0 0
      %1069 = vmatprep.subr.bf16.mxu0 0
      %1070 = vmatpush1.bf16.msra.mxu0 0
      %1071 = vmatprep.subr.bf16.mxu0 0
      %1072 = vmatpush1.bf16.msra.mxu0 0
      %1073 = vmatprep.subr.bf16.mxu0 0
      %1074 = vmatpush1.bf16.msra.mxu0 0
      %1075 = vmatprep.mubr.bf16.mxu0 0
      %1076 = vmatmul.mubr.bf16.gmra.mrb[0].mxu0 %v993
      %v1077 = vpop.f32.mrb[0].mxu0
      %v1078 = vadd.f32 %v786, %v1077
      %v1079 = vpop.f32.mrb[0].mxu0
      %v1080 = vpop.f32.mrb[0].mxu0
      %v1081 = vadd.f32 %v789, %v1080
      %v1082 = vpop.f32.mrb[0].mxu0
      %1083 = vmatprep.mubr.bf16.mxu0 0
      %1084 = vmatmul.mubr.bf16.gmra.mrb[0].mxu0 %v996
      %v1085 = vpop.f32.mrb[0].mxu0
      %v1086 = vadd.f32 %v794, %v1085
      %v1087 = vpop.f32.mrb[0].mxu0
      %v1088 = vpop.f32.mrb[0].mxu0
      %v1089 = vadd.f32 %v797, %v1088
      %v1090 = vpop.f32.mrb[0].mxu0
      %1091 = vmatprep.mubr.bf16.mxu0 0
      %1092 = vmatmul.mubr.bf16.gmra.mrb[0].mxu0 %v999
      %v1093 = vpop.f32.mrb[0].mxu0
      %v1094 = vadd.f32 %v802, %v1093
      %v1095 = vpop.f32.mrb[0].mxu0
      %v1096 = vpop.f32.mrb[0].mxu0
      %v1097 = vadd.f32 %v805, %v1096
      %v1098 = vpop.f32.mrb[0].mxu0
      %1099 = vmatprep.mubr.bf16.mxu0 0
      %1100 = vmatmul.mubr.bf16.gmra.mrb[0].mxu0 %v1002
      %v1101 = vpop.f32.mrb[0].mxu0
      %v1102 = vadd.f32 %v810, %v1101
      %v1103 = vpop.f32.mrb[0].mxu0
      %v1104 = vpop.f32.mrb[0].mxu0
      %v1105 = vadd.f32 %v813, %v1104
      %v1106 = vpop.f32.mrb[0].mxu0
      %1107 = vmatprep.mubr.bf16.mxu0 0
      %1108 = vmatmul.mubr.bf16.gmra.mrb[0].mxu0 %v1005
      %v1109 = vpop.f32.mrb[0].mxu0
      %v1110 = vadd.f32 %v818, %v1109
      %v1111 = vpop.f32.mrb[0].mxu0
      %v1112 = vpop.f32.mrb[0].mxu0
      %v1113 = vadd.f32 %v821, %v1112
      %v1114 = vpop.f32.mrb[0].mxu0
      %1115 = vmatprep.mubr.bf16.mxu0 0
      %1116 = vmatmul.mubr.bf16.gmra.mrb[0].mxu0 %v1008
      %v1117 = vpop.f32.mrb[0].mxu0
      %v1118 = vadd.f32 %v826, %v1117
      %v1119 = vpop.f32.mrb[0].mxu0
      %v1120 = vpop.f32.mrb[0].mxu0
      %v1121 = vadd.f32 %v829, %v1120
      %v1122 = vpop.f32.mrb[0].mxu0
      %1123 = vmatprep.mubr.bf16.mxu0 0
      %1124 = vmatmul.mubr.bf16.gmra.mrb[0].mxu0 %v1011
      %v1125 = vpop.f32.mrb[0].mxu0
      %v1126 = vadd.f32 %v834, %v1125
      %v1127 = vpop.f32.mrb[0].mxu0
      %v1128 = vpop.f32.mrb[0].mxu0
      %v1129 = vadd.f32 %v837, %v1128
      %v1130 = vpop.f32.mrb[0].mxu0
      %1131 = vmatprep.mubr.bf16.mxu0 0
      %1132 = vmatmul.mubr.bf16.gmra.mrb[0].mxu0 %v1014
      %v1133 = vpop.f32.mrb[0].mxu0
      %v1134 = vadd.f32 %v842, %v1133
      %v1135 = vpop.f32.mrb[0].mxu0
      %v1136 = vpop.f32.mrb[0].mxu0
      %v1137 = vadd.f32 %v845, %v1136
      %v1138 = vpop.f32.mrb[0].mxu0
      %1139 = vmatprep.mubr.bf16.mxu0 0
      %1140 = vmatmul.mubr.bf16.gmra.mrb[0].mxu0 %v1017
      %v1141 = vpop.f32.mrb[0].mxu0
      %v1142 = vadd.f32 %v850, %v1141
      %v1143 = vpop.f32.mrb[0].mxu0
      %v1144 = vpop.f32.mrb[0].mxu0
      %v1145 = vadd.f32 %v853, %v1144
      %v1146 = vpop.f32.mrb[0].mxu0
      %1147 = vmatprep.mubr.bf16.mxu0 0
      %1148 = vmatmul.mubr.bf16.gmra.mrb[0].mxu0 %v1020
      %v1149 = vpop.f32.mrb[0].mxu0
      %v1150 = vadd.f32 %v858, %v1149
      %v1151 = vpop.f32.mrb[0].mxu0
      %v1152 = vpop.f32.mrb[0].mxu0
      %v1153 = vadd.f32 %v861, %v1152
      %v1154 = vpop.f32.mrb[0].mxu0
      %1155 = vmatprep.mubr.bf16.mxu0 0
      %1156 = vmatmul.mubr.bf16.gmra.mrb[0].mxu0 %v1023
      %v1157 = vpop.f32.mrb[0].mxu0
      %v1158 = vadd.f32 %v866, %v1157
      %v1159 = vpop.f32.mrb[0].mxu0
      %v1160 = vpop.f32.mrb[0].mxu0
      %v1161 = vadd.f32 %v869, %v1160
      %v1162 = vpop.f32.mrb[0].mxu0
      %1163 = vmatprep.mubr.bf16.mxu0 0
      %1164 = vmatmul.mubr.bf16.gmra.mrb[0].mxu0 %v1026
      %v1165 = vpop.f32.mrb[0].mxu0
      %v1166 = vadd.f32 %v874, %v1165
      %v1167 = vpop.f32.mrb[0].mxu0
      %v1168 = vpop.f32.mrb[0].mxu0
      %v1169 = vadd.f32 %v877, %v1168
      %v1170 = vpop.f32.mrb[0].mxu0
      %1171 = vmatprep.mubr.bf16.mxu0 0
      %1172 = vmatmul.mubr.bf16.gmra.mrb[0].mxu0 %v1029
      %v1173 = vpop.f32.mrb[0].mxu0
      %v1174 = vadd.f32 %v882, %v1173
      %v1175 = vpop.f32.mrb[0].mxu0
      %v1176 = vpop.f32.mrb[0].mxu0
      %v1177 = vadd.f32 %v885, %v1176
      %v1178 = vpop.f32.mrb[0].mxu0
      %1179 = vmatprep.mubr.bf16.mxu0 0
      %1180 = vmatmul.mubr.bf16.gmra.mrb[0].mxu0 %v1032
      %v1181 = vpop.f32.mrb[0].mxu0
      %v1182 = vadd.f32 %v890, %v1181
      %v1183 = vpop.f32.mrb[0].mxu0
      %v1184 = vpop.f32.mrb[0].mxu0
      %v1185 = vadd.f32 %v893, %v1184
      %v1186 = vpop.f32.mrb[0].mxu0
      %1187 = vmatprep.mubr.bf16.mxu0 0
      %1188 = vmatmul.mubr.bf16.gmra.mrb[0].mxu0 %v1035
      %v1189 = vpop.f32.mrb[0].mxu0
      %v1190 = vadd.f32 %v898, %v1189
      %v1191 = vpop.f32.mrb[0].mxu0
      %v1192 = vpop.f32.mrb[0].mxu0
      %v1193 = vadd.f32 %v901, %v1192
      %v1194 = vpop.f32.mrb[0].mxu0
      %1195 = vmatprep.mubr.bf16.mxu0 0
      %1196 = vmatmul.mubr.bf16.gmra.mrb[0].mxu0 %v1038
      %v1197 = vpop.f32.mrb[0].mxu0
      %v1198 = vadd.f32 %v906, %v1197
      %v1199 = vpop.f32.mrb[0].mxu0
      %v1200 = vpop.f32.mrb[0].mxu0
      %v1201 = vadd.f32 %v909, %v1200
      %v1202 = vpop.f32.mrb[0].mxu0
      %1203 = vdwg.mxu0
      %s1204 = scalar_lea.vmem %s1, 4
      %v1205 = vld [vmem:[%s1204] sm:$0x3]
      %v1208 = vunpack.c.l.b16 %v257
      %v1209 = vunpack.c.l.b16 %v258
      %v1210 = vpack.c.b16 %v1209, %v1208
      %v1212 = vsel %vm698, %v1210, 0
      %v1215 = vsel %vm747, %v1205, 0
      %1217 = vmatprep.subr.bf16.mxu0 0
      %1218 = vmatpush1.bf16.msra.mxu0 %v1215
      %1219 = vmatprep.subr.bf16.mxu0 0
      %1220 = vmatpush1.bf16.msra.mxu0 0
      %1221 = vmatprep.subr.bf16.mxu0 0
      %1222 = vmatpush1.bf16.msra.mxu0 0
      %1223 = vmatprep.subr.bf16.mxu0 0
      %1224 = vmatpush1.bf16.msra.mxu0 0
      %1225 = vmatprep.subr.bf16.mxu0 0
      %1226 = vmatpush1.bf16.msra.mxu0 0
      %1227 = vmatprep.subr.bf16.mxu0 0
      %1228 = vmatpush1.bf16.msra.mxu0 0
      %1229 = vmatprep.subr.bf16.mxu0 0
      %1230 = vmatpush1.bf16.msra.mxu0 0
      %1231 = vmatprep.subr.bf16.mxu0 0
      %1232 = vmatpush1.bf16.msra.mxu0 0
      %1233 = vmatprep.subr.bf16.mxu0 0
      %1234 = vmatpush1.bf16.msra.mxu0 0
      %1235 = vmatprep.subr.bf16.mxu0 0
      %1236 = vmatpush1.bf16.msra.mxu0 0
      %1237 = vmatprep.subr.bf16.mxu0 0
      %1238 = vmatpush1.bf16.msra.mxu0 0
      %1239 = vmatprep.subr.bf16.mxu0 0
      %1240 = vmatpush1.bf16.msra.mxu0 0
      %1241 = vmatprep.subr.bf16.mxu0 0
      %1242 = vmatpush1.bf16.msra.mxu0 0
      %1243 = vmatprep.subr.bf16.mxu0 0
      %1244 = vmatpush1.bf16.msra.mxu0 0
      %1245 = vmatprep.subr.bf16.mxu0 0
      %1246 = vmatpush1.bf16.msra.mxu0 0
      %1247 = vmatprep.subr.bf16.mxu0 0
      %1248 = vmatpush1.bf16.msra.mxu0 0
      %1249 = vmatprep.mubr.bf16.mxu0 0
      %1250 = vmatmul.mubr.bf16.gmra.mrb[0].mxu0 %v996
      %v1251 = vpop.f32.mrb[0].mxu0
      %v1252 = vadd.f32 0.0, %v1251
      %v1253 = vpop.f32.mrb[0].mxu0
      %v1254 = vpop.f32.mrb[0].mxu0
      %v1255 = vadd.f32 0.0, %v1254
      %v1256 = vpop.f32.mrb[0].mxu0
      %1257 = vmatprep.mubr.bf16.mxu0 0
      %1258 = vmatmul.mubr.bf16.gmra.mrb[0].mxu0 %v999
      %v1259 = vpop.f32.mrb[0].mxu0
      %v1260 = vadd.f32 0.0, %v1259
      %v1261 = vpop.f32.mrb[0].mxu0
      %v1262 = vpop.f32.mrb[0].mxu0
      %v1263 = vadd.f32 0.0, %v1262
      %v1264 = vpop.f32.mrb[0].mxu0
      %1265 = vmatprep.mubr.bf16.mxu0 0
      %1266 = vmatmul.mubr.bf16.gmra.mrb[0].mxu0 %v1002
      %v1267 = vpop.f32.mrb[0].mxu0
      %v1268 = vadd.f32 0.0, %v1267
      %v1269 = vpop.f32.mrb[0].mxu0
      %v1270 = vpop.f32.mrb[0].mxu0
      %v1271 = vadd.f32 0.0, %v1270
      %v1272 = vpop.f32.mrb[0].mxu0
      %1273 = vmatprep.mubr.bf16.mxu0 0
      %1274 = vmatmul.mubr.bf16.gmra.mrb[0].mxu0 %v1005
      %v1275 = vpop.f32.mrb[0].mxu0
      %v1276 = vadd.f32 0.0, %v1275
      %v1277 = vpop.f32.mrb[0].mxu0
      %v1278 = vpop.f32.mrb[0].mxu0
      %v1279 = vadd.f32 0.0, %v1278
      %v1280 = vpop.f32.mrb[0].mxu0
      %1281 = vmatprep.mubr.bf16.mxu0 0
      %1282 = vmatmul.mubr.bf16.gmra.mrb[0].mxu0 %v1008
      %v1283 = vpop.f32.mrb[0].mxu0
      %v1284 = vadd.f32 0.0, %v1283
      %v1285 = vpop.f32.mrb[0].mxu0
      %v1286 = vpop.f32.mrb[0].mxu0
      %v1287 = vadd.f32 0.0, %v1286
      %v1288 = vpop.f32.mrb[0].mxu0
      %1289 = vmatprep.mubr.bf16.mxu0 0
      %1290 = vmatmul.mubr.bf16.gmra.mrb[0].mxu0 %v1011
      %v1291 = vpop.f32.mrb[0].mxu0
      %v1292 = vadd.f32 0.0, %v1291
      %v1293 = vpop.f32.mrb[0].mxu0
      %v1294 = vpop.f32.mrb[0].mxu0
      %v1295 = vadd.f32 0.0, %v1294
      %v1296 = vpop.f32.mrb[0].mxu0
      %1297 = vmatprep.mubr.bf16.mxu0 0
      %1298 = vmatmul.mubr.bf16.gmra.mrb[0].mxu0 %v1014
      %v1299 = vpop.f32.mrb[0].mxu0
      %v1300 = vadd.f32 0.0, %v1299
      %v1301 = vpop.f32.mrb[0].mxu0
      %v1302 = vpop.f32.mrb[0].mxu0
      %v1303 = vadd.f32 0.0, %v1302
      %v1304 = vpop.f32.mrb[0].mxu0
      %1305 = vmatprep.mubr.bf16.mxu0 0
      %1306 = vmatmul.mubr.bf16.gmra.mrb[0].mxu0 %v1017
      %v1307 = vpop.f32.mrb[0].mxu0
      %v1308 = vadd.f32 0.0, %v1307
      %v1309 = vpop.f32.mrb[0].mxu0
      %v1310 = vpop.f32.mrb[0].mxu0
      %v1311 = vadd.f32 0.0, %v1310
      %v1312 = vpop.f32.mrb[0].mxu0
      %1313 = vmatprep.mubr.bf16.mxu0 0
      %1314 = vmatmul.mubr.bf16.gmra.mrb[0].mxu0 %v1020
      %v1315 = vpop.f32.mrb[0].mxu0
      %v1316 = vadd.f32 0.0, %v1315
      %v1317 = vpop.f32.mrb[0].mxu0
      %v1318 = vpop.f32.mrb[0].mxu0
      %v1319 = vadd.f32 0.0, %v1318
      %v1320 = vpop.f32.mrb[0].mxu0
      %1321 = vmatprep.mubr.bf16.mxu0 0
      %1322 = vmatmul.mubr.bf16.gmra.mrb[0].mxu0 %v1023
      %v1323 = vpop.f32.mrb[0].mxu0
      %v1324 = vadd.f32 0.0, %v1323
      %v1325 = vpop.f32.mrb[0].mxu0
      %v1326 = vpop.f32.mrb[0].mxu0
      %v1327 = vadd.f32 0.0, %v1326
      %v1328 = vpop.f32.mrb[0].mxu0
      %1329 = vmatprep.mubr.bf16.mxu0 0
      %1330 = vmatmul.mubr.bf16.gmra.mrb[0].mxu0 %v1026
      %v1331 = vpop.f32.mrb[0].mxu0
      %v1332 = vadd.f32 0.0, %v1331
      %v1333 = vpop.f32.mrb[0].mxu0
      %v1334 = vpop.f32.mrb[0].mxu0
      %v1335 = vadd.f32 0.0, %v1334
      %v1336 = vpop.f32.mrb[0].mxu0
      %1337 = vmatprep.mubr.bf16.mxu0 0
      %1338 = vmatmul.mubr.bf16.gmra.mrb[0].mxu0 %v1029
      %v1339 = vpop.f32.mrb[0].mxu0
      %v1340 = vadd.f32 0.0, %v1339
      %v1341 = vpop.f32.mrb[0].mxu0
      %v1342 = vpop.f32.mrb[0].mxu0
      %v1343 = vadd.f32 0.0, %v1342
      %v1344 = vpop.f32.mrb[0].mxu0
      %1345 = vmatprep.mubr.bf16.mxu0 0
      %1346 = vmatmul.mubr.bf16.gmra.mrb[0].mxu0 %v1032
      %v1347 = vpop.f32.mrb[0].mxu0
      %v1348 = vadd.f32 0.0, %v1347
      %v1349 = vpop.f32.mrb[0].mxu0
      %v1350 = vpop.f32.mrb[0].mxu0
      %v1351 = vadd.f32 0.0, %v1350
      %v1352 = vpop.f32.mrb[0].mxu0
      %1353 = vmatprep.mubr.bf16.mxu0 0
      %1354 = vmatmul.mubr.bf16.gmra.mrb[0].mxu0 %v1035
      %v1355 = vpop.f32.mrb[0].mxu0
      %v1356 = vadd.f32 0.0, %v1355
      %v1357 = vpop.f32.mrb[0].mxu0
      %v1358 = vpop.f32.mrb[0].mxu0
      %v1359 = vadd.f32 0.0, %v1358
      %v1360 = vpop.f32.mrb[0].mxu0
      %1361 = vmatprep.mubr.bf16.mxu0 0
      %1362 = vmatmul.mubr.bf16.gmra.mrb[0].mxu0 %v1038
      %v1363 = vpop.f32.mrb[0].mxu0
      %v1364 = vadd.f32 0.0, %v1363
      %v1365 = vpop.f32.mrb[0].mxu0
      %v1366 = vpop.f32.mrb[0].mxu0
      %v1367 = vadd.f32 0.0, %v1366
      %v1368 = vpop.f32.mrb[0].mxu0
      %1369 = vmatprep.mubr.bf16.mxu0 0
      %1370 = vmatmul.mubr.bf16.gmra.mrb[0].mxu0 %v1212
      %v1371 = vpop.f32.mrb[0].mxu0
      %v1372 = vadd.f32 0.0, %v1371
      %v1373 = vpop.f32.mrb[0].mxu0
      %v1374 = vpop.f32.mrb[0].mxu0
      %v1375 = vadd.f32 0.0, %v1374
      %v1376 = vpop.f32.mrb[0].mxu0
      %1377 = vdwg.mxu0
      %v1378 = vadd.f32 %v1078, %v1252
      %v1379 = vadd.f32 %v1081, %v1255
      %v1380 = vadd.f32 %v1086, %v1260
      %v1381 = vadd.f32 %v1089, %v1263
      %v1382 = vadd.f32 %v1094, %v1268
      %v1383 = vadd.f32 %v1097, %v1271
      %v1384 = vadd.f32 %v1102, %v1276
      %v1385 = vadd.f32 %v1105, %v1279
      %v1386 = vadd.f32 %v1110, %v1284
      %v1387 = vadd.f32 %v1113, %v1287
      %v1388 = vadd.f32 %v1118, %v1292
      %v1389 = vadd.f32 %v1121, %v1295
      %v1390 = vadd.f32 %v1126, %v1300
      %v1391 = vadd.f32 %v1129, %v1303
      %v1392 = vadd.f32 %v1134, %v1308
      %v1393 = vadd.f32 %v1137, %v1311
      %v1394 = vadd.f32 %v1142, %v1316
      %v1395 = vadd.f32 %v1145, %v1319
      %v1396 = vadd.f32 %v1150, %v1324
      %v1397 = vadd.f32 %v1153, %v1327
      %v1398 = vadd.f32 %v1158, %v1332
      %v1399 = vadd.f32 %v1161, %v1335
      %v1400 = vadd.f32 %v1166, %v1340
      %v1401 = vadd.f32 %v1169, %v1343
      %v1402 = vadd.f32 %v1174, %v1348
      %v1403 = vadd.f32 %v1177, %v1351
      %v1404 = vadd.f32 %v1182, %v1356
      %v1405 = vadd.f32 %v1185, %v1359
      %v1406 = vadd.f32 %v1190, %v1364
      %v1407 = vadd.f32 %v1193, %v1367
      %v1408 = vadd.f32 %v1198, %v1372
      %v1409 = vadd.f32 %v1201, %v1375
      %v1411 = vshrl.u32 %v257, 16
      %v1413 = vrot.slane %v1411, 4
      %v1414 = vshll.u32 %v257, 16
      %v1416 = vrot.slane %v1414, 5
      %v1417 = vor.u32 %v1413, %v1416
      %v1418 = vrot.slane %v1417, 4
      %v1420 = vshll.u32 %v258, 16
      %v1422 = vrot.slane %v1420, 5
      %v1423 = vsel %vm263, %v1418, %v1422
      %v1424 = vshrl.u32 %v258, 16
      %v1426 = vrot.slane %v1424, 4
      %v1427 = vor.u32 %v1426, %v1422
      %v1428 = vrot.slane %v1427, 4
      %v1430 = vshll.u32 %v259, 16
      %v1432 = vrot.slane %v1430, 5
      %v1433 = vsel %vm263, %v1428, %v1432
      %s1434 = scalar_lea.vmem %s1, 6
      %v1435 = vld [vmem:[%s1434] sm:$0x3]
      %v1436 = vunpack.c.l.b16 %v1423
      %v1437 = vunpack.c.l.b16 %v1433
      %v1438 = vpack.c.b16 %v1437, %v1436
      %v1440 = vsel %vm698, %v1438, 0
      %v1443 = vsel %vm747, %v1435, 0
      %1445 = vmatprep.subr.bf16.mxu0 0
      %1446 = vmatpush1.bf16.msra.mxu0 %v1443
      %1447 = vmatprep.subr.bf16.mxu0 0
      %1448 = vmatpush1.bf16.msra.mxu0 0
      %1449 = vmatprep.subr.bf16.mxu0 0
      %1450 = vmatpush1.bf16.msra.mxu0 0
      %1451 = vmatprep.subr.bf16.mxu0 0
      %1452 = vmatpush1.bf16.msra.mxu0 0
      %1453 = vmatprep.subr.bf16.mxu0 0
      %1454 = vmatpush1.bf16.msra.mxu0 0
      %1455 = vmatprep.subr.bf16.mxu0 0
      %1456 = vmatpush1.bf16.msra.mxu0 0
      %1457 = vmatprep.subr.bf16.mxu0 0
      %1458 = vmatpush1.bf16.msra.mxu0 0
      %1459 = vmatprep.subr.bf16.mxu0 0
      %1460 = vmatpush1.bf16.msra.mxu0 0
      %1461 = vmatprep.subr.bf16.mxu0 0
      %1462 = vmatpush1.bf16.msra.mxu0 0
      %1463 = vmatprep.subr.bf16.mxu0 0
      %1464 = vmatpush1.bf16.msra.mxu0 0
      %1465 = vmatprep.subr.bf16.mxu0 0
      %1466 = vmatpush1.bf16.msra.mxu0 0
      %1467 = vmatprep.subr.bf16.mxu0 0
      %1468 = vmatpush1.bf16.msra.mxu0 0
      %1469 = vmatprep.subr.bf16.mxu0 0
      %1470 = vmatpush1.bf16.msra.mxu0 0
      %1471 = vmatprep.subr.bf16.mxu0 0
      %1472 = vmatpush1.bf16.msra.mxu0 0
      %1473 = vmatprep.subr.bf16.mxu0 0
      %1474 = vmatpush1.bf16.msra.mxu0 0
      %1475 = vmatprep.subr.bf16.mxu0 0
      %1476 = vmatpush1.bf16.msra.mxu0 0
      %1477 = vmatprep.mubr.bf16.mxu0 0
      %1478 = vmatmul.mubr.bf16.gmra.mrb[0].mxu0 %v703
      %v1479 = vpop.f32.mrb[0].mxu0
      %v1480 = vadd.f32 0.0, %v1479
      %v1481 = vpop.f32.mrb[0].mxu0
      %v1482 = vpop.f32.mrb[0].mxu0
      %v1483 = vadd.f32 0.0, %v1482
      %v1484 = vpop.f32.mrb[0].mxu0
      %1485 = vmatprep.mubr.bf16.mxu0 0
      %1486 = vmatmul.mubr.bf16.gmra.mrb[0].mxu0 %v706
      %v1487 = vpop.f32.mrb[0].mxu0
      %v1488 = vadd.f32 0.0, %v1487
      %v1489 = vpop.f32.mrb[0].mxu0
      %v1490 = vpop.f32.mrb[0].mxu0
      %v1491 = vadd.f32 0.0, %v1490
      %v1492 = vpop.f32.mrb[0].mxu0
      %1493 = vmatprep.mubr.bf16.mxu0 0
      %1494 = vmatmul.mubr.bf16.gmra.mrb[0].mxu0 %v709
      %v1495 = vpop.f32.mrb[0].mxu0
      %v1496 = vadd.f32 0.0, %v1495
      %v1497 = vpop.f32.mrb[0].mxu0
      %v1498 = vpop.f32.mrb[0].mxu0
      %v1499 = vadd.f32 0.0, %v1498
      %v1500 = vpop.f32.mrb[0].mxu0
      %1501 = vmatprep.mubr.bf16.mxu0 0
      %1502 = vmatmul.mubr.bf16.gmra.mrb[0].mxu0 %v712
      %v1503 = vpop.f32.mrb[0].mxu0
      %v1504 = vadd.f32 0.0, %v1503
      %v1505 = vpop.f32.mrb[0].mxu0
      %v1506 = vpop.f32.mrb[0].mxu0
      %v1507 = vadd.f32 0.0, %v1506
      %v1508 = vpop.f32.mrb[0].mxu0
      %1509 = vmatprep.mubr.bf16.mxu0 0
      %1510 = vmatmul.mubr.bf16.gmra.mrb[0].mxu0 %v715
      %v1511 = vpop.f32.mrb[0].mxu0
      %v1512 = vadd.f32 0.0, %v1511
      %v1513 = vpop.f32.mrb[0].mxu0
      %v1514 = vpop.f32.mrb[0].mxu0
      %v1515 = vadd.f32 0.0, %v1514
      %v1516 = vpop.f32.mrb[0].mxu0
      %1517 = vmatprep.mubr.bf16.mxu0 0
      %1518 = vmatmul.mubr.bf16.gmra.mrb[0].mxu0 %v718
      %v1519 = vpop.f32.mrb[0].mxu0
      %v1520 = vadd.f32 0.0, %v1519
      %v1521 = vpop.f32.mrb[0].mxu0
      %v1522 = vpop.f32.mrb[0].mxu0
      %v1523 = vadd.f32 0.0, %v1522
      %v1524 = vpop.f32.mrb[0].mxu0
      %1525 = vmatprep.mubr.bf16.mxu0 0
      %1526 = vmatmul.mubr.bf16.gmra.mrb[0].mxu0 %v721
      %v1527 = vpop.f32.mrb[0].mxu0
      %v1528 = vadd.f32 0.0, %v1527
      %v1529 = vpop.f32.mrb[0].mxu0
      %v1530 = vpop.f32.mrb[0].mxu0
      %v1531 = vadd.f32 0.0, %v1530
      %v1532 = vpop.f32.mrb[0].mxu0
      %1533 = vmatprep.mubr.bf16.mxu0 0
      %1534 = vmatmul.mubr.bf16.gmra.mrb[0].mxu0 %v724
      %v1535 = vpop.f32.mrb[0].mxu0
      %v1536 = vadd.f32 0.0, %v1535
      %v1537 = vpop.f32.mrb[0].mxu0
      %v1538 = vpop.f32.mrb[0].mxu0
      %v1539 = vadd.f32 0.0, %v1538
      %v1540 = vpop.f32.mrb[0].mxu0
      %1541 = vmatprep.mubr.bf16.mxu0 0
      %1542 = vmatmul.mubr.bf16.gmra.mrb[0].mxu0 %v727
      %v1543 = vpop.f32.mrb[0].mxu0
      %v1544 = vadd.f32 0.0, %v1543
      %v1545 = vpop.f32.mrb[0].mxu0
      %v1546 = vpop.f32.mrb[0].mxu0
      %v1547 = vadd.f32 0.0, %v1546
      %v1548 = vpop.f32.mrb[0].mxu0
      %1549 = vmatprep.mubr.bf16.mxu0 0
      %1550 = vmatmul.mubr.bf16.gmra.mrb[0].mxu0 %v730
      %v1551 = vpop.f32.mrb[0].mxu0
      %v1552 = vadd.f32 0.0, %v1551
      %v1553 = vpop.f32.mrb[0].mxu0
      %v1554 = vpop.f32.mrb[0].mxu0
      %v1555 = vadd.f32 0.0, %v1554
      %v1556 = vpop.f32.mrb[0].mxu0
      %1557 = vmatprep.mubr.bf16.mxu0 0
      %1558 = vmatmul.mubr.bf16.gmra.mrb[0].mxu0 %v733
      %v1559 = vpop.f32.mrb[0].mxu0
      %v1560 = vadd.f32 0.0, %v1559
      %v1561 = vpop.f32.mrb[0].mxu0
      %v1562 = vpop.f32.mrb[0].mxu0
      %v1563 = vadd.f32 0.0, %v1562
      %v1564 = vpop.f32.mrb[0].mxu0
      %1565 = vmatprep.mubr.bf16.mxu0 0
      %1566 = vmatmul.mubr.bf16.gmra.mrb[0].mxu0 %v736
      %v1567 = vpop.f32.mrb[0].mxu0
      %v1568 = vadd.f32 0.0, %v1567
      %v1569 = vpop.f32.mrb[0].mxu0
      %v1570 = vpop.f32.mrb[0].mxu0
      %v1571 = vadd.f32 0.0, %v1570
      %v1572 = vpop.f32.mrb[0].mxu0
      %1573 = vmatprep.mubr.bf16.mxu0 0
      %1574 = vmatmul.mubr.bf16.gmra.mrb[0].mxu0 %v739
      %v1575 = vpop.f32.mrb[0].mxu0
      %v1576 = vadd.f32 0.0, %v1575
      %v1577 = vpop.f32.mrb[0].mxu0
      %v1578 = vpop.f32.mrb[0].mxu0
      %v1579 = vadd.f32 0.0, %v1578
      %v1580 = vpop.f32.mrb[0].mxu0
      %1581 = vmatprep.mubr.bf16.mxu0 0
      %1582 = vmatmul.mubr.bf16.gmra.mrb[0].mxu0 %v742
      %v1583 = vpop.f32.mrb[0].mxu0
      %v1584 = vadd.f32 0.0, %v1583
      %v1585 = vpop.f32.mrb[0].mxu0
      %v1586 = vpop.f32.mrb[0].mxu0
      %v1587 = vadd.f32 0.0, %v1586
      %v1588 = vpop.f32.mrb[0].mxu0
      %1589 = vmatprep.mubr.bf16.mxu0 0
      %1590 = vmatmul.mubr.bf16.gmra.mrb[0].mxu0 %v745
      %v1591 = vpop.f32.mrb[0].mxu0
      %v1592 = vadd.f32 0.0, %v1591
      %v1593 = vpop.f32.mrb[0].mxu0
      %v1594 = vpop.f32.mrb[0].mxu0
      %v1595 = vadd.f32 0.0, %v1594
      %v1596 = vpop.f32.mrb[0].mxu0
      %1597 = vmatprep.mubr.bf16.mxu0 0
      %1598 = vmatmul.mubr.bf16.gmra.mrb[0].mxu0 %v1440
      %v1599 = vpop.f32.mrb[0].mxu0
      %v1600 = vadd.f32 0.0, %v1599
      %v1601 = vpop.f32.mrb[0].mxu0
      %v1602 = vpop.f32.mrb[0].mxu0
      %v1603 = vadd.f32 0.0, %v1602
      %v1604 = vpop.f32.mrb[0].mxu0
      %1605 = vdwg.mxu0
      %v1606 = vadd.f32 %v1378, %v1480
      %v1607 = vadd.f32 %v1379, %v1483
      %v1608 = vadd.f32 %v1380, %v1488
      %v1609 = vadd.f32 %v1381, %v1491
      %v1610 = vadd.f32 %v1382, %v1496
      %v1611 = vadd.f32 %v1383, %v1499
      %v1612 = vadd.f32 %v1384, %v1504
      %v1613 = vadd.f32 %v1385, %v1507
      %v1614 = vadd.f32 %v1386, %v1512
      %v1615 = vadd.f32 %v1387, %v1515
      %v1616 = vadd.f32 %v1388, %v1520
      %v1617 = vadd.f32 %v1389, %v1523
      %v1618 = vadd.f32 %v1390, %v1528
      %v1619 = vadd.f32 %v1391, %v1531
      %v1620 = vadd.f32 %v1392, %v1536
      %v1621 = vadd.f32 %v1393, %v1539
      %v1622 = vadd.f32 %v1394, %v1544
      %v1623 = vadd.f32 %v1395, %v1547
      %v1624 = vadd.f32 %v1396, %v1552
      %v1625 = vadd.f32 %v1397, %v1555
      %v1626 = vadd.f32 %v1398, %v1560
      %v1627 = vadd.f32 %v1399, %v1563
      %v1628 = vadd.f32 %v1400, %v1568
      %v1629 = vadd.f32 %v1401, %v1571
      %v1630 = vadd.f32 %v1402, %v1576
      %v1631 = vadd.f32 %v1403, %v1579
      %v1632 = vadd.f32 %v1404, %v1584
      %v1633 = vadd.f32 %v1405, %v1587
      %v1634 = vadd.f32 %v1406, %v1592
      %v1635 = vadd.f32 %v1407, %v1595
      %v1636 = vadd.f32 %v1408, %v1600
      %v1637 = vadd.f32 %v1409, %v1603
      %vm1638 = vcmask 261120
      %v1639 = vsel %vm1638, %v1606, 0.0
      %v1640 = vsel %vm1638, %v1607, 0.0
      %v1641 = vadd.f32 %v1639, %v1640
      %v1642 = vsel %vm1638, %v1608, 0.0
      %v1643 = vadd.f32 %v1641, %v1642
      %v1644 = vsel %vm1638, %v1609, 0.0
      %v1645 = vadd.f32 %v1643, %v1644
      %v1646 = vsel %vm1638, %v1610, 0.0
      %v1647 = vadd.f32 %v1645, %v1646
      %v1648 = vsel %vm1638, %v1611, 0.0
      %v1649 = vadd.f32 %v1647, %v1648
      %v1650 = vsel %vm1638, %v1612, 0.0
      %v1651 = vadd.f32 %v1649, %v1650
      %v1652 = vsel %vm1638, %v1613, 0.0
      %v1653 = vadd.f32 %v1651, %v1652
      %v1654 = vsel %vm1638, %v1614, 0.0
      %v1655 = vadd.f32 %v1653, %v1654
      %v1656 = vsel %vm1638, %v1615, 0.0
      %v1657 = vadd.f32 %v1655, %v1656
      %v1658 = vsel %vm1638, %v1616, 0.0
      %v1659 = vadd.f32 %v1657, %v1658
      %v1660 = vsel %vm1638, %v1617, 0.0
      %v1661 = vadd.f32 %v1659, %v1660
      %v1662 = vsel %vm1638, %v1618, 0.0
      %v1663 = vadd.f32 %v1661, %v1662
      %v1664 = vsel %vm1638, %v1619, 0.0
      %v1665 = vadd.f32 %v1663, %v1664
      %v1666 = vsel %vm1638, %v1620, 0.0
      %v1667 = vadd.f32 %v1665, %v1666
      %v1668 = vsel %vm1638, %v1621, 0.0
      %v1669 = vadd.f32 %v1667, %v1668
      %v1670 = vsel %vm1638, %v1622, 0.0
      %v1671 = vadd.f32 %v1669, %v1670
      %v1672 = vsel %vm1638, %v1623, 0.0
      %v1673 = vadd.f32 %v1671, %v1672
      %v1674 = vsel %vm1638, %v1624, 0.0
      %v1675 = vadd.f32 %v1673, %v1674
      %v1676 = vsel %vm1638, %v1625, 0.0
      %v1677 = vadd.f32 %v1675, %v1676
      %v1678 = vsel %vm1638, %v1626, 0.0
      %v1679 = vadd.f32 %v1677, %v1678
      %v1680 = vsel %vm1638, %v1627, 0.0
      %v1681 = vadd.f32 %v1679, %v1680
      %v1682 = vsel %vm1638, %v1628, 0.0
      %v1683 = vadd.f32 %v1681, %v1682
      %v1684 = vsel %vm1638, %v1629, 0.0
      %v1685 = vadd.f32 %v1683, %v1684
      %v1686 = vsel %vm1638, %v1630, 0.0
      %v1687 = vadd.f32 %v1685, %v1686
      %v1688 = vsel %vm1638, %v1631, 0.0
      %v1689 = vadd.f32 %v1687, %v1688
      %v1690 = vsel %vm1638, %v1632, 0.0
      %v1691 = vadd.f32 %v1689, %v1690
      %v1692 = vsel %vm1638, %v1633, 0.0
      %v1693 = vadd.f32 %v1691, %v1692
      %v1694 = vsel %vm1638, %v1634, 0.0
      %v1695 = vadd.f32 %v1693, %v1694
      %v1696 = vsel %vm1638, %v1635, 0.0
      %v1697 = vadd.f32 %v1695, %v1696
      %v1698 = vsel %vm1638, %v1636, 0.0
      %v1699 = vadd.f32 %v1697, %v1698
      %v1700 = vsel %vm1638, %v1637, 0.0
      %v1701 = vadd.f32 %v1699, %v1700
      %v1702 = vrot.slane %v1701, 4
      %v1703 = vadd.f32 %v1701, %v1702
      %v1704 = vrot.slane %v1703, 2
      %v1705 = vadd.f32 %v1703, %v1704
      %v1706 = vrot.slane %v1705, 1
      %v1707 = vadd.f32 %v1705, %v1706
      %vm1708 = vcmask 253952
      %1709 = vst.msk [vmem:[%s197] sm:$0x1] %vm1708, %v1707
      %v1710 = vmul.f32 %v1606, %v1606
      %v1711 = vmul.f32 %v1607, %v1607
      %v1712 = vmul.f32 %v1608, %v1608
      %v1713 = vmul.f32 %v1609, %v1609
      %v1714 = vmul.f32 %v1610, %v1610
      %v1715 = vmul.f32 %v1611, %v1611
      %v1716 = vmul.f32 %v1612, %v1612
      %v1717 = vmul.f32 %v1613, %v1613
      %v1718 = vmul.f32 %v1614, %v1614
      %v1719 = vmul.f32 %v1615, %v1615
      %v1720 = vmul.f32 %v1616, %v1616
      %v1721 = vmul.f32 %v1617, %v1617
      %v1722 = vmul.f32 %v1618, %v1618
      %v1723 = vmul.f32 %v1619, %v1619
      %v1724 = vmul.f32 %v1620, %v1620
      %v1725 = vmul.f32 %v1621, %v1621
      %v1726 = vmul.f32 %v1622, %v1622
      %v1727 = vmul.f32 %v1623, %v1623
      %v1728 = vmul.f32 %v1624, %v1624
      %v1729 = vmul.f32 %v1625, %v1625
      %v1730 = vmul.f32 %v1626, %v1626
      %v1731 = vmul.f32 %v1627, %v1627
      %v1732 = vmul.f32 %v1628, %v1628
      %v1733 = vmul.f32 %v1629, %v1629
      %v1734 = vmul.f32 %v1630, %v1630
      %v1735 = vmul.f32 %v1631, %v1631
      %v1736 = vmul.f32 %v1632, %v1632
      %v1737 = vmul.f32 %v1633, %v1633
      %v1738 = vmul.f32 %v1634, %v1634
      %v1739 = vmul.f32 %v1635, %v1635
      %v1740 = vmul.f32 %v1636, %v1636
      %v1741 = vmul.f32 %v1637, %v1637
      %v1742 = vsel %vm1638, %v1710, 0.0
      %v1743 = vsel %vm1638, %v1711, 0.0
      %v1744 = vadd.f32 %v1742, %v1743
      %v1745 = vsel %vm1638, %v1712, 0.0
      %v1746 = vadd.f32 %v1744, %v1745
      %v1747 = vsel %vm1638, %v1713, 0.0
      %v1748 = vadd.f32 %v1746, %v1747
      %v1749 = vsel %vm1638, %v1714, 0.0
      %v1750 = vadd.f32 %v1748, %v1749
      %v1751 = vsel %vm1638, %v1715, 0.0
      %v1752 = vadd.f32 %v1750, %v1751
      %v1753 = vsel %vm1638, %v1716, 0.0
      %v1754 = vadd.f32 %v1752, %v1753
      %v1755 = vsel %vm1638, %v1717, 0.0
      %v1756 = vadd.f32 %v1754, %v1755
      %v1757 = vsel %vm1638, %v1718, 0.0
      %v1758 = vadd.f32 %v1756, %v1757
      %v1759 = vsel %vm1638, %v1719, 0.0
      %v1760 = vadd.f32 %v1758, %v1759
      %v1761 = vsel %vm1638, %v1720, 0.0
      %v1762 = vadd.f32 %v1760, %v1761
      %v1763 = vsel %vm1638, %v1721, 0.0
      %v1764 = vadd.f32 %v1762, %v1763
      %v1765 = vsel %vm1638, %v1722, 0.0
      %v1766 = vadd.f32 %v1764, %v1765
      %v1767 = vsel %vm1638, %v1723, 0.0
      %v1768 = vadd.f32 %v1766, %v1767
      %v1769 = vsel %vm1638, %v1724, 0.0
      %v1770 = vadd.f32 %v1768, %v1769
      %v1771 = vsel %vm1638, %v1725, 0.0
      %v1772 = vadd.f32 %v1770, %v1771
      %v1773 = vsel %vm1638, %v1726, 0.0
      %v1774 = vadd.f32 %v1772, %v1773
      %v1775 = vsel %vm1638, %v1727, 0.0
      %v1776 = vadd.f32 %v1774, %v1775
      %v1777 = vsel %vm1638, %v1728, 0.0
      %v1778 = vadd.f32 %v1776, %v1777
      %v1779 = vsel %vm1638, %v1729, 0.0
      %v1780 = vadd.f32 %v1778, %v1779
      %v1781 = vsel %vm1638, %v1730, 0.0
      %v1782 = vadd.f32 %v1780, %v1781
      %v1783 = vsel %vm1638, %v1731, 0.0
      %v1784 = vadd.f32 %v1782, %v1783
      %v1785 = vsel %vm1638, %v1732, 0.0
      %v1786 = vadd.f32 %v1784, %v1785
      %v1787 = vsel %vm1638, %v1733, 0.0
      %v1788 = vadd.f32 %v1786, %v1787
      %v1789 = vsel %vm1638, %v1734, 0.0
      %v1790 = vadd.f32 %v1788, %v1789
      %v1791 = vsel %vm1638, %v1735, 0.0
      %v1792 = vadd.f32 %v1790, %v1791
      %v1793 = vsel %vm1638, %v1736, 0.0
      %v1794 = vadd.f32 %v1792, %v1793
      %v1795 = vsel %vm1638, %v1737, 0.0
      %v1796 = vadd.f32 %v1794, %v1795
      %v1797 = vsel %vm1638, %v1738, 0.0
      %v1798 = vadd.f32 %v1796, %v1797
      %v1799 = vsel %vm1638, %v1739, 0.0
      %v1800 = vadd.f32 %v1798, %v1799
      %v1801 = vsel %vm1638, %v1740, 0.0
      %v1802 = vadd.f32 %v1800, %v1801
      %v1803 = vsel %vm1638, %v1741, 0.0
      %v1804 = vadd.f32 %v1802, %v1803
      %v1805 = vrot.slane %v1804, 4
      %v1806 = vadd.f32 %v1804, %v1805
      %v1807 = vrot.slane %v1806, 2
      %v1808 = vadd.f32 %v1806, %v1807
      %v1809 = vrot.slane %v1808, 1
      %v1810 = vadd.f32 %v1808, %v1809
      %1811 = vst.msk [vmem:[%s203] sm:$0x1] %vm1708, %v1810
      %p1812 = scmp.lt.s32.totalorder %s19, 1
      %s1813 = scalar_select %p1812, %s19, 1
      %p1814 = scmp.lt.s32.totalorder %s20, 0
      %s1815 = scalar_select %p1814, %s20, 0
      %s1816 = sadd.s32 %s1815, %s1813
      %s1817 = scalar_lea.vmem %s2, %s1816
      %p1818 = scmp.lt.s32.totalorder %s19, 1
      %s1819 = scalar_select %p1818, %s19, 1
      %p1820 = scmp.lt.s32.totalorder %s20, 0
      %s1821 = scalar_select %p1820, %s20, 0
      %s1822 = sadd.s32 %s1821, %s1819
      %s1823 = scalar_lea.vmem %s3, %s1822
      // Predicated region
      $region29: #{deconv2d_forward.2} parent=27 // pred_check
        %p1824 = pneg %p94
      $region30: #{deconv2d_forward.2} parent=27 // pred_check_branch
        %1826 = sbr.rel (%p1824) target = $region32
      $region31: #{deconv2d_forward.2} parent=27 // pred_region
        _
      $region32: #{deconv2d_forward.2} parent=27 // pred_fallthru
        _
      // Predicated region
      $region33: #{deconv2d_forward.2} parent=27 // pred_check
        %p1827 = pneg %p122
      $region34: #{deconv2d_forward.2} parent=27 // pred_check_branch
        %1829 = sbr.rel (%p1827) target = $region36
      $region35: #{deconv2d_forward.2} parent=27 // pred_region
        _
      $region36: #{deconv2d_forward.2} parent=27 // pred_fallthru
        _
    $region28: #{deconv2d_forward.2} parent=5 // pred_fallthru
      _
    %p1830 = scmp.le.s32.totalorder 2, %s10
    // Predicated region
    $region37: #{deconv2d_forward.2} parent=5 // pred_check
      %p1831 = pneg %p1830
    $region38: #{deconv2d_forward.2} parent=5 // pred_check_branch
      %1833 = sbr.rel (%p1831) target = $region40
    $region39: #{deconv2d_forward.2} parent=5 // pred_region
      %s1834 = ssub.s32 %s10, 2
      // Predicated region
      $region41: #{deconv2d_forward.2} parent=39 // pred_check
        %p1835 = pneg %p100
      $region42: #{deconv2d_forward.2} parent=39 // pred_check_branch
        %1837 = sbr.rel (%p1835) target = $region44
      $region43: #{deconv2d_forward.2} parent=39 // pred_region
        %p1838 = scmp.lt.s32.totalorder %s21, 1
        %s1839 = scalar_select %p1838, %s21, 1
        %p1840 = scmp.lt.s32.totalorder %s22, 0
        %s1841 = scalar_select %p1840, %s22, 0
        %s1842 = sadd.s32 %s1841, %s1839
        %s1843 = scalar_lea.vmem %s2, %s1842
      $region44: #{deconv2d_forward.2} parent=39 // pred_fallthru
        _
      // Predicated region
      $region45: #{deconv2d_forward.2} parent=39 // pred_check
        %p1844 = pneg %p128
      $region46: #{deconv2d_forward.2} parent=39 // pred_check_branch
        %1846 = sbr.rel (%p1844) target = $region48
      $region47: #{deconv2d_forward.2} parent=39 // pred_region
        %p1847 = scmp.lt.s32.totalorder %s21, 1
        %s1848 = scalar_select %p1847, %s21, 1
        %p1849 = scmp.lt.s32.totalorder %s22, 0
        %s1850 = scalar_select %p1849, %s22, 0
        %s1851 = sadd.s32 %s1850, %s1848
        %s1852 = scalar_lea.vmem %s3, %s1851
      $region48: #{deconv2d_forward.2} parent=39 // pred_fallthru
        _
    $region40: #{deconv2d_forward.2} parent=5 // pred_fallthru
      _
  $region6: #{deconv2d_forward.2} parent=0 // loop_footer
    %s14 = sadd.s32 1, %s10
  $region7: #{deconv2d_forward.2} parent=0 // loop_footer_branch
    %9 = sbr.rel target = $region3
  $region8: #{deconv2d_forward.2} parent=0 // loop_exit
    _

// kernel: deconv2d_forward.3
$region0: #{deconv2d_forward.3}
  #allocation0 [shape = 'u32[]', space=smem, size = 0x4, offset = 0x4, fixed_abs, tag = 'smem constant byte address 0x4 - core index']
  #allocation1 [shape = 'u32[144,128]{1,0:T(1,128)}', space=vmem, size = 0x12000, scoped, tag = 'internal scratch']
  %s0 = inlined_call_operand.vmem [shape: bf16[2,17,17,4], index: 0, kind: input, shape index: {}]
  %s1 = inlined_call_operand.vmem [shape: bf16[4,4,32], index: 1, kind: input, shape index: {}]
  %s2 = inlined_call_operand.vmem [shape: f32[1,32], index: 2, kind: input, shape index: {}]
  %s3 = inlined_call_operand.vmem [shape: f32[1,32], index: 3, kind: input, shape index: {}]
  %s4 = inlined_call_operand.vmem [shape: f32[2,16,16,32], index: 4, kind: output, shape index: {}]
  %s5 = sld [smem:[#allocation0]]
  $region49: #{deconv2d_forward.3} parent=0
    _
  %s7 = ssub.s32 1, %s5
  %s8 = scalar_select 0, %s7, %s5
  loop: start=0, step=1, limit=4
  $region2: #{deconv2d_forward.3} parent=0 // loop_pre_header
    _
  $region3: #{deconv2d_forward.3} parent=0 // loop_header
    %s10 = sphi 0, %s14
    %p11 = scmp.ge.s32.totalorder %s10, 4
    %s17 = sphi 0, %s29
    %s18 = sphi 0, %s25
    %s19 = sphi 0, %s17
    %s20 = sphi 0, %s18
    %s21 = sphi 0, %s19
    %s22 = sphi 0, %s20
    %s32 = sphi 0, %s34
    %s35 = sphi 0, %s32
    %s36 = sphi 0, %s35
    %s52 = sphi 0, %s36
    %s56 = sphi 0, %s56
    %s58 = sphi 0, %s56
    %s59 = sphi 0, %s58
    %s73 = sphi 0, %s59
    %s77 = sphi 0, %s77
    %s79 = sphi 0, %s77
    %s80 = sphi 0, %s79
    %s94 = sphi 0, %s80
    %s98 = sphi 0, %s98
    %s100 = sphi 0, %s98
    %s101 = sphi 0, %s100
    %s115 = sphi 0, %s101
    %s123 = sphi 0, %s125
    %s126 = sphi 0, %s123
    %s127 = sphi 0, %s126
    %s143 = sphi 0, %s127
  $region4: #{deconv2d_forward.3} parent=0 // loop_header_branch
    %13 = sbr.rel (%p11) target = $region8
  $region5: #{deconv2d_forward.3} parent=0 // loop_body
    %s15 = ssub.s32 %s10, 1
    %s16 = ssub.s32 %s10, 2
    %s23 = sadd.s32 1, %s18
    %p24 = scmp.ge.s32.totalorder %s23, 1
    %s25 = scalar_select %p24, 0, %s23
    %s26 = sadd.s32 1, %s17
    %s27 = scalar_select %p24, %s26, %s17
    %p28 = scmp.ge.s32.totalorder %s27, 2
    %s29 = scalar_select %p28, 0, %s27
    %s30 = ssub.s32 %s17, %s29
    %p31 = scmp.eq.s32.totalorder %s30, 0
    %s33 = sadd.s32 %s32, 1
    %s34 = scalar_select %p31, %s32, %s33
    %p37 = pneg %p31
    %p38 = scmp.eq.s32.totalorder %s10, 1
    %p39 = por %p37, %p38
    %p40 = scmp.ne.s32.totalorder %s32, %s35
    %p41 = scmp.eq.s32.totalorder %s10, 0
    %p42 = por %p40, %p41
    %p43 = scmp.ne.s32.totalorder %s32, %s35
    %p44 = scmp.eq.s32.totalorder %s15, 1
    %p45 = por %p43, %p44
    %p46 = scmp.ne.s32.totalorder %s35, %s36
    %p47 = scmp.eq.s32.totalorder %s15, 0
    %p48 = por %p46, %p47
    %p49 = scmp.ne.s32.totalorder %s35, %s36
    %p50 = scmp.eq.s32.totalorder %s16, 1
    %p51 = por %p49, %p50
    %p53 = scmp.ne.s32.totalorder %s36, %s52
    %p54 = scmp.eq.s32.totalorder %s16, 0
    %p55 = por %p53, %p54
    %s57 = sadd.s32 %s56, 1
    %p60 = scmp.eq.s32.totalorder %s10, 1
    %p61 = scmp.ne.s32.totalorder %s56, %s58
    %p62 = scmp.eq.s32.totalorder %s10, 0
    %p63 = por %p61, %p62
    %p64 = scmp.ne.s32.totalorder %s56, %s58
    %p65 = scmp.eq.s32.totalorder %s15, 1
    %p66 = por %p64, %p65
    %p67 = scmp.ne.s32.totalorder %s58, %s59
    %p68 = scmp.eq.s32.totalorder %s15, 0
    %p69 = por %p67, %p68
    %p70 = scmp.ne.s32.totalorder %s58, %s59
    %p71 = scmp.eq.s32.totalorder %s16, 1
    %p72 = por %p70, %p71
    %p74 = scmp.ne.s32.totalorder %s59, %s73
    %p75 = scmp.eq.s32.totalorder %s16, 0
    %p76 = por %p74, %p75
    %s78 = sadd.s32 %s77, 1
    %p81 = scmp.eq.s32.totalorder %s10, 1
    %p82 = scmp.ne.s32.totalorder %s77, %s79
    %p83 = scmp.eq.s32.totalorder %s10, 0
    %p84 = por %p82, %p83
    %p85 = scmp.ne.s32.totalorder %s77, %s79
    %p86 = scmp.eq.s32.totalorder %s15, 1
    %p87 = por %p85, %p86
    %p88 = scmp.ne.s32.totalorder %s79, %s80
    %p89 = scmp.eq.s32.totalorder %s15, 0
    %p90 = por %p88, %p89
    %p91 = scmp.ne.s32.totalorder %s79, %s80
    %p92 = scmp.eq.s32.totalorder %s16, 1
    %p93 = por %p91, %p92
    %p95 = scmp.ne.s32.totalorder %s80, %s94
    %p96 = scmp.eq.s32.totalorder %s16, 0
    %p97 = por %p95, %p96
    %s99 = sadd.s32 %s98, 1
    %p102 = scmp.eq.s32.totalorder %s10, 1
    %p103 = scmp.ne.s32.totalorder %s98, %s100
    %p104 = scmp.eq.s32.totalorder %s10, 0
    %p105 = por %p103, %p104
    %p106 = scmp.ne.s32.totalorder %s98, %s100
    %p107 = scmp.eq.s32.totalorder %s15, 1
    %p108 = por %p106, %p107
    %p109 = scmp.ne.s32.totalorder %s100, %s101
    %p110 = scmp.eq.s32.totalorder %s15, 0
    %p111 = por %p109, %p110
    %p112 = scmp.ne.s32.totalorder %s100, %s101
    %p113 = scmp.eq.s32.totalorder %s16, 1
    %p114 = por %p112, %p113
    %p116 = scmp.ne.s32.totalorder %s101, %s115
    %p117 = scmp.eq.s32.totalorder %s16, 0
    %p118 = por %p116, %p117
    %s119 = ssub.s32 %s17, %s29
    %s120 = ssub.s32 %s18, %s25
    %s121 = sor.u32 %s119, %s120
    %p122 = scmp.eq.s32.totalorder %s121, 0
    %s124 = sadd.s32 %s123, 1
    %s125 = scalar_select %p122, %s123, %s124
    %p128 = pneg %p122
    %p129 = scmp.eq.s32.totalorder %s10, 1
    %p130 = por %p128, %p129
    %p131 = scmp.ne.s32.totalorder %s123, %s126
    %p132 = scmp.eq.s32.totalorder %s10, 0
    %p133 = por %p131, %p132
    %p134 = scmp.ne.s32.totalorder %s123, %s126
    %p135 = scmp.eq.s32.totalorder %s15, 1
    %p136 = por %p134, %p135
    %p137 = scmp.ne.s32.totalorder %s126, %s127
    %p138 = scmp.eq.s32.totalorder %s15, 0
    %p139 = por %p137, %p138
    %p140 = scmp.ne.s32.totalorder %s126, %s127
    %p141 = scmp.eq.s32.totalorder %s16, 1
    %p142 = por %p140, %p141
    %p144 = scmp.ne.s32.totalorder %s127, %s143
    %p145 = scmp.eq.s32.totalorder %s16, 0
    %p146 = por %p144, %p145
    %p147 = scmp.le.s32.totalorder 1, %s10
    %p148 = scmp.lt.s32.totalorder %s10, 3
    %p149 = pnand %p147, %p148
    %p150 = pneg %p149
    // Predicated region
    $region9: #{deconv2d_forward.3} parent=5 // pred_check
      _
    $region10: #{deconv2d_forward.3} parent=5 // pred_check_branch
      %152 = sbr.rel (%p149) target = $region12
    $region11: #{deconv2d_forward.3} parent=5 // pred_region
      %s153 = ssub.s32 %s10, 1
      // Predicated region
      $region13: #{deconv2d_forward.3} parent=11 // pred_check
        %p154 = pneg %p69
      $region14: #{deconv2d_forward.3} parent=11 // pred_check_branch
        %156 = sbr.rel (%p154) target = $region16
      $region15: #{deconv2d_forward.3} parent=11 // pred_region
        _
      $region16: #{deconv2d_forward.3} parent=11 // pred_fallthru
        _
      // Predicated region
      $region17: #{deconv2d_forward.3} parent=11 // pred_check
        %p157 = pneg %p90
      $region18: #{deconv2d_forward.3} parent=11 // pred_check_branch
        %159 = sbr.rel (%p157) target = $region20
      $region19: #{deconv2d_forward.3} parent=11 // pred_region
        _
      $region20: #{deconv2d_forward.3} parent=11 // pred_fallthru
        _
      // Predicated region
      $region21: #{deconv2d_forward.3} parent=11 // pred_check
        %p160 = pneg %p111
      $region22: #{deconv2d_forward.3} parent=11 // pred_check_branch
        %162 = sbr.rel (%p160) target = $region24
      $region23: #{deconv2d_forward.3} parent=11 // pred_region
        _
      $region24: #{deconv2d_forward.3} parent=11 // pred_fallthru
        _
    $region12: #{deconv2d_forward.3} parent=5 // pred_fallthru
      _
    %p163 = scmp.lt.s32.totalorder %s10, 2
    // Predicated region
    $region25: #{deconv2d_forward.3} parent=5 // pred_check
      %p164 = pneg %p163
    $region26: #{deconv2d_forward.3} parent=5 // pred_check_branch
      %166 = sbr.rel (%p164) target = $region28
    $region27: #{deconv2d_forward.3} parent=5 // pred_region
      // Predicated region
      $region29: #{deconv2d_forward.3} parent=27 // pred_check
        %p167 = pneg %p42
      $region30: #{deconv2d_forward.3} parent=27 // pred_check_branch
        %169 = sbr.rel (%p167) target = $region32
      $region31: #{deconv2d_forward.3} parent=27 // pred_region
        %p170 = scmp.lt.s32.totalorder %s17, 1
        %s171 = scalar_select %p170, %s17, 1
        %s172 = smul.addr %s171, 51
        %s173 = smul.addr %s172, 4
        %s174 = scalar_lea.vmem %s0, %s173
      $region32: #{deconv2d_forward.3} parent=27 // pred_fallthru
        _
    $region28: #{deconv2d_forward.3} parent=5 // pred_fallthru
      _
    %p175 = scmp.le.s32.totalorder 1, %s10
    %p176 = scmp.lt.s32.totalorder %s10, 3
    %p177 = pnand %p175, %p176
    %p178 = pneg %p177
    // Predicated region
    $region33: #{deconv2d_forward.3} parent=5 // pred_check
      _
    $region34: #{deconv2d_forward.3} parent=5 // pred_check_branch
      %180 = sbr.rel (%p177) target = $region36
    $region35: #{deconv2d_forward.3} parent=5 // pred_region
      %s181 = ssub.s32 %s10, 1
      %p182 = scmp.lt.s32.totalorder %s19, 1
      %s183 = scalar_select %p182, %s19, 1
      %s184 = smul.addr %s183, 51
      %s185 = smul.addr %s184, 4
      %s186 = scalar_lea.vmem %s0, %s185
      %p187 = pneg %p48
      %p188 = pneg %p45
      %p189 = pneg %p69
      %p190 = pneg %p66
      %p191 = pneg %p90
      %p192 = pneg %p87
      %p193 = pneg %p111
      %p194 = pneg %p108
      %p195 = pneg %p139
      %p196 = pneg %p136
      %s197 = smul.u32 16, %s20
      %p198 = scmp.lt.s32.totalorder %s19, 1
      %s199 = scalar_select %p198, %s19, 1
      %p200 = scmp.lt.s32.totalorder %s197, 15
      %s201 = scalar_select %p200, %s197, 15
      %s202 = smul.addr %s201, 2
      %s203 = smul.addr %s199, 32
      %s204 = sadd.s32 %s202, %s203
      %s205 = smul.addr %s204, 8
      %s206 = scalar_lea.vmem %s4, %s205
      %p207 = scmp.lt.s32.totalorder %s19, 1
      %s208 = scalar_select %p207, %s19, 1
      %s209 = smul.addr %s208, 51
      %s210 = smul.addr %s209, 4
      %s211 = scalar_lea.vmem %s0, %s210
      %s212 = smul.u32 16, %s20
      %p213 = scmp.lt.s32.totalorder %s19, 1
      %s214 = scalar_select %p213, %s19, 1
      %p215 = scmp.lt.s32.totalorder %s212, 15
      %s216 = scalar_select %p215, %s212, 15
      %s217 = smul.addr %s216, 2
      %s218 = smul.addr %s214, 32
      %s219 = sadd.s32 %s217, %s218
      %s220 = smul.addr %s219, 8
      %s221 = scalar_lea.vmem %s4, %s220
      %s222 = smul.u32 16, %s20
      %s224 = smul.u32 %s20, 16
      %s225 = smul.u32 %s224, 3
      %s226 = smul.addr %s225, 4
      %s227 = scalar_lea.vmem %s211, %s226
      %v228 = vld [vmem:[%s227] sm:$0xf]
      %v229 = vld [vmem:[%s227 + $0x4] sm:$0xf]
      %v230 = vld [vmem:[%s227 + $0x8] sm:$0x1]
      %v231 = vld [vmem:[%s227 + $0xc] sm:$0xf]
      %v232 = vld [vmem:[%s227 + $0x10] sm:$0xf]
      %v233 = vld [vmem:[%s227 + $0x14] sm:$0x1]
      %v234 = vld [vmem:[%s227 + $0x18] sm:$0xf]
      %v235 = vld [vmem:[%s227 + $0x1c] sm:$0xf]
      %v236 = vld [vmem:[%s227 + $0x20] sm:$0x1]
      %v237 = vld [vmem:[%s227 + $0x24] sm:$0xf]
      %v238 = vld [vmem:[%s227 + $0x28] sm:$0xf]
      %v239 = vld [vmem:[%s227 + $0x2c] sm:$0x1]
      %v240 = vld [vmem:[%s227 + $0x30] sm:$0xf]
      %v241 = vld [vmem:[%s227 + $0x34] sm:$0xf]
      %v242 = vld [vmem:[%s227 + $0x38] sm:$0x1]
      %v243 = vld [vmem:[%s227 + $0x3c] sm:$0xf]
      %v244 = vld [vmem:[%s227 + $0x40] sm:$0xf]
      %v245 = vld [vmem:[%s227 + $0x44] sm:$0x1]
      %v246 = vld [vmem:[%s227 + $0x48] sm:$0xf]
      %v247 = vld [vmem:[%s227 + $0x4c] sm:$0xf]
      %v248 = vld [vmem:[%s227 + $0x50] sm:$0x1]
      %v249 = vld [vmem:[%s227 + $0x54] sm:$0xf]
      %v250 = vld [vmem:[%s227 + $0x58] sm:$0xf]
      %v251 = vld [vmem:[%s227 + $0x5c] sm:$0x1]
      %v252 = vld [vmem:[%s227 + $0x60] sm:$0xf]
      %v253 = vld [vmem:[%s227 + $0x64] sm:$0xf]
      %v254 = vld [vmem:[%s227 + $0x68] sm:$0x1]
      %v255 = vld [vmem:[%s227 + $0x6c] sm:$0xf]
      %v256 = vld [vmem:[%s227 + $0x70] sm:$0xf]
      %v257 = vld [vmem:[%s227 + $0x74] sm:$0x1]
      %v258 = vld [vmem:[%s227 + $0x78] sm:$0xf]
      %v259 = vld [vmem:[%s227 + $0x7c] sm:$0xf]
      %v260 = vld [vmem:[%s227 + $0x80] sm:$0x1]
      %v261 = vld [vmem:[%s227 + $0x84] sm:$0xf]
      %v262 = vld [vmem:[%s227 + $0x88] sm:$0xf]
      %v263 = vld [vmem:[%s227 + $0x8c] sm:$0x1]
      %v264 = vld [vmem:[%s227 + $0x90] sm:$0xf]
      %v265 = vld [vmem:[%s227 + $0x94] sm:$0xf]
      %v266 = vld [vmem:[%s227 + $0x98] sm:$0x1]
      %v267 = vld [vmem:[%s227 + $0x9c] sm:$0xf]
      %v268 = vld [vmem:[%s227 + $0xa0] sm:$0xf]
      %v269 = vld [vmem:[%s227 + $0xa4] sm:$0x1]
      %v270 = vld [vmem:[%s227 + $0xa8] sm:$0xf]
      %v271 = vld [vmem:[%s227 + $0xac] sm:$0xf]
      %v272 = vld [vmem:[%s227 + $0xb0] sm:$0x1]
      %v273 = vld [vmem:[%s227 + $0xb4] sm:$0xf]
      %v274 = vld [vmem:[%s227 + $0xb8] sm:$0xf]
      %v275 = vld [vmem:[%s227 + $0xbc] sm:$0x1]
      %v276 = vld [vmem:[%s227 + $0xc0] sm:$0xf]
      %v277 = vld [vmem:[%s227 + $0xc4] sm:$0xf]
      %v278 = vld [vmem:[%s227 + $0xc8] sm:$0x1]
      %v279 = vld [vmem:[%s1] sm:$0x3]
      %vm280 = vsmask.f32 3328
      %vm281 = vsmask.f32 7440
      %vm282 = vmor %vm280, %vm281
      %v284 = vshrl.u32 %v228, 16
      %v286 = vrot.slane %v284, 4
      %v287 = vshll.u32 %v228, 16
      %v289 = vrot.slane %v287, 5
      %v290 = vor.u32 %v286, %v289
      %v291 = vrot.slane %v290, 4
      %v293 = vshll.u32 %v229, 16
      %v295 = vrot.slane %v293, 5
      %v296 = vsel %vm282, %v291, %v295
      %v297 = vshrl.u32 %v229, 16
      %v299 = vrot.slane %v297, 4
      %v300 = vor.u32 %v299, %v295
      %v301 = vrot.slane %v300, 4
      %v303 = vshll.u32 %v230, 16
      %v305 = vrot.slane %v303, 5
      %v306 = vsel %vm282, %v301, %v305
      %v308 = vshrl.u32 %v231, 16
      %v310 = vrot.slane %v308, 4
      %v311 = vshll.u32 %v231, 16
      %v313 = vrot.slane %v311, 5
      %v314 = vor.u32 %v310, %v313
      %v315 = vrot.slane %v314, 4
      %v317 = vshll.u32 %v232, 16
      %v319 = vrot.slane %v317, 5
      %v320 = vsel %vm282, %v315, %v319
      %v321 = vshrl.u32 %v232, 16
      %v323 = vrot.slane %v321, 4
      %v324 = vor.u32 %v323, %v319
      %v325 = vrot.slane %v324, 4
      %v327 = vshll.u32 %v233, 16
      %v329 = vrot.slane %v327, 5
      %v330 = vsel %vm282, %v325, %v329
      %v332 = vshrl.u32 %v234, 16
      %v334 = vrot.slane %v332, 4
      %v335 = vshll.u32 %v234, 16
      %v337 = vrot.slane %v335, 5
      %v338 = vor.u32 %v334, %v337
      %v339 = vrot.slane %v338, 4
      %v341 = vshll.u32 %v235, 16
      %v343 = vrot.slane %v341, 5
      %v344 = vsel %vm282, %v339, %v343
      %v345 = vshrl.u32 %v235, 16
      %v347 = vrot.slane %v345, 4
      %v348 = vor.u32 %v347, %v343
      %v349 = vrot.slane %v348, 4
      %v351 = vshll.u32 %v236, 16
      %v353 = vrot.slane %v351, 5
      %v354 = vsel %vm282, %v349, %v353
      %v356 = vshrl.u32 %v237, 16
      %v358 = vrot.slane %v356, 4
      %v359 = vshll.u32 %v237, 16
      %v361 = vrot.slane %v359, 5
      %v362 = vor.u32 %v358, %v361
      %v363 = vrot.slane %v362, 4
      %v365 = vshll.u32 %v238, 16
      %v367 = vrot.slane %v365, 5
      %v368 = vsel %vm282, %v363, %v367
      %v369 = vshrl.u32 %v238, 16
      %v371 = vrot.slane %v369, 4
      %v372 = vor.u32 %v371, %v367
      %v373 = vrot.slane %v372, 4
      %v375 = vshll.u32 %v239, 16
      %v377 = vrot.slane %v375, 5
      %v378 = vsel %vm282, %v373, %v377
      %v380 = vshrl.u32 %v240, 16
      %v382 = vrot.slane %v380, 4
      %v383 = vshll.u32 %v240, 16
      %v385 = vrot.slane %v383, 5
      %v386 = vor.u32 %v382, %v385
      %v387 = vrot.slane %v386, 4
      %v389 = vshll.u32 %v241, 16
      %v391 = vrot.slane %v389, 5
      %v392 = vsel %vm282, %v387, %v391
      %v393 = vshrl.u32 %v241, 16
      %v395 = vrot.slane %v393, 4
      %v396 = vor.u32 %v395, %v391
      %v397 = vrot.slane %v396, 4
      %v399 = vshll.u32 %v242, 16
      %v401 = vrot.slane %v399, 5
      %v402 = vsel %vm282, %v397, %v401
      %v404 = vshrl.u32 %v243, 16
      %v406 = vrot.slane %v404, 4
      %v407 = vshll.u32 %v243, 16
      %v409 = vrot.slane %v407, 5
      %v410 = vor.u32 %v406, %v409
      %v411 = vrot.slane %v410, 4
      %v413 = vshll.u32 %v244, 16
      %v415 = vrot.slane %v413, 5
      %v416 = vsel %vm282, %v411, %v415
      %v417 = vshrl.u32 %v244, 16
      %v419 = vrot.slane %v417, 4
      %v420 = vor.u32 %v419, %v415
      %v421 = vrot.slane %v420, 4
      %v423 = vshll.u32 %v245, 16
      %v425 = vrot.slane %v423, 5
      %v426 = vsel %vm282, %v421, %v425
      %v428 = vshrl.u32 %v246, 16
      %v430 = vrot.slane %v428, 4
      %v431 = vshll.u32 %v246, 16
      %v433 = vrot.slane %v431, 5
      %v434 = vor.u32 %v430, %v433
      %v435 = vrot.slane %v434, 4
      %v437 = vshll.u32 %v247, 16
      %v439 = vrot.slane %v437, 5
      %v440 = vsel %vm282, %v435, %v439
      %v441 = vshrl.u32 %v247, 16
      %v443 = vrot.slane %v441, 4
      %v444 = vor.u32 %v443, %v439
      %v445 = vrot.slane %v444, 4
      %v447 = vshll.u32 %v248, 16
      %v449 = vrot.slane %v447, 5
      %v450 = vsel %vm282, %v445, %v449
      %v452 = vshrl.u32 %v249, 16
      %v454 = vrot.slane %v452, 4
      %v455 = vshll.u32 %v249, 16
      %v457 = vrot.slane %v455, 5
      %v458 = vor.u32 %v454, %v457
      %v459 = vrot.slane %v458, 4
      %v461 = vshll.u32 %v250, 16
      %v463 = vrot.slane %v461, 5
      %v464 = vsel %vm282, %v459, %v463
      %v465 = vshrl.u32 %v250, 16
      %v467 = vrot.slane %v465, 4
      %v468 = vor.u32 %v467, %v463
      %v469 = vrot.slane %v468, 4
      %v471 = vshll.u32 %v251, 16
      %v473 = vrot.slane %v471, 5
      %v474 = vsel %vm282, %v469, %v473
      %v476 = vshrl.u32 %v252, 16
      %v478 = vrot.slane %v476, 4
      %v479 = vshll.u32 %v252, 16
      %v481 = vrot.slane %v479, 5
      %v482 = vor.u32 %v478, %v481
      %v483 = vrot.slane %v482, 4
      %v485 = vshll.u32 %v253, 16
      %v487 = vrot.slane %v485, 5
      %v488 = vsel %vm282, %v483, %v487
      %v489 = vshrl.u32 %v253, 16
      %v491 = vrot.slane %v489, 4
      %v492 = vor.u32 %v491, %v487
      %v493 = vrot.slane %v492, 4
      %v495 = vshll.u32 %v254, 16
      %v497 = vrot.slane %v495, 5
      %v498 = vsel %vm282, %v493, %v497
      %v500 = vshrl.u32 %v255, 16
      %v502 = vrot.slane %v500, 4
      %v503 = vshll.u32 %v255, 16
      %v505 = vrot.slane %v503, 5
      %v506 = vor.u32 %v502, %v505
      %v507 = vrot.slane %v506, 4
      %v509 = vshll.u32 %v256, 16
      %v511 = vrot.slane %v509, 5
      %v512 = vsel %vm282, %v507, %v511
      %v513 = vshrl.u32 %v256, 16
      %v515 = vrot.slane %v513, 4
      %v516 = vor.u32 %v515, %v511
      %v517 = vrot.slane %v516, 4
      %v519 = vshll.u32 %v257, 16
      %v521 = vrot.slane %v519, 5
      %v522 = vsel %vm282, %v517, %v521
      %v524 = vshrl.u32 %v258, 16
      %v526 = vrot.slane %v524, 4
      %v527 = vshll.u32 %v258, 16
      %v529 = vrot.slane %v527, 5
      %v530 = vor.u32 %v526, %v529
      %v531 = vrot.slane %v530, 4
      %v533 = vshll.u32 %v259, 16
      %v535 = vrot.slane %v533, 5
      %v536 = vsel %vm282, %v531, %v535
      %v537 = vshrl.u32 %v259, 16
      %v539 = vrot.slane %v537, 4
      %v540 = vor.u32 %v539, %v535
      %v541 = vrot.slane %v540, 4
      %v543 = vshll.u32 %v260, 16
      %v545 = vrot.slane %v543, 5
      %v546 = vsel %vm282, %v541, %v545
      %v548 = vshrl.u32 %v261, 16
      %v550 = vrot.slane %v548, 4
      %v551 = vshll.u32 %v261, 16
      %v553 = vrot.slane %v551, 5
      %v554 = vor.u32 %v550, %v553
      %v555 = vrot.slane %v554, 4
      %v557 = vshll.u32 %v262, 16
      %v559 = vrot.slane %v557, 5
      %v560 = vsel %vm282, %v555, %v559
      %v561 = vshrl.u32 %v262, 16
      %v563 = vrot.slane %v561, 4
      %v564 = vor.u32 %v563, %v559
      %v565 = vrot.slane %v564, 4
      %v567 = vshll.u32 %v263, 16
      %v569 = vrot.slane %v567, 5
      %v570 = vsel %vm282, %v565, %v569
      %v572 = vshrl.u32 %v264, 16
      %v574 = vrot.slane %v572, 4
      %v575 = vshll.u32 %v264, 16
      %v577 = vrot.slane %v575, 5
      %v578 = vor.u32 %v574, %v577
      %v579 = vrot.slane %v578, 4
      %v581 = vshll.u32 %v265, 16
      %v583 = vrot.slane %v581, 5
      %v584 = vsel %vm282, %v579, %v583
      %v585 = vshrl.u32 %v265, 16
      %v587 = vrot.slane %v585, 4
      %v588 = vor.u32 %v587, %v583
      %v589 = vrot.slane %v588, 4
      %v591 = vshll.u32 %v266, 16
      %v593 = vrot.slane %v591, 5
      %v594 = vsel %vm282, %v589, %v593
      %v596 = vshrl.u32 %v267, 16
      %v598 = vrot.slane %v596, 4
      %v599 = vshll.u32 %v267, 16
      %v601 = vrot.slane %v599, 5
      %v602 = vor.u32 %v598, %v601
      %v603 = vrot.slane %v602, 4
      %v605 = vshll.u32 %v268, 16
      %v607 = vrot.slane %v605, 5
      %v608 = vsel %vm282, %v603, %v607
      %v609 = vshrl.u32 %v268, 16
      %v611 = vrot.slane %v609, 4
      %v612 = vor.u32 %v611, %v607
      %v613 = vrot.slane %v612, 4
      %v615 = vshll.u32 %v269, 16
      %v617 = vrot.slane %v615, 5
      %v618 = vsel %vm282, %v613, %v617
      %v620 = vshrl.u32 %v270, 16
      %v622 = vrot.slane %v620, 4
      %v623 = vshll.u32 %v270, 16
      %v625 = vrot.slane %v623, 5
      %v626 = vor.u32 %v622, %v625
      %v627 = vrot.slane %v626, 4
      %v629 = vshll.u32 %v271, 16
      %v631 = vrot.slane %v629, 5
      %v632 = vsel %vm282, %v627, %v631
      %v633 = vshrl.u32 %v271, 16
      %v635 = vrot.slane %v633, 4
      %v636 = vor.u32 %v635, %v631
      %v637 = vrot.slane %v636, 4
      %v639 = vshll.u32 %v272, 16
      %v641 = vrot.slane %v639, 5
      %v642 = vsel %vm282, %v637, %v641
      %v644 = vshrl.u32 %v273, 16
      %v646 = vrot.slane %v644, 4
      %v647 = vshll.u32 %v273, 16
      %v649 = vrot.slane %v647, 5
      %v650 = vor.u32 %v646, %v649
      %v651 = vrot.slane %v650, 4
      %v653 = vshll.u32 %v274, 16
      %v655 = vrot.slane %v653, 5
      %v656 = vsel %vm282, %v651, %v655
      %v657 = vshrl.u32 %v274, 16
      %v659 = vrot.slane %v657, 4
      %v660 = vor.u32 %v659, %v655
      %v661 = vrot.slane %v660, 4
      %v663 = vshll.u32 %v275, 16
      %v665 = vrot.slane %v663, 5
      %v666 = vsel %vm282, %v661, %v665
      %s667 = scalar_lea.vmem %s1, 2
      %v668 = vld [vmem:[%s667] sm:$0x3]
      %v669 = vunpack.c.l.b16 %v296
      %v670 = vunpack.c.l.b16 %v306
      %v671 = vunpack.c.l.b16 %v320
      %v672 = vunpack.c.l.b16 %v330
      %v673 = vunpack.c.l.b16 %v344
      %v674 = vunpack.c.l.b16 %v354
      %v675 = vunpack.c.l.b16 %v368
      %v676 = vunpack.c.l.b16 %v378
      %v677 = vunpack.c.l.b16 %v392
      %v678 = vunpack.c.l.b16 %v402
      %v679 = vunpack.c.l.b16 %v416
      %v680 = vunpack.c.l.b16 %v426
      %v681 = vunpack.c.l.b16 %v440
      %v682 = vunpack.c.l.b16 %v450
      %v683 = vunpack.c.l.b16 %v464
      %v684 = vunpack.c.l.b16 %v474
      %v685 = vunpack.c.l.b16 %v488
      %v686 = vunpack.c.l.b16 %v498
      %v687 = vunpack.c.l.b16 %v512
      %v688 = vunpack.c.l.b16 %v522
      %v689 = vunpack.c.l.b16 %v536
      %v690 = vunpack.c.l.b16 %v546
      %v691 = vunpack.c.l.b16 %v560
      %v692 = vunpack.c.l.b16 %v570
      %v693 = vunpack.c.l.b16 %v584
      %v694 = vunpack.c.l.b16 %v594
      %v695 = vunpack.c.l.b16 %v608
      %v696 = vunpack.c.l.b16 %v618
      %v697 = vunpack.c.l.b16 %v632
      %v698 = vunpack.c.l.b16 %v642
      %v699 = vunpack.c.l.b16 %v656
      %v700 = vunpack.c.l.b16 %v666
      %v701 = vpack.c.b16 %v670, %v669
      %v702 = vpack.c.b16 %v672, %v671
      %v703 = vpack.c.b16 %v674, %v673
      %v704 = vpack.c.b16 %v676, %v675
      %v705 = vpack.c.b16 %v678, %v677
      %v706 = vpack.c.b16 %v680, %v679
      %v707 = vpack.c.b16 %v682, %v681
      %v708 = vpack.c.b16 %v684, %v683
      %v709 = vpack.c.b16 %v686, %v685
      %v710 = vpack.c.b16 %v688, %v687
      %v711 = vpack.c.b16 %v690, %v689
      %v712 = vpack.c.b16 %v692, %v691
      %v713 = vpack.c.b16 %v694, %v693
      %v714 = vpack.c.b16 %v696, %v695
      %v715 = vpack.c.b16 %v698, %v697
      %v716 = vpack.c.b16 %v700, %v699
      %vm717 = vcmask 31744
      %v719 = vsel %vm717, %v701, 0
      %v722 = vsel %vm717, %v702, 0
      %v725 = vsel %vm717, %v703, 0
      %v728 = vsel %vm717, %v704, 0
      %v731 = vsel %vm717, %v705, 0
      %v734 = vsel %vm717, %v706, 0
      %v737 = vsel %vm717, %v707, 0
      %v740 = vsel %vm717, %v708, 0
      %v743 = vsel %vm717, %v709, 0
      %v746 = vsel %vm717, %v710, 0
      %v749 = vsel %vm717, %v711, 0
      %v752 = vsel %vm717, %v712, 0
      %v755 = vsel %vm717, %v713, 0
      %v758 = vsel %vm717, %v714, 0
      %v761 = vsel %vm717, %v715, 0
      %v764 = vsel %vm717, %v716, 0
      %vm766 = vcmask 1041408
      %v768 = vsel %vm766, %v668, 0
      %770 = vmatprep.subr.bf16.mxu0 0
      %771 = vmatpush1.bf16.msra.mxu0 %v768
      %772 = vmatprep.subr.bf16.mxu0 0
      %773 = vmatpush1.bf16.msra.mxu0 0
      %774 = vmatprep.subr.bf16.mxu0 0
      %775 = vmatpush1.bf16.msra.mxu0 0
      %776 = vmatprep.subr.bf16.mxu0 0
      %777 = vmatpush1.bf16.msra.mxu0 0
      %778 = vmatprep.subr.bf16.mxu0 0
      %779 = vmatpush1.bf16.msra.mxu0 0
      %780 = vmatprep.subr.bf16.mxu0 0
      %781 = vmatpush1.bf16.msra.mxu0 0
      %782 = vmatprep.subr.bf16.mxu0 0
      %783 = vmatpush1.bf16.msra.mxu0 0
      %784 = vmatprep.subr.bf16.mxu0 0
      %785 = vmatpush1.bf16.msra.mxu0 0
      %786 = vmatprep.subr.bf16.mxu0 0
      %787 = vmatpush1.bf16.msra.mxu0 0
      %788 = vmatprep.subr.bf16.mxu0 0
      %789 = vmatpush1.bf16.msra.mxu0 0
      %790 = vmatprep.subr.bf16.mxu0 0
      %791 = vmatpush1.bf16.msra.mxu0 0
      %792 = vmatprep.subr.bf16.mxu0 0
      %793 = vmatpush1.bf16.msra.mxu0 0
      %794 = vmatprep.subr.bf16.mxu0 0
      %795 = vmatpush1.bf16.msra.mxu0 0
      %796 = vmatprep.subr.bf16.mxu0 0
      %797 = vmatpush1.bf16.msra.mxu0 0
      %798 = vmatprep.subr.bf16.mxu0 0
      %799 = vmatpush1.bf16.msra.mxu0 0
      %800 = vmatprep.subr.bf16.mxu0 0
      %801 = vmatpush1.bf16.msra.mxu0 0
      %802 = vmatprep.mubr.bf16.mxu0 0
      %803 = vmatmul.mubr.bf16.gmra.mrb[0].mxu0 %v719
      %v804 = vpop.f32.mrb[0].mxu0
      %v805 = vadd.f32 0.0, %v804
      %v806 = vpop.f32.mrb[0].mxu0
      %v807 = vpop.f32.mrb[0].mxu0
      %v808 = vadd.f32 0.0, %v807
      %v809 = vpop.f32.mrb[0].mxu0
      %810 = vmatprep.mubr.bf16.mxu0 0
      %811 = vmatmul.mubr.bf16.gmra.mrb[0].mxu0 %v722
      %v812 = vpop.f32.mrb[0].mxu0
      %v813 = vadd.f32 0.0, %v812
      %v814 = vpop.f32.mrb[0].mxu0
      %v815 = vpop.f32.mrb[0].mxu0
      %v816 = vadd.f32 0.0, %v815
      %v817 = vpop.f32.mrb[0].mxu0
      %818 = vmatprep.mubr.bf16.mxu0 0
      %819 = vmatmul.mubr.bf16.gmra.mrb[0].mxu0 %v725
      %v820 = vpop.f32.mrb[0].mxu0
      %v821 = vadd.f32 0.0, %v820
      %v822 = vpop.f32.mrb[0].mxu0
      %v823 = vpop.f32.mrb[0].mxu0
      %v824 = vadd.f32 0.0, %v823
      %v825 = vpop.f32.mrb[0].mxu0
      %826 = vmatprep.mubr.bf16.mxu0 0
      %827 = vmatmul.mubr.bf16.gmra.mrb[0].mxu0 %v728
      %v828 = vpop.f32.mrb[0].mxu0
      %v829 = vadd.f32 0.0, %v828
      %v830 = vpop.f32.mrb[0].mxu0
      %v831 = vpop.f32.mrb[0].mxu0
      %v832 = vadd.f32 0.0, %v831
      %v833 = vpop.f32.mrb[0].mxu0
      %834 = vmatprep.mubr.bf16.mxu0 0
      %835 = vmatmul.mubr.bf16.gmra.mrb[0].mxu0 %v731
      %v836 = vpop.f32.mrb[0].mxu0
      %v837 = vadd.f32 0.0, %v836
      %v838 = vpop.f32.mrb[0].mxu0
      %v839 = vpop.f32.mrb[0].mxu0
      %v840 = vadd.f32 0.0, %v839
      %v841 = vpop.f32.mrb[0].mxu0
      %842 = vmatprep.mubr.bf16.mxu0 0
      %843 = vmatmul.mubr.bf16.gmra.mrb[0].mxu0 %v734
      %v844 = vpop.f32.mrb[0].mxu0
      %v845 = vadd.f32 0.0, %v844
      %v846 = vpop.f32.mrb[0].mxu0
      %v847 = vpop.f32.mrb[0].mxu0
      %v848 = vadd.f32 0.0, %v847
      %v849 = vpop.f32.mrb[0].mxu0
      %850 = vmatprep.mubr.bf16.mxu0 0
      %851 = vmatmul.mubr.bf16.gmra.mrb[0].mxu0 %v737
      %v852 = vpop.f32.mrb[0].mxu0
      %v853 = vadd.f32 0.0, %v852
      %v854 = vpop.f32.mrb[0].mxu0
      %v855 = vpop.f32.mrb[0].mxu0
      %v856 = vadd.f32 0.0, %v855
      %v857 = vpop.f32.mrb[0].mxu0
      %858 = vmatprep.mubr.bf16.mxu0 0
      %859 = vmatmul.mubr.bf16.gmra.mrb[0].mxu0 %v740
      %v860 = vpop.f32.mrb[0].mxu0
      %v861 = vadd.f32 0.0, %v860
      %v862 = vpop.f32.mrb[0].mxu0
      %v863 = vpop.f32.mrb[0].mxu0
      %v864 = vadd.f32 0.0, %v863
      %v865 = vpop.f32.mrb[0].mxu0
      %866 = vmatprep.mubr.bf16.mxu0 0
      %867 = vmatmul.mubr.bf16.gmra.mrb[0].mxu0 %v743
      %v868 = vpop.f32.mrb[0].mxu0
      %v869 = vadd.f32 0.0, %v868
      %v870 = vpop.f32.mrb[0].mxu0
      %v871 = vpop.f32.mrb[0].mxu0
      %v872 = vadd.f32 0.0, %v871
      %v873 = vpop.f32.mrb[0].mxu0
      %874 = vmatprep.mubr.bf16.mxu0 0
      %875 = vmatmul.mubr.bf16.gmra.mrb[0].mxu0 %v746
      %v876 = vpop.f32.mrb[0].mxu0
      %v877 = vadd.f32 0.0, %v876
      %v878 = vpop.f32.mrb[0].mxu0
      %v879 = vpop.f32.mrb[0].mxu0
      %v880 = vadd.f32 0.0, %v879
      %v881 = vpop.f32.mrb[0].mxu0
      %882 = vmatprep.mubr.bf16.mxu0 0
      %883 = vmatmul.mubr.bf16.gmra.mrb[0].mxu0 %v749
      %v884 = vpop.f32.mrb[0].mxu0
      %v885 = vadd.f32 0.0, %v884
      %v886 = vpop.f32.mrb[0].mxu0
      %v887 = vpop.f32.mrb[0].mxu0
      %v888 = vadd.f32 0.0, %v887
      %v889 = vpop.f32.mrb[0].mxu0
      %890 = vmatprep.mubr.bf16.mxu0 0
      %891 = vmatmul.mubr.bf16.gmra.mrb[0].mxu0 %v752
      %v892 = vpop.f32.mrb[0].mxu0
      %v893 = vadd.f32 0.0, %v892
      %v894 = vpop.f32.mrb[0].mxu0
      %v895 = vpop.f32.mrb[0].mxu0
      %v896 = vadd.f32 0.0, %v895
      %v897 = vpop.f32.mrb[0].mxu0
      %898 = vmatprep.mubr.bf16.mxu0 0
      %899 = vmatmul.mubr.bf16.gmra.mrb[0].mxu0 %v755
      %v900 = vpop.f32.mrb[0].mxu0
      %v901 = vadd.f32 0.0, %v900
      %v902 = vpop.f32.mrb[0].mxu0
      %v903 = vpop.f32.mrb[0].mxu0
      %v904 = vadd.f32 0.0, %v903
      %v905 = vpop.f32.mrb[0].mxu0
      %906 = vmatprep.mubr.bf16.mxu0 0
      %907 = vmatmul.mubr.bf16.gmra.mrb[0].mxu0 %v758
      %v908 = vpop.f32.mrb[0].mxu0
      %v909 = vadd.f32 0.0, %v908
      %v910 = vpop.f32.mrb[0].mxu0
      %v911 = vpop.f32.mrb[0].mxu0
      %v912 = vadd.f32 0.0, %v911
      %v913 = vpop.f32.mrb[0].mxu0
      %914 = vmatprep.mubr.bf16.mxu0 0
      %915 = vmatmul.mubr.bf16.gmra.mrb[0].mxu0 %v761
      %v916 = vpop.f32.mrb[0].mxu0
      %v917 = vadd.f32 0.0, %v916
      %v918 = vpop.f32.mrb[0].mxu0
      %v919 = vpop.f32.mrb[0].mxu0
      %v920 = vadd.f32 0.0, %v919
      %v921 = vpop.f32.mrb[0].mxu0
      %922 = vmatprep.mubr.bf16.mxu0 0
      %923 = vmatmul.mubr.bf16.gmra.mrb[0].mxu0 %v764
      %v924 = vpop.f32.mrb[0].mxu0
      %v925 = vadd.f32 0.0, %v924
      %v926 = vpop.f32.mrb[0].mxu0
      %v927 = vpop.f32.mrb[0].mxu0
      %v928 = vadd.f32 0.0, %v927
      %v929 = vpop.f32.mrb[0].mxu0
      %930 = vdwg.mxu0
      %v963 = vunpack.c.l.b16 %v228
      %v964 = vunpack.c.l.b16 %v229
      %v965 = vunpack.c.l.b16 %v231
      %v966 = vunpack.c.l.b16 %v232
      %v967 = vunpack.c.l.b16 %v234
      %v968 = vunpack.c.l.b16 %v235
      %v969 = vunpack.c.l.b16 %v237
      %v970 = vunpack.c.l.b16 %v238
      %v971 = vunpack.c.l.b16 %v240
      %v972 = vunpack.c.l.b16 %v241
      %v973 = vunpack.c.l.b16 %v243
      %v974 = vunpack.c.l.b16 %v244
      %v975 = vunpack.c.l.b16 %v246
      %v976 = vunpack.c.l.b16 %v247
      %v977 = vunpack.c.l.b16 %v249
      %v978 = vunpack.c.l.b16 %v250
      %v979 = vunpack.c.l.b16 %v252
      %v980 = vunpack.c.l.b16 %v253
      %v981 = vunpack.c.l.b16 %v255
      %v982 = vunpack.c.l.b16 %v256
      %v983 = vunpack.c.l.b16 %v258
      %v984 = vunpack.c.l.b16 %v259
      %v985 = vunpack.c.l.b16 %v261
      %v986 = vunpack.c.l.b16 %v262
      %v987 = vunpack.c.l.b16 %v264
      %v988 = vunpack.c.l.b16 %v265
      %v989 = vunpack.c.l.b16 %v267
      %v990 = vunpack.c.l.b16 %v268
      %v991 = vunpack.c.l.b16 %v270
      %v992 = vunpack.c.l.b16 %v271
      %v993 = vunpack.c.l.b16 %v273
      %v994 = vunpack.c.l.b16 %v274
      %v995 = vpack.c.b16 %v964, %v963
      %v996 = vpack.c.b16 %v966, %v965
      %v997 = vpack.c.b16 %v968, %v967
      %v998 = vpack.c.b16 %v970, %v969
      %v999 = vpack.c.b16 %v972, %v971
      %v1000 = vpack.c.b16 %v974, %v973
      %v1001 = vpack.c.b16 %v976, %v975
      %v1002 = vpack.c.b16 %v978, %v977
      %v1003 = vpack.c.b16 %v980, %v979
      %v1004 = vpack.c.b16 %v982, %v981
      %v1005 = vpack.c.b16 %v984, %v983
      %v1006 = vpack.c.b16 %v986, %v985
      %v1007 = vpack.c.b16 %v988, %v987
      %v1008 = vpack.c.b16 %v990, %v989
      %v1009 = vpack.c.b16 %v992, %v991
      %v1010 = vpack.c.b16 %v994, %v993
      %v1012 = vsel %vm717, %v995, 0
      %v1015 = vsel %vm717, %v996, 0
      %v1018 = vsel %vm717, %v997, 0
      %v1021 = vsel %vm717, %v998, 0
      %v1024 = vsel %vm717, %v999, 0
      %v1027 = vsel %vm717, %v1000, 0
      %v1030 = vsel %vm717, %v1001, 0
      %v1033 = vsel %vm717, %v1002, 0
      %v1036 = vsel %vm717, %v1003, 0
      %v1039 = vsel %vm717, %v1004, 0
      %v1042 = vsel %vm717, %v1005, 0
      %v1045 = vsel %vm717, %v1006, 0
      %v1048 = vsel %vm717, %v1007, 0
      %v1051 = vsel %vm717, %v1008, 0
      %v1054 = vsel %vm717, %v1009, 0
      %v1057 = vsel %vm717, %v1010, 0
      %v1060 = vsel %vm766, %v279, 0
      %1062 = vmatprep.subr.bf16.mxu0 0
      %1063 = vmatpush1.bf16.msra.mxu0 %v1060
      %1064 = vmatprep.subr.bf16.mxu0 0
      %1065 = vmatpush1.bf16.msra.mxu0 0
      %1066 = vmatprep.subr.bf16.mxu0 0
      %1067 = vmatpush1.bf16.msra.mxu0 0
      %1068 = vmatprep.subr.bf16.mxu0 0
      %1069 = vmatpush1.bf16.msra.mxu0 0
      %1070 = vmatprep.subr.bf16.mxu0 0
      %1071 = vmatpush1.bf16.msra.mxu0 0
      %1072 = vmatprep.subr.bf16.mxu0 0
      %1073 = vmatpush1.bf16.msra.mxu0 0
      %1074 = vmatprep.subr.bf16.mxu0 0
      %1075 = vmatpush1.bf16.msra.mxu0 0
      %1076 = vmatprep.subr.bf16.mxu0 0
      %1077 = vmatpush1.bf16.msra.mxu0 0
      %1078 = vmatprep.subr.bf16.mxu0 0
      %1079 = vmatpush1.bf16.msra.mxu0 0
      %1080 = vmatprep.subr.bf16.mxu0 0
      %1081 = vmatpush1.bf16.msra.mxu0 0
      %1082 = vmatprep.subr.bf16.mxu0 0
      %1083 = vmatpush1.bf16.msra.mxu0 0
      %1084 = vmatprep.subr.bf16.mxu0 0
      %1085 = vmatpush1.bf16.msra.mxu0 0
      %1086 = vmatprep.subr.bf16.mxu0 0
      %1087 = vmatpush1.bf16.msra.mxu0 0
      %1088 = vmatprep.subr.bf16.mxu0 0
      %1089 = vmatpush1.bf16.msra.mxu0 0
      %1090 = vmatprep.subr.bf16.mxu0 0
      %1091 = vmatpush1.bf16.msra.mxu0 0
      %1092 = vmatprep.subr.bf16.mxu0 0
      %1093 = vmatpush1.bf16.msra.mxu0 0
      %1094 = vmatprep.mubr.bf16.mxu0 0
      %1095 = vmatmul.mubr.bf16.gmra.mrb[0].mxu0 %v1012
      %v1096 = vpop.f32.mrb[0].mxu0
      %v1097 = vadd.f32 %v805, %v1096
      %v1098 = vpop.f32.mrb[0].mxu0
      %v1099 = vpop.f32.mrb[0].mxu0
      %v1100 = vadd.f32 %v808, %v1099
      %v1101 = vpop.f32.mrb[0].mxu0
      %1102 = vmatprep.mubr.bf16.mxu0 0
      %1103 = vmatmul.mubr.bf16.gmra.mrb[0].mxu0 %v1015
      %v1104 = vpop.f32.mrb[0].mxu0
      %v1105 = vadd.f32 %v813, %v1104
      %v1106 = vpop.f32.mrb[0].mxu0
      %v1107 = vpop.f32.mrb[0].mxu0
      %v1108 = vadd.f32 %v816, %v1107
      %v1109 = vpop.f32.mrb[0].mxu0
      %1110 = vmatprep.mubr.bf16.mxu0 0
      %1111 = vmatmul.mubr.bf16.gmra.mrb[0].mxu0 %v1018
      %v1112 = vpop.f32.mrb[0].mxu0
      %v1113 = vadd.f32 %v821, %v1112
      %v1114 = vpop.f32.mrb[0].mxu0
      %v1115 = vpop.f32.mrb[0].mxu0
      %v1116 = vadd.f32 %v824, %v1115
      %v1117 = vpop.f32.mrb[0].mxu0
      %1118 = vmatprep.mubr.bf16.mxu0 0
      %1119 = vmatmul.mubr.bf16.gmra.mrb[0].mxu0 %v1021
      %v1120 = vpop.f32.mrb[0].mxu0
      %v1121 = vadd.f32 %v829, %v1120
      %v1122 = vpop.f32.mrb[0].mxu0
      %v1123 = vpop.f32.mrb[0].mxu0
      %v1124 = vadd.f32 %v832, %v1123
      %v1125 = vpop.f32.mrb[0].mxu0
      %1126 = vmatprep.mubr.bf16.mxu0 0
      %1127 = vmatmul.mubr.bf16.gmra.mrb[0].mxu0 %v1024
      %v1128 = vpop.f32.mrb[0].mxu0
      %v1129 = vadd.f32 %v837, %v1128
      %v1130 = vpop.f32.mrb[0].mxu0
      %v1131 = vpop.f32.mrb[0].mxu0
      %v1132 = vadd.f32 %v840, %v1131
      %v1133 = vpop.f32.mrb[0].mxu0
      %1134 = vmatprep.mubr.bf16.mxu0 0
      %1135 = vmatmul.mubr.bf16.gmra.mrb[0].mxu0 %v1027
      %v1136 = vpop.f32.mrb[0].mxu0
      %v1137 = vadd.f32 %v845, %v1136
      %v1138 = vpop.f32.mrb[0].mxu0
      %v1139 = vpop.f32.mrb[0].mxu0
      %v1140 = vadd.f32 %v848, %v1139
      %v1141 = vpop.f32.mrb[0].mxu0
      %1142 = vmatprep.mubr.bf16.mxu0 0
      %1143 = vmatmul.mubr.bf16.gmra.mrb[0].mxu0 %v1030
      %v1144 = vpop.f32.mrb[0].mxu0
      %v1145 = vadd.f32 %v853, %v1144
      %v1146 = vpop.f32.mrb[0].mxu0
      %v1147 = vpop.f32.mrb[0].mxu0
      %v1148 = vadd.f32 %v856, %v1147
      %v1149 = vpop.f32.mrb[0].mxu0
      %1150 = vmatprep.mubr.bf16.mxu0 0
      %1151 = vmatmul.mubr.bf16.gmra.mrb[0].mxu0 %v1033
      %v1152 = vpop.f32.mrb[0].mxu0
      %v1153 = vadd.f32 %v861, %v1152
      %v1154 = vpop.f32.mrb[0].mxu0
      %v1155 = vpop.f32.mrb[0].mxu0
      %v1156 = vadd.f32 %v864, %v1155
      %v1157 = vpop.f32.mrb[0].mxu0
      %1158 = vmatprep.mubr.bf16.mxu0 0
      %1159 = vmatmul.mubr.bf16.gmra.mrb[0].mxu0 %v1036
      %v1160 = vpop.f32.mrb[0].mxu0
      %v1161 = vadd.f32 %v869, %v1160
      %v1162 = vpop.f32.mrb[0].mxu0
      %v1163 = vpop.f32.mrb[0].mxu0
      %v1164 = vadd.f32 %v872, %v1163
      %v1165 = vpop.f32.mrb[0].mxu0
      %1166 = vmatprep.mubr.bf16.mxu0 0
      %1167 = vmatmul.mubr.bf16.gmra.mrb[0].mxu0 %v1039
      %v1168 = vpop.f32.mrb[0].mxu0
      %v1169 = vadd.f32 %v877, %v1168
      %v1170 = vpop.f32.mrb[0].mxu0
      %v1171 = vpop.f32.mrb[0].mxu0
      %v1172 = vadd.f32 %v880, %v1171
      %v1173 = vpop.f32.mrb[0].mxu0
      %1174 = vmatprep.mubr.bf16.mxu0 0
      %1175 = vmatmul.mubr.bf16.gmra.mrb[0].mxu0 %v1042
      %v1176 = vpop.f32.mrb[0].mxu0
      %v1177 = vadd.f32 %v885, %v1176
      %v1178 = vpop.f32.mrb[0].mxu0
      %v1179 = vpop.f32.mrb[0].mxu0
      %v1180 = vadd.f32 %v888, %v1179
      %v1181 = vpop.f32.mrb[0].mxu0
      %1182 = vmatprep.mubr.bf16.mxu0 0
      %1183 = vmatmul.mubr.bf16.gmra.mrb[0].mxu0 %v1045
      %v1184 = vpop.f32.mrb[0].mxu0
      %v1185 = vadd.f32 %v893, %v1184
      %v1186 = vpop.f32.mrb[0].mxu0
      %v1187 = vpop.f32.mrb[0].mxu0
      %v1188 = vadd.f32 %v896, %v1187
      %v1189 = vpop.f32.mrb[0].mxu0
      %1190 = vmatprep.mubr.bf16.mxu0 0
      %1191 = vmatmul.mubr.bf16.gmra.mrb[0].mxu0 %v1048
      %v1192 = vpop.f32.mrb[0].mxu0
      %v1193 = vadd.f32 %v901, %v1192
      %v1194 = vpop.f32.mrb[0].mxu0
      %v1195 = vpop.f32.mrb[0].mxu0
      %v1196 = vadd.f32 %v904, %v1195
      %v1197 = vpop.f32.mrb[0].mxu0
      %1198 = vmatprep.mubr.bf16.mxu0 0
      %1199 = vmatmul.mubr.bf16.gmra.mrb[0].mxu0 %v1051
      %v1200 = vpop.f32.mrb[0].mxu0
      %v1201 = vadd.f32 %v909, %v1200
      %v1202 = vpop.f32.mrb[0].mxu0
      %v1203 = vpop.f32.mrb[0].mxu0
      %v1204 = vadd.f32 %v912, %v1203
      %v1205 = vpop.f32.mrb[0].mxu0
      %1206 = vmatprep.mubr.bf16.mxu0 0
      %1207 = vmatmul.mubr.bf16.gmra.mrb[0].mxu0 %v1054
      %v1208 = vpop.f32.mrb[0].mxu0
      %v1209 = vadd.f32 %v917, %v1208
      %v1210 = vpop.f32.mrb[0].mxu0
      %v1211 = vpop.f32.mrb[0].mxu0
      %v1212 = vadd.f32 %v920, %v1211
      %v1213 = vpop.f32.mrb[0].mxu0
      %1214 = vmatprep.mubr.bf16.mxu0 0
      %1215 = vmatmul.mubr.bf16.gmra.mrb[0].mxu0 %v1057
      %v1216 = vpop.f32.mrb[0].mxu0
      %v1217 = vadd.f32 %v925, %v1216
      %v1218 = vpop.f32.mrb[0].mxu0
      %v1219 = vpop.f32.mrb[0].mxu0
      %v1220 = vadd.f32 %v928, %v1219
      %v1221 = vpop.f32.mrb[0].mxu0
      %1222 = vdwg.mxu0
      %s1223 = scalar_lea.vmem %s1, 4
      %v1224 = vld [vmem:[%s1223] sm:$0x3]
      %v1227 = vunpack.c.l.b16 %v276
      %v1228 = vunpack.c.l.b16 %v277
      %v1229 = vpack.c.b16 %v1228, %v1227
      %v1231 = vsel %vm717, %v1229, 0
      %v1234 = vsel %vm766, %v1224, 0
      %1236 = vmatprep.subr.bf16.mxu0 0
      %1237 = vmatpush1.bf16.msra.mxu0 %v1234
      %1238 = vmatprep.subr.bf16.mxu0 0
      %1239 = vmatpush1.bf16.msra.mxu0 0
      %1240 = vmatprep.subr.bf16.mxu0 0
      %1241 = vmatpush1.bf16.msra.mxu0 0
      %1242 = vmatprep.subr.bf16.mxu0 0
      %1243 = vmatpush1.bf16.msra.mxu0 0
      %1244 = vmatprep.subr.bf16.mxu0 0
      %1245 = vmatpush1.bf16.msra.mxu0 0
      %1246 = vmatprep.subr.bf16.mxu0 0
      %1247 = vmatpush1.bf16.msra.mxu0 0
      %1248 = vmatprep.subr.bf16.mxu0 0
      %1249 = vmatpush1.bf16.msra.mxu0 0
      %1250 = vmatprep.subr.bf16.mxu0 0
      %1251 = vmatpush1.bf16.msra.mxu0 0
      %1252 = vmatprep.subr.bf16.mxu0 0
      %1253 = vmatpush1.bf16.msra.mxu0 0
      %1254 = vmatprep.subr.bf16.mxu0 0
      %1255 = vmatpush1.bf16.msra.mxu0 0
      %1256 = vmatprep.subr.bf16.mxu0 0
      %1257 = vmatpush1.bf16.msra.mxu0 0
      %1258 = vmatprep.subr.bf16.mxu0 0
      %1259 = vmatpush1.bf16.msra.mxu0 0
      %1260 = vmatprep.subr.bf16.mxu0 0
      %1261 = vmatpush1.bf16.msra.mxu0 0
      %1262 = vmatprep.subr.bf16.mxu0 0
      %1263 = vmatpush1.bf16.msra.mxu0 0
      %1264 = vmatprep.subr.bf16.mxu0 0
      %1265 = vmatpush1.bf16.msra.mxu0 0
      %1266 = vmatprep.subr.bf16.mxu0 0
      %1267 = vmatpush1.bf16.msra.mxu0 0
      %1268 = vmatprep.mubr.bf16.mxu0 0
      %1269 = vmatmul.mubr.bf16.gmra.mrb[0].mxu0 %v1015
      %v1270 = vpop.f32.mrb[0].mxu0
      %v1271 = vadd.f32 0.0, %v1270
      %v1272 = vpop.f32.mrb[0].mxu0
      %v1273 = vpop.f32.mrb[0].mxu0
      %v1274 = vadd.f32 0.0, %v1273
      %v1275 = vpop.f32.mrb[0].mxu0
      %1276 = vmatprep.mubr.bf16.mxu0 0
      %1277 = vmatmul.mubr.bf16.gmra.mrb[0].mxu0 %v1018
      %v1278 = vpop.f32.mrb[0].mxu0
      %v1279 = vadd.f32 0.0, %v1278
      %v1280 = vpop.f32.mrb[0].mxu0
      %v1281 = vpop.f32.mrb[0].mxu0
      %v1282 = vadd.f32 0.0, %v1281
      %v1283 = vpop.f32.mrb[0].mxu0
      %1284 = vmatprep.mubr.bf16.mxu0 0
      %1285 = vmatmul.mubr.bf16.gmra.mrb[0].mxu0 %v1021
      %v1286 = vpop.f32.mrb[0].mxu0
      %v1287 = vadd.f32 0.0, %v1286
      %v1288 = vpop.f32.mrb[0].mxu0
      %v1289 = vpop.f32.mrb[0].mxu0
      %v1290 = vadd.f32 0.0, %v1289
      %v1291 = vpop.f32.mrb[0].mxu0
      %1292 = vmatprep.mubr.bf16.mxu0 0
      %1293 = vmatmul.mubr.bf16.gmra.mrb[0].mxu0 %v1024
      %v1294 = vpop.f32.mrb[0].mxu0
      %v1295 = vadd.f32 0.0, %v1294
      %v1296 = vpop.f32.mrb[0].mxu0
      %v1297 = vpop.f32.mrb[0].mxu0
      %v1298 = vadd.f32 0.0, %v1297
      %v1299 = vpop.f32.mrb[0].mxu0
      %1300 = vmatprep.mubr.bf16.mxu0 0
      %1301 = vmatmul.mubr.bf16.gmra.mrb[0].mxu0 %v1027
      %v1302 = vpop.f32.mrb[0].mxu0
      %v1303 = vadd.f32 0.0, %v1302
      %v1304 = vpop.f32.mrb[0].mxu0
      %v1305 = vpop.f32.mrb[0].mxu0
      %v1306 = vadd.f32 0.0, %v1305
      %v1307 = vpop.f32.mrb[0].mxu0
      %1308 = vmatprep.mubr.bf16.mxu0 0
      %1309 = vmatmul.mubr.bf16.gmra.mrb[0].mxu0 %v1030
      %v1310 = vpop.f32.mrb[0].mxu0
      %v1311 = vadd.f32 0.0, %v1310
      %v1312 = vpop.f32.mrb[0].mxu0
      %v1313 = vpop.f32.mrb[0].mxu0
      %v1314 = vadd.f32 0.0, %v1313
      %v1315 = vpop.f32.mrb[0].mxu0
      %1316 = vmatprep.mubr.bf16.mxu0 0
      %1317 = vmatmul.mubr.bf16.gmra.mrb[0].mxu0 %v1033
      %v1318 = vpop.f32.mrb[0].mxu0
      %v1319 = vadd.f32 0.0, %v1318
      %v1320 = vpop.f32.mrb[0].mxu0
      %v1321 = vpop.f32.mrb[0].mxu0
      %v1322 = vadd.f32 0.0, %v1321
      %v1323 = vpop.f32.mrb[0].mxu0
      %1324 = vmatprep.mubr.bf16.mxu0 0
      %1325 = vmatmul.mubr.bf16.gmra.mrb[0].mxu0 %v1036
      %v1326 = vpop.f32.mrb[0].mxu0
      %v1327 = vadd.f32 0.0, %v1326
      %v1328 = vpop.f32.mrb[0].mxu0
      %v1329 = vpop.f32.mrb[0].mxu0
      %v1330 = vadd.f32 0.0, %v1329
      %v1331 = vpop.f32.mrb[0].mxu0
      %1332 = vmatprep.mubr.bf16.mxu0 0
      %1333 = vmatmul.mubr.bf16.gmra.mrb[0].mxu0 %v1039
      %v1334 = vpop.f32.mrb[0].mxu0
      %v1335 = vadd.f32 0.0, %v1334
      %v1336 = vpop.f32.mrb[0].mxu0
      %v1337 = vpop.f32.mrb[0].mxu0
      %v1338 = vadd.f32 0.0, %v1337
      %v1339 = vpop.f32.mrb[0].mxu0
      %1340 = vmatprep.mubr.bf16.mxu0 0
      %1341 = vmatmul.mubr.bf16.gmra.mrb[0].mxu0 %v1042
      %v1342 = vpop.f32.mrb[0].mxu0
      %v1343 = vadd.f32 0.0, %v1342
      %v1344 = vpop.f32.mrb[0].mxu0
      %v1345 = vpop.f32.mrb[0].mxu0
      %v1346 = vadd.f32 0.0, %v1345
      %v1347 = vpop.f32.mrb[0].mxu0
      %1348 = vmatprep.mubr.bf16.mxu0 0
      %1349 = vmatmul.mubr.bf16.gmra.mrb[0].mxu0 %v1045
      %v1350 = vpop.f32.mrb[0].mxu0
      %v1351 = vadd.f32 0.0, %v1350
      %v1352 = vpop.f32.mrb[0].mxu0
      %v1353 = vpop.f32.mrb[0].mxu0
      %v1354 = vadd.f32 0.0, %v1353
      %v1355 = vpop.f32.mrb[0].mxu0
      %1356 = vmatprep.mubr.bf16.mxu0 0
      %1357 = vmatmul.mubr.bf16.gmra.mrb[0].mxu0 %v1048
      %v1358 = vpop.f32.mrb[0].mxu0
      %v1359 = vadd.f32 0.0, %v1358
      %v1360 = vpop.f32.mrb[0].mxu0
      %v1361 = vpop.f32.mrb[0].mxu0
      %v1362 = vadd.f32 0.0, %v1361
      %v1363 = vpop.f32.mrb[0].mxu0
      %1364 = vmatprep.mubr.bf16.mxu0 0
      %1365 = vmatmul.mubr.bf16.gmra.mrb[0].mxu0 %v1051
      %v1366 = vpop.f32.mrb[0].mxu0
      %v1367 = vadd.f32 0.0, %v1366
      %v1368 = vpop.f32.mrb[0].mxu0
      %v1369 = vpop.f32.mrb[0].mxu0
      %v1370 = vadd.f32 0.0, %v1369
      %v1371 = vpop.f32.mrb[0].mxu0
      %1372 = vmatprep.mubr.bf16.mxu0 0
      %1373 = vmatmul.mubr.bf16.gmra.mrb[0].mxu0 %v1054
      %v1374 = vpop.f32.mrb[0].mxu0
      %v1375 = vadd.f32 0.0, %v1374
      %v1376 = vpop.f32.mrb[0].mxu0
      %v1377 = vpop.f32.mrb[0].mxu0
      %v1378 = vadd.f32 0.0, %v1377
      %v1379 = vpop.f32.mrb[0].mxu0
      %1380 = vmatprep.mubr.bf16.mxu0 0
      %1381 = vmatmul.mubr.bf16.gmra.mrb[0].mxu0 %v1057
      %v1382 = vpop.f32.mrb[0].mxu0
      %v1383 = vadd.f32 0.0, %v1382
      %v1384 = vpop.f32.mrb[0].mxu0
      %v1385 = vpop.f32.mrb[0].mxu0
      %v1386 = vadd.f32 0.0, %v1385
      %v1387 = vpop.f32.mrb[0].mxu0
      %1388 = vmatprep.mubr.bf16.mxu0 0
      %1389 = vmatmul.mubr.bf16.gmra.mrb[0].mxu0 %v1231
      %v1390 = vpop.f32.mrb[0].mxu0
      %v1391 = vadd.f32 0.0, %v1390
      %v1392 = vpop.f32.mrb[0].mxu0
      %v1393 = vpop.f32.mrb[0].mxu0
      %v1394 = vadd.f32 0.0, %v1393
      %v1395 = vpop.f32.mrb[0].mxu0
      %1396 = vdwg.mxu0
      %v1397 = vadd.f32 %v1097, %v1271
      %v1398 = vadd.f32 %v1100, %v1274
      %v1399 = vadd.f32 %v1105, %v1279
      %v1400 = vadd.f32 %v1108, %v1282
      %v1401 = vadd.f32 %v1113, %v1287
      %v1402 = vadd.f32 %v1116, %v1290
      %v1403 = vadd.f32 %v1121, %v1295
      %v1404 = vadd.f32 %v1124, %v1298
      %v1405 = vadd.f32 %v1129, %v1303
      %v1406 = vadd.f32 %v1132, %v1306
      %v1407 = vadd.f32 %v1137, %v1311
      %v1408 = vadd.f32 %v1140, %v1314
      %v1409 = vadd.f32 %v1145, %v1319
      %v1410 = vadd.f32 %v1148, %v1322
      %v1411 = vadd.f32 %v1153, %v1327
      %v1412 = vadd.f32 %v1156, %v1330
      %v1413 = vadd.f32 %v1161, %v1335
      %v1414 = vadd.f32 %v1164, %v1338
      %v1415 = vadd.f32 %v1169, %v1343
      %v1416 = vadd.f32 %v1172, %v1346
      %v1417 = vadd.f32 %v1177, %v1351
      %v1418 = vadd.f32 %v1180, %v1354
      %v1419 = vadd.f32 %v1185, %v1359
      %v1420 = vadd.f32 %v1188, %v1362
      %v1421 = vadd.f32 %v1193, %v1367
      %v1422 = vadd.f32 %v1196, %v1370
      %v1423 = vadd.f32 %v1201, %v1375
      %v1424 = vadd.f32 %v1204, %v1378
      %v1425 = vadd.f32 %v1209, %v1383
      %v1426 = vadd.f32 %v1212, %v1386
      %v1427 = vadd.f32 %v1217, %v1391
      %v1428 = vadd.f32 %v1220, %v1394
      %v1430 = vshrl.u32 %v276, 16
      %v1432 = vrot.slane %v1430, 4
      %v1433 = vshll.u32 %v276, 16
      %v1435 = vrot.slane %v1433, 5
      %v1436 = vor.u32 %v1432, %v1435
      %v1437 = vrot.slane %v1436, 4
      %v1439 = vshll.u32 %v277, 16
      %v1441 = vrot.slane %v1439, 5
      %v1442 = vsel %vm282, %v1437, %v1441
      %v1443 = vshrl.u32 %v277, 16
      %v1445 = vrot.slane %v1443, 4
      %v1446 = vor.u32 %v1445, %v1441
      %v1447 = vrot.slane %v1446, 4
      %v1449 = vshll.u32 %v278, 16
      %v1451 = vrot.slane %v1449, 5
      %v1452 = vsel %vm282, %v1447, %v1451
      %s1453 = scalar_lea.vmem %s1, 6
      %v1454 = vld [vmem:[%s1453] sm:$0x3]
      %v1455 = vunpack.c.l.b16 %v1442
      %v1456 = vunpack.c.l.b16 %v1452
      %v1457 = vpack.c.b16 %v1456, %v1455
      %v1459 = vsel %vm717, %v1457, 0
      %v1462 = vsel %vm766, %v1454, 0
      %1464 = vmatprep.subr.bf16.mxu0 0
      %1465 = vmatpush1.bf16.msra.mxu0 %v1462
      %1466 = vmatprep.subr.bf16.mxu0 0
      %1467 = vmatpush1.bf16.msra.mxu0 0
      %1468 = vmatprep.subr.bf16.mxu0 0
      %1469 = vmatpush1.bf16.msra.mxu0 0
      %1470 = vmatprep.subr.bf16.mxu0 0
      %1471 = vmatpush1.bf16.msra.mxu0 0
      %1472 = vmatprep.subr.bf16.mxu0 0
      %1473 = vmatpush1.bf16.msra.mxu0 0
      %1474 = vmatprep.subr.bf16.mxu0 0
      %1475 = vmatpush1.bf16.msra.mxu0 0
      %1476 = vmatprep.subr.bf16.mxu0 0
      %1477 = vmatpush1.bf16.msra.mxu0 0
      %1478 = vmatprep.subr.bf16.mxu0 0
      %1479 = vmatpush1.bf16.msra.mxu0 0
      %1480 = vmatprep.subr.bf16.mxu0 0
      %1481 = vmatpush1.bf16.msra.mxu0 0
      %1482 = vmatprep.subr.bf16.mxu0 0
      %1483 = vmatpush1.bf16.msra.mxu0 0
      %1484 = vmatprep.subr.bf16.mxu0 0
      %1485 = vmatpush1.bf16.msra.mxu0 0
      %1486 = vmatprep.subr.bf16.mxu0 0
      %1487 = vmatpush1.bf16.msra.mxu0 0
      %1488 = vmatprep.subr.bf16.mxu0 0
      %1489 = vmatpush1.bf16.msra.mxu0 0
      %1490 = vmatprep.subr.bf16.mxu0 0
      %1491 = vmatpush1.bf16.msra.mxu0 0
      %1492 = vmatprep.subr.bf16.mxu0 0
      %1493 = vmatpush1.bf16.msra.mxu0 0
      %1494 = vmatprep.subr.bf16.mxu0 0
      %1495 = vmatpush1.bf16.msra.mxu0 0
      %1496 = vmatprep.mubr.bf16.mxu0 0
      %1497 = vmatmul.mubr.bf16.gmra.mrb[0].mxu0 %v722
      %v1498 = vpop.f32.mrb[0].mxu0
      %v1499 = vadd.f32 0.0, %v1498
      %v1500 = vpop.f32.mrb[0].mxu0
      %v1501 = vpop.f32.mrb[0].mxu0
      %v1502 = vadd.f32 0.0, %v1501
      %v1503 = vpop.f32.mrb[0].mxu0
      %1504 = vmatprep.mubr.bf16.mxu0 0
      %1505 = vmatmul.mubr.bf16.gmra.mrb[0].mxu0 %v725
      %v1506 = vpop.f32.mrb[0].mxu0
      %v1507 = vadd.f32 0.0, %v1506
      %v1508 = vpop.f32.mrb[0].mxu0
      %v1509 = vpop.f32.mrb[0].mxu0
      %v1510 = vadd.f32 0.0, %v1509
      %v1511 = vpop.f32.mrb[0].mxu0
      %1512 = vmatprep.mubr.bf16.mxu0 0
      %1513 = vmatmul.mubr.bf16.gmra.mrb[0].mxu0 %v728
      %v1514 = vpop.f32.mrb[0].mxu0
      %v1515 = vadd.f32 0.0, %v1514
      %v1516 = vpop.f32.mrb[0].mxu0
      %v1517 = vpop.f32.mrb[0].mxu0
      %v1518 = vadd.f32 0.0, %v1517
      %v1519 = vpop.f32.mrb[0].mxu0
      %1520 = vmatprep.mubr.bf16.mxu0 0
      %1521 = vmatmul.mubr.bf16.gmra.mrb[0].mxu0 %v731
      %v1522 = vpop.f32.mrb[0].mxu0
      %v1523 = vadd.f32 0.0, %v1522
      %v1524 = vpop.f32.mrb[0].mxu0
      %v1525 = vpop.f32.mrb[0].mxu0
      %v1526 = vadd.f32 0.0, %v1525
      %v1527 = vpop.f32.mrb[0].mxu0
      %1528 = vmatprep.mubr.bf16.mxu0 0
      %1529 = vmatmul.mubr.bf16.gmra.mrb[0].mxu0 %v734
      %v1530 = vpop.f32.mrb[0].mxu0
      %v1531 = vadd.f32 0.0, %v1530
      %v1532 = vpop.f32.mrb[0].mxu0
      %v1533 = vpop.f32.mrb[0].mxu0
      %v1534 = vadd.f32 0.0, %v1533
      %v1535 = vpop.f32.mrb[0].mxu0
      %1536 = vmatprep.mubr.bf16.mxu0 0
      %1537 = vmatmul.mubr.bf16.gmra.mrb[0].mxu0 %v737
      %v1538 = vpop.f32.mrb[0].mxu0
      %v1539 = vadd.f32 0.0, %v1538
      %v1540 = vpop.f32.mrb[0].mxu0
      %v1541 = vpop.f32.mrb[0].mxu0
      %v1542 = vadd.f32 0.0, %v1541
      %v1543 = vpop.f32.mrb[0].mxu0
      %1544 = vmatprep.mubr.bf16.mxu0 0
      %1545 = vmatmul.mubr.bf16.gmra.mrb[0].mxu0 %v740
      %v1546 = vpop.f32.mrb[0].mxu0
      %v1547 = vadd.f32 0.0, %v1546
      %v1548 = vpop.f32.mrb[0].mxu0
      %v1549 = vpop.f32.mrb[0].mxu0
      %v1550 = vadd.f32 0.0, %v1549
      %v1551 = vpop.f32.mrb[0].mxu0
      %1552 = vmatprep.mubr.bf16.mxu0 0
      %1553 = vmatmul.mubr.bf16.gmra.mrb[0].mxu0 %v743
      %v1554 = vpop.f32.mrb[0].mxu0
      %v1555 = vadd.f32 0.0, %v1554
      %v1556 = vpop.f32.mrb[0].mxu0
      %v1557 = vpop.f32.mrb[0].mxu0
      %v1558 = vadd.f32 0.0, %v1557
      %v1559 = vpop.f32.mrb[0].mxu0
      %1560 = vmatprep.mubr.bf16.mxu0 0
      %1561 = vmatmul.mubr.bf16.gmra.mrb[0].mxu0 %v746
      %v1562 = vpop.f32.mrb[0].mxu0
      %v1563 = vadd.f32 0.0, %v1562
      %v1564 = vpop.f32.mrb[0].mxu0
      %v1565 = vpop.f32.mrb[0].mxu0
      %v1566 = vadd.f32 0.0, %v1565
      %v1567 = vpop.f32.mrb[0].mxu0
      %1568 = vmatprep.mubr.bf16.mxu0 0
      %1569 = vmatmul.mubr.bf16.gmra.mrb[0].mxu0 %v749
      %v1570 = vpop.f32.mrb[0].mxu0
      %v1571 = vadd.f32 0.0, %v1570
      %v1572 = vpop.f32.mrb[0].mxu0
      %v1573 = vpop.f32.mrb[0].mxu0
      %v1574 = vadd.f32 0.0, %v1573
      %v1575 = vpop.f32.mrb[0].mxu0
      %1576 = vmatprep.mubr.bf16.mxu0 0
      %1577 = vmatmul.mubr.bf16.gmra.mrb[0].mxu0 %v752
      %v1578 = vpop.f32.mrb[0].mxu0
      %v1579 = vadd.f32 0.0, %v1578
      %v1580 = vpop.f32.mrb[0].mxu0
      %v1581 = vpop.f32.mrb[0].mxu0
      %v1582 = vadd.f32 0.0, %v1581
      %v1583 = vpop.f32.mrb[0].mxu0
      %1584 = vmatprep.mubr.bf16.mxu0 0
      %1585 = vmatmul.mubr.bf16.gmra.mrb[0].mxu0 %v755
      %v1586 = vpop.f32.mrb[0].mxu0
      %v1587 = vadd.f32 0.0, %v1586
      %v1588 = vpop.f32.mrb[0].mxu0
      %v1589 = vpop.f32.mrb[0].mxu0
      %v1590 = vadd.f32 0.0, %v1589
      %v1591 = vpop.f32.mrb[0].mxu0
      %1592 = vmatprep.mubr.bf16.mxu0 0
      %1593 = vmatmul.mubr.bf16.gmra.mrb[0].mxu0 %v758
      %v1594 = vpop.f32.mrb[0].mxu0
      %v1595 = vadd.f32 0.0, %v1594
      %v1596 = vpop.f32.mrb[0].mxu0
      %v1597 = vpop.f32.mrb[0].mxu0
      %v1598 = vadd.f32 0.0, %v1597
      %v1599 = vpop.f32.mrb[0].mxu0
      %1600 = vmatprep.mubr.bf16.mxu0 0
      %1601 = vmatmul.mubr.bf16.gmra.mrb[0].mxu0 %v761
      %v1602 = vpop.f32.mrb[0].mxu0
      %v1603 = vadd.f32 0.0, %v1602
      %v1604 = vpop.f32.mrb[0].mxu0
      %v1605 = vpop.f32.mrb[0].mxu0
      %v1606 = vadd.f32 0.0, %v1605
      %v1607 = vpop.f32.mrb[0].mxu0
      %1608 = vmatprep.mubr.bf16.mxu0 0
      %1609 = vmatmul.mubr.bf16.gmra.mrb[0].mxu0 %v764
      %v1610 = vpop.f32.mrb[0].mxu0
      %v1611 = vadd.f32 0.0, %v1610
      %v1612 = vpop.f32.mrb[0].mxu0
      %v1613 = vpop.f32.mrb[0].mxu0
      %v1614 = vadd.f32 0.0, %v1613
      %v1615 = vpop.f32.mrb[0].mxu0
      %1616 = vmatprep.mubr.bf16.mxu0 0
      %1617 = vmatmul.mubr.bf16.gmra.mrb[0].mxu0 %v1459
      %v1618 = vpop.f32.mrb[0].mxu0
      %v1619 = vadd.f32 0.0, %v1618
      %v1620 = vpop.f32.mrb[0].mxu0
      %v1621 = vpop.f32.mrb[0].mxu0
      %v1622 = vadd.f32 0.0, %v1621
      %v1623 = vpop.f32.mrb[0].mxu0
      %1624 = vdwg.mxu0
      %v1625 = vadd.f32 %v1397, %v1499
      %v1626 = vadd.f32 %v1398, %v1502
      %v1627 = vadd.f32 %v1399, %v1507
      %v1628 = vadd.f32 %v1400, %v1510
      %v1629 = vadd.f32 %v1401, %v1515
      %v1630 = vadd.f32 %v1402, %v1518
      %v1631 = vadd.f32 %v1403, %v1523
      %v1632 = vadd.f32 %v1404, %v1526
      %v1633 = vadd.f32 %v1405, %v1531
      %v1634 = vadd.f32 %v1406, %v1534
      %v1635 = vadd.f32 %v1407, %v1539
      %v1636 = vadd.f32 %v1408, %v1542
      %v1637 = vadd.f32 %v1409, %v1547
      %v1638 = vadd.f32 %v1410, %v1550
      %v1639 = vadd.f32 %v1411, %v1555
      %v1640 = vadd.f32 %v1412, %v1558
      %v1641 = vadd.f32 %v1413, %v1563
      %v1642 = vadd.f32 %v1414, %v1566
      %v1643 = vadd.f32 %v1415, %v1571
      %v1644 = vadd.f32 %v1416, %v1574
      %v1645 = vadd.f32 %v1417, %v1579
      %v1646 = vadd.f32 %v1418, %v1582
      %v1647 = vadd.f32 %v1419, %v1587
      %v1648 = vadd.f32 %v1420, %v1590
      %v1649 = vadd.f32 %v1421, %v1595
      %v1650 = vadd.f32 %v1422, %v1598
      %v1651 = vadd.f32 %v1423, %v1603
      %v1652 = vadd.f32 %v1424, %v1606
      %v1653 = vadd.f32 %v1425, %v1611
      %v1654 = vadd.f32 %v1426, %v1614
      %v1655 = vadd.f32 %v1427, %v1619
      %v1656 = vadd.f32 %v1428, %v1622
      %v1657 = vld [vmem:[%s2] sm:$0x1]
      %v1659 = vlaneseq
      %v1660 = vshrl.u32 %v1659, 7
      %v1661 = vsub.s32 0, %v1660
      %v1662 = vrot.slane %v1657, %v1661
      %v1664 = vmul.f32 %v1625, %v1662
      %v1665 = vmul.f32 %v1626, %v1662
      %v1666 = vmul.f32 %v1627, %v1662
      %v1667 = vmul.f32 %v1628, %v1662
      %v1668 = vmul.f32 %v1629, %v1662
      %v1669 = vmul.f32 %v1630, %v1662
      %v1670 = vmul.f32 %v1631, %v1662
      %v1671 = vmul.f32 %v1632, %v1662
      %v1672 = vmul.f32 %v1633, %v1662
      %v1673 = vmul.f32 %v1634, %v1662
      %v1674 = vmul.f32 %v1635, %v1662
      %v1675 = vmul.f32 %v1636, %v1662
      %v1676 = vmul.f32 %v1637, %v1662
      %v1677 = vmul.f32 %v1638, %v1662
      %v1678 = vmul.f32 %v1639, %v1662
      %v1679 = vmul.f32 %v1640, %v1662
      %v1680 = vmul.f32 %v1641, %v1662
      %v1681 = vmul.f32 %v1642, %v1662
      %v1682 = vmul.f32 %v1643, %v1662
      %v1683 = vmul.f32 %v1644, %v1662
      %v1684 = vmul.f32 %v1645, %v1662
      %v1685 = vmul.f32 %v1646, %v1662
      %v1686 = vmul.f32 %v1647, %v1662
      %v1687 = vmul.f32 %v1648, %v1662
      %v1688 = vmul.f32 %v1649, %v1662
      %v1689 = vmul.f32 %v1650, %v1662
      %v1690 = vmul.f32 %v1651, %v1662
      %v1691 = vmul.f32 %v1652, %v1662
      %v1692 = vmul.f32 %v1653, %v1662
      %v1693 = vmul.f32 %v1654, %v1662
      %v1694 = vmul.f32 %v1655, %v1662
      %v1695 = vmul.f32 %v1656, %v1662
      %v1696 = vld [vmem:[%s3] sm:$0x1]
      %v1698 = vlaneseq
      %v1699 = vshrl.u32 %v1698, 7
      %v1700 = vsub.s32 0, %v1699
      %v1701 = vrot.slane %v1696, %v1700
      %v1703 = vadd.f32 %v1664, %v1701
      %v1704 = vadd.f32 %v1665, %v1701
      %v1705 = vadd.f32 %v1666, %v1701
      %v1706 = vadd.f32 %v1667, %v1701
      %v1707 = vadd.f32 %v1668, %v1701
      %v1708 = vadd.f32 %v1669, %v1701
      %v1709 = vadd.f32 %v1670, %v1701
      %v1710 = vadd.f32 %v1671, %v1701
      %v1711 = vadd.f32 %v1672, %v1701
      %v1712 = vadd.f32 %v1673, %v1701
      %v1713 = vadd.f32 %v1674, %v1701
      %v1714 = vadd.f32 %v1675, %v1701
      %v1715 = vadd.f32 %v1676, %v1701
      %v1716 = vadd.f32 %v1677, %v1701
      %v1717 = vadd.f32 %v1678, %v1701
      %v1718 = vadd.f32 %v1679, %v1701
      %v1719 = vadd.f32 %v1680, %v1701
      %v1720 = vadd.f32 %v1681, %v1701
      %v1721 = vadd.f32 %v1682, %v1701
      %v1722 = vadd.f32 %v1683, %v1701
      %v1723 = vadd.f32 %v1684, %v1701
      %v1724 = vadd.f32 %v1685, %v1701
      %v1725 = vadd.f32 %v1686, %v1701
      %v1726 = vadd.f32 %v1687, %v1701
      %v1727 = vadd.f32 %v1688, %v1701
      %v1728 = vadd.f32 %v1689, %v1701
      %v1729 = vadd.f32 %v1690, %v1701
      %v1730 = vadd.f32 %v1691, %v1701
      %v1731 = vadd.f32 %v1692, %v1701
      %v1732 = vadd.f32 %v1693, %v1701
      %v1733 = vadd.f32 %v1694, %v1701
      %v1734 = vadd.f32 %v1695, %v1701
      %v1735 = vmax.f32 %v1703, 0.0
      %v1736 = vmax.f32 %v1704, 0.0
      %v1737 = vmax.f32 %v1705, 0.0
      %v1738 = vmax.f32 %v1706, 0.0
      %v1739 = vmax.f32 %v1707, 0.0
      %v1740 = vmax.f32 %v1708, 0.0
      %v1741 = vmax.f32 %v1709, 0.0
      %v1742 = vmax.f32 %v1710, 0.0
      %v1743 = vmax.f32 %v1711, 0.0
      %v1744 = vmax.f32 %v1712, 0.0
      %v1745 = vmax.f32 %v1713, 0.0
      %v1746 = vmax.f32 %v1714, 0.0
      %v1747 = vmax.f32 %v1715, 0.0
      %v1748 = vmax.f32 %v1716, 0.0
      %v1749 = vmax.f32 %v1717, 0.0
      %v1750 = vmax.f32 %v1718, 0.0
      %v1751 = vmax.f32 %v1719, 0.0
      %v1752 = vmax.f32 %v1720, 0.0
      %v1753 = vmax.f32 %v1721, 0.0
      %v1754 = vmax.f32 %v1722, 0.0
      %v1755 = vmax.f32 %v1723, 0.0
      %v1756 = vmax.f32 %v1724, 0.0
      %v1757 = vmax.f32 %v1725, 0.0
      %v1758 = vmax.f32 %v1726, 0.0
      %v1759 = vmax.f32 %v1727, 0.0
      %v1760 = vmax.f32 %v1728, 0.0
      %v1761 = vmax.f32 %v1729, 0.0
      %v1762 = vmax.f32 %v1730, 0.0
      %v1763 = vmax.f32 %v1731, 0.0
      %v1764 = vmax.f32 %v1732, 0.0
      %v1765 = vmax.f32 %v1733, 0.0
      %v1766 = vmax.f32 %v1734, 0.0
      %vm1767 = vcmask 261120
      %1768 = vst.msk [vmem:[%s221] sm:$0xff] %vm1767, %v1735
      %1769 = vst.msk [vmem:[%s221 + $0x8] sm:$0xff] %vm1767, %v1736
      %1770 = vst.msk [vmem:[%s221 + $0x10] sm:$0xff] %vm1767, %v1737
      %1771 = vst.msk [vmem:[%s221 + $0x18] sm:$0xff] %vm1767, %v1738
      %1772 = vst.msk [vmem:[%s221 + $0x20] sm:$0xff] %vm1767, %v1739
      %1773 = vst.msk [vmem:[%s221 + $0x28] sm:$0xff] %vm1767, %v1740
      %1774 = vst.msk [vmem:[%s221 + $0x30] sm:$0xff] %vm1767, %v1741
      %1775 = vst.msk [vmem:[%s221 + $0x38] sm:$0xff] %vm1767, %v1742
      %1776 = vst.msk [vmem:[%s221 + $0x40] sm:$0xff] %vm1767, %v1743
      %1777 = vst.msk [vmem:[%s221 + $0x48] sm:$0xff] %vm1767, %v1744
      %1778 = vst.msk [vmem:[%s221 + $0x50] sm:$0xff] %vm1767, %v1745
      %1779 = vst.msk [vmem:[%s221 + $0x58] sm:$0xff] %vm1767, %v1746
      %1780 = vst.msk [vmem:[%s221 + $0x60] sm:$0xff] %vm1767, %v1747
      %1781 = vst.msk [vmem:[%s221 + $0x68] sm:$0xff] %vm1767, %v1748
      %1782 = vst.msk [vmem:[%s221 + $0x70] sm:$0xff] %vm1767, %v1749
      %1783 = vst.msk [vmem:[%s221 + $0x78] sm:$0xff] %vm1767, %v1750
      %1784 = vst.msk [vmem:[%s221 + $0x80] sm:$0xff] %vm1767, %v1751
      %1785 = vst.msk [vmem:[%s221 + $0x88] sm:$0xff] %vm1767, %v1752
      %1786 = vst.msk [vmem:[%s221 + $0x90] sm:$0xff] %vm1767, %v1753
      %1787 = vst.msk [vmem:[%s221 + $0x98] sm:$0xff] %vm1767, %v1754
      %1788 = vst.msk [vmem:[%s221 + $0xa0] sm:$0xff] %vm1767, %v1755
      %1789 = vst.msk [vmem:[%s221 + $0xa8] sm:$0xff] %vm1767, %v1756
      %1790 = vst.msk [vmem:[%s221 + $0xb0] sm:$0xff] %vm1767, %v1757
      %1791 = vst.msk [vmem:[%s221 + $0xb8] sm:$0xff] %vm1767, %v1758
      %1792 = vst.msk [vmem:[%s221 + $0xc0] sm:$0xff] %vm1767, %v1759
      %1793 = vst.msk [vmem:[%s221 + $0xc8] sm:$0xff] %vm1767, %v1760
      %1794 = vst.msk [vmem:[%s221 + $0xd0] sm:$0xff] %vm1767, %v1761
      %1795 = vst.msk [vmem:[%s221 + $0xd8] sm:$0xff] %vm1767, %v1762
      %1796 = vst.msk [vmem:[%s221 + $0xe0] sm:$0xff] %vm1767, %v1763
      %1797 = vst.msk [vmem:[%s221 + $0xe8] sm:$0xff] %vm1767, %v1764
      %1798 = vst.msk [vmem:[%s221 + $0xf0] sm:$0xff] %vm1767, %v1765
      %1799 = vst.msk [vmem:[%s221 + $0xf8] sm:$0xff] %vm1767, %v1766
      %s1800 = smul.u32 16, %s20
      %p1801 = scmp.lt.s32.totalorder %s19, 1
      %s1802 = scalar_select %p1801, %s19, 1
      %p1803 = scmp.lt.s32.totalorder %s1800, 15
      %s1804 = scalar_select %p1803, %s1800, 15
      %s1805 = smul.addr %s1804, 2
      %s1806 = smul.addr %s1802, 32
      %s1807 = sadd.s32 %s1805, %s1806
      %s1808 = smul.addr %s1807, 8
      %s1809 = scalar_lea.vmem %s4, %s1808
      // Predicated region
      $region37: #{deconv2d_forward.3} parent=35 // pred_check
        %p1810 = pneg %p136
      $region38: #{deconv2d_forward.3} parent=35 // pred_check_branch
        %1812 = sbr.rel (%p1810) target = $region40
      $region39: #{deconv2d_forward.3} parent=35 // pred_region
        %s1813 = smul.u32 16, %s20
      $region40: #{deconv2d_forward.3} parent=35 // pred_fallthru
        _
    $region36: #{deconv2d_forward.3} parent=5 // pred_fallthru
      _
    %p1814 = scmp.le.s32.totalorder 2, %s10
    // Predicated region
    $region41: #{deconv2d_forward.3} parent=5 // pred_check
      %p1815 = pneg %p1814
    $region42: #{deconv2d_forward.3} parent=5 // pred_check_branch
      %1817 = sbr.rel (%p1815) target = $region44
    $region43: #{deconv2d_forward.3} parent=5 // pred_region
      %s1818 = ssub.s32 %s10, 2
      // Predicated region
      $region45: #{deconv2d_forward.3} parent=43 // pred_check
        %p1819 = pneg %p142
      $region46: #{deconv2d_forward.3} parent=43 // pred_check_branch
        %1821 = sbr.rel (%p1819) target = $region48
      $region47: #{deconv2d_forward.3} parent=43 // pred_region
        %s1822 = smul.u32 16, %s22
        %p1823 = scmp.lt.s32.totalorder %s21, 1
        %s1824 = scalar_select %p1823, %s21, 1
        %p1825 = scmp.lt.s32.totalorder %s1822, 15
        %s1826 = scalar_select %p1825, %s1822, 15
        %s1827 = smul.addr %s1826, 2
        %s1828 = smul.addr %s1824, 32
        %s1829 = sadd.s32 %s1827, %s1828
        %s1830 = smul.addr %s1829, 8
        %s1831 = scalar_lea.vmem %s4, %s1830
      $region48: #{deconv2d_forward.3} parent=43 // pred_fallthru
        _
    $region44: #{deconv2d_forward.3} parent=5 // pred_fallthru
      _
  $region6: #{deconv2d_forward.3} parent=0 // loop_footer
    %s14 = sadd.s32 1, %s10
  $region7: #{deconv2d_forward.3} parent=0 // loop_footer_branch
    %9 = sbr.rel target = $region3
  $region8: #{deconv2d_forward.3} parent=0 // loop_exit
    _

</llo_original>
